<compile_context>
chip_gen: v7x
topology: tpu7x:2x2x1
jax: 0.10.0
libtpu: 0.0.40
codegen_flags: <defaults>
</compile_context>

<pallas_src>
import functools
import math

import jax
import jax.numpy as jnp
from jax.experimental import pallas as pl
from jax.experimental.pallas import tpu as pltpu


# ----------------------------------------------------------------------------
# Model configuration
# ----------------------------------------------------------------------------
B = 2                  # batch of images
C, IH, IW = 3, 16, 16  # image NCHW
IMG_FLAT = C * IH * IW
VIS_DIM = 64           # clip_model.visual.output_dim
CTX_DIM = 64           # clip_model.ln_final.weight.shape[0]
N_CTX = 4
SEQ = 8                # 1 (SOT prefix) + N_CTX + 3 (suffix incl. EOT + pads)
N_HEADS = 4
HEAD_DIM = CTX_DIM // N_HEADS
MLP_DIM = 4 * CTX_DIM
N_LAYERS = 2
N_CLS = 5
FUSE = 'cat'           # cfg.TRAINER.BASELINE.FUSE
IN_FEA = 2 * VIS_DIM if FUSE == 'cat' else VIS_DIM


# ----------------------------------------------------------------------------
# The single fused Pallas kernel (one image per grid step)
# ----------------------------------------------------------------------------
def _fused_forward_kernel(
    img_ref, eot_oh_ref,
    vis_w_ref, vis_b_ref,
    meta_w1_ref, meta_b1_ref, meta_w2_ref, meta_b2_ref,
    base_ref, ctxmask_ref, pos_ref,
    ln1_g_ref, ln1_b_ref, wqkv_ref, bqkv_ref, wo_ref, bo_ref,
    ln2_g_ref, ln2_b_ref, mw1_ref, mb1_ref, mw2_ref, mb2_ref,
    lnf_g_ref, lnf_b_ref, tproj_ref,
    cls_w1_ref, cls_b1_ref, cls_w2_ref, cls_b2_ref,
    o_ref,
):
    f32 = jnp.float32

    def layernorm(x, g, b):
        mu = jnp.mean(x, axis=-1, keepdims=True)
        var = jnp.mean((x - mu) ** 2, axis=-1, keepdims=True)
        return (x - mu) * jax.lax.rsqrt(var + 1e-5) * g + b

    def l2norm(x):
        # x / x.norm(); tiny eps guards the zero-vector corner case
        return x * jax.lax.rsqrt(jnp.sum(x * x, axis=-1, keepdims=True) + 1e-12)

    def leaky(x):
        return jnp.where(x > 0, x, 0.01 * x)

    # ---- image encoder (synthetic linear visual) + L2-normalize ------------
    img = img_ref[0].astype(f32)                                     # [1, IMG_FLAT]
    imf = jnp.dot(img, vis_w_ref[...], preferred_element_type=f32) + vis_b_ref[...]
    imf = l2norm(imf)                                                # [1, VIS_DIM]

    # ---- PromptLearner_v1: meta_net MLP -> bias -----------------------------
    h = leaky(jnp.dot(imf, meta_w1_ref[...], preferred_element_type=f32)
              + meta_b1_ref[...])
    bias = jnp.dot(h, meta_w2_ref[...], preferred_element_type=f32) + meta_b2_ref[...]

    # prompts = cat([prefix, ctx + bias, suffix])  ==  base + ctx_mask * bias
    x = base_ref[...].astype(f32) + ctxmask_ref[...] * bias + pos_ref[...].astype(f32)

    # ---- CLIP text transformer (layers unrolled, all heads in one pass) -----
    row = jax.lax.broadcasted_iota(jnp.int32, (SEQ, SEQ), 0)
    col = jax.lax.broadcasted_iota(jnp.int32, (SEQ, SEQ), 1)
    causal = col <= row                                              # built once
    scale = 1.0 / math.sqrt(HEAD_DIM)

    for l in range(N_LAYERS):
        # --- x = x + out_proj(MHA(ln_1(x))) ---
        h1 = layernorm(x, ln1_g_ref[l], ln1_b_ref[l])
        # fused QKV: single [S, 3*D] matmul (one MXU pass, lane-dense)
        qkv = jnp.dot(h1, wqkv_ref[l], preferred_element_type=f32) + bqkv_ref[l]
        wo_l = wo_ref[l]
        attn_proj = jnp.zeros((SEQ, CTX_DIM), f32)
        for hh in range(N_HEADS):
            lo = hh * HEAD_DIM
            qh = qkv[:, lo:lo + HEAD_DIM]
            kh = qkv[:, CTX_DIM + lo:CTX_DIM + lo + HEAD_DIM]
            vh = qkv[:, 2 * CTX_DIM + lo:2 * CTX_DIM + lo + HEAD_DIM]
            s = jax.lax.dot_general(qh, kh, (((1,), (1,)), ((), ())),
                                    preferred_element_type=f32) * scale
            s = jnp.where(causal, s, -1e30)        # CLIP causal mask (f32)
            prob = jax.nn.softmax(s, axis=-1)
            oh = jnp.dot(prob, vh, preferred_element_type=f32)       # [S, hd]
            # concat(head_0..head_H) @ Wo == sum_h head_h @ Wo[h*hd:(h+1)*hd, :]
            attn_proj = attn_proj + jnp.dot(
                oh, wo_l[lo:lo + HEAD_DIM, :], preferred_element_type=f32)
        x = x + attn_proj + bo_ref[l]

        # --- x = x + mlp(ln_2(x))  (QuickGELU) ---
        h2 = layernorm(x, ln2_g_ref[l], ln2_b_ref[l])
        m = jnp.dot(h2, mw1_ref[l], preferred_element_type=f32) + mb1_ref[l]
        m = m * jax.nn.sigmoid(1.702 * m)
        x = x + jnp.dot(m, mw2_ref[l], preferred_element_type=f32) + mb2_ref[l]

    x = layernorm(x, lnf_g_ref[...], lnf_b_ref[...])                 # [S, D]

    # ---- EOT-token select (one-hot matmul) + text_projection + L2-norm ------
    feat = jnp.dot(eot_oh_ref[...], x, preferred_element_type=f32)   # [1, D]
    tf = l2norm(jnp.dot(feat, tproj_ref[...], preferred_element_type=f32))

    # ---- ClsHead_v2, fuse='cat': cat([tf, imf]) @ W1 == tf@W1[:D] + imf@W1[D:]
    w1 = cls_w1_ref[...]
    c = (jnp.dot(tf, w1[:VIS_DIM, :], preferred_element_type=f32)
         + jnp.dot(imf, w1[VIS_DIM:, :], preferred_element_type=f32)
         + cls_b1_ref[...])
    c = leaky(c)
    logits = jnp.dot(c, cls_w2_ref[...], preferred_element_type=f32) + cls_b2_ref[...]
    o_ref[0] = logits.astype(o_ref.dtype)                            # [1, N_CLS]


def _resident(shape):
    """Full-array block that is resident across all grid steps."""
    nd = len(shape)
    return pl.BlockSpec(shape, lambda i, _nd=nd: (0,) * _nd)


# ----------------------------------------------------------------------------
# Forward pass (mirrors CustomCLIP_v2.forward)
# ----------------------------------------------------------------------------
def custom_clip_v2_forward(p, image, label=None, training=False):
    logit_scale = jnp.exp(p['logit_scale'])  # computed but unused (as in torch)
    del logit_scale

    bsz = image.shape[0]
    img3 = image.reshape(bsz, 1, IMG_FLAT).astype(jnp.float32)

    # EOT one-hot selector from tokenized_prompts.argmax (shared by all images)
    eot = jnp.argmax(p['tokenized_prompts'][0])
    eot_oh = (jnp.arange(SEQ) == eot).astype(jnp.float32)[None, :]    # [1, SEQ]

    # construct_prompts glue: base prompt + row-mask selecting the ctx rows
    base = jnp.concatenate(
        [p['token_prefix'][0], p['ctx'], p['token_suffix'][0]], axis=0)  # [SEQ, D]
    rows = jnp.arange(SEQ)[:, None]
    ctx_mask = jnp.broadcast_to(
        ((rows >= 1) & (rows < 1 + N_CTX)).astype(jnp.float32), (SEQ, CTX_DIM))

    weights = (
        eot_oh,
        p['vis_w'], p['vis_b'],
        p['meta_w1'], p['meta_b1'], p['meta_w2'], p['meta_b2'],
        base, ctx_mask, p['pos_emb'],
        p['ln1_g'], p['ln1_b'], p['wqkv'], p['bqkv'], p['wo'], p['bo'],
        p['ln2_g'], p['ln2_b'], p['mw1'], p['mb1'], p['mw2'], p['mb2'],
        p['lnf_g'], p['lnf_b'], p['text_projection'],
        p['cls_w1'], p['cls_b1'], p['cls_w2'], p['cls_b2'],
    )

    in_specs = [pl.BlockSpec((1, 1, IMG_FLAT), lambda i: (i, 0, 0))]
    in_specs += [_resident(w.shape) for w in weights]

    logits3 = pl.pallas_call(
        _fused_forward_kernel,
        out_shape=jax.ShapeDtypeStruct((bsz, 1, N_CLS), jnp.float32),
        grid=(bsz,),
        in_specs=in_specs,
        out_specs=pl.BlockSpec((1, 1, N_CLS), lambda i: (i, 0, 0)),
        compiler_params=pltpu.CompilerParams(
            dimension_semantics=("parallel",)),
    )(img3, *weights)

    logits = logits3[:, 0, :]          # torch: stack(...).squeeze(1)

    if training:
        logz = jax.nn.log_softmax(logits, axis=-1)
        return -jnp.mean(jnp.take_along_axis(logz, label[:, None], axis=-1))
    return logits


# ----------------------------------------------------------------------------
# Deterministic parameter init (synthetic CLIP weights)
# ----------------------------------------------------------------------------
def init_params(key):
    ks = iter(jax.random.split(key, 64))
    f32 = jnp.float32

    def nrm(shape, std=0.02):
        return (std * jax.random.normal(next(ks), shape)).astype(f32)

    p = {}
    # synthetic image encoder (stand-in for clip_model.visual)
    p['vis_w'] = nrm((IMG_FLAT, VIS_DIM))
    p['vis_b'] = jnp.zeros((1, VIS_DIM), f32)

    # PromptLearner_v1
    p['ctx'] = nrm((N_CTX, CTX_DIM))
    p['meta_w1'] = nrm((VIS_DIM, VIS_DIM // 16))
    p['meta_b1'] = jnp.zeros((1, VIS_DIM // 16), f32)
    p['meta_w2'] = nrm((VIS_DIM // 16, CTX_DIM))
    p['meta_b2'] = jnp.zeros((1, CTX_DIM), f32)
    p['token_prefix'] = nrm((1, 1, CTX_DIM))                 # SOT embedding
    p['token_suffix'] = nrm((1, SEQ - 1 - N_CTX, CTX_DIM))   # EOT + pads
    # [SOT, x, x, x, x, EOT, pad, pad]; argmax -> EOT index 5
    p['tokenized_prompts'] = jnp.array(
        [[49406, 10, 11, 12, 13, 49407, 0, 0]], dtype=jnp.int32)

    # TextEncoder (per-layer weights stacked; QKV fused into one [D, 3D] matrix)
    p['pos_emb'] = nrm((SEQ, CTX_DIM), 0.01)
    p['ln1_g'] = jnp.ones((N_LAYERS, 1, CTX_DIM), f32)
    p['ln1_b'] = jnp.zeros((N_LAYERS, 1, CTX_DIM), f32)
    p['wqkv'] = nrm((N_LAYERS, CTX_DIM, 3 * CTX_DIM))
    p['bqkv'] = jnp.zeros((N_LAYERS, 1, 3 * CTX_DIM), f32)
    p['wo'] = nrm((N_LAYERS, CTX_DIM, CTX_DIM))
    p['bo'] = jnp.zeros((N_LAYERS, 1, CTX_DIM), f32)
    p['ln2_g'] = jnp.ones((N_LAYERS, 1, CTX_DIM), f32)
    p['ln2_b'] = jnp.zeros((N_LAYERS, 1, CTX_DIM), f32)
    p['mw1'] = nrm((N_LAYERS, CTX_DIM, MLP_DIM))
    p['mb1'] = jnp.zeros((N_LAYERS, 1, MLP_DIM), f32)
    p['mw2'] = nrm((N_LAYERS, MLP_DIM, CTX_DIM))
    p['mb2'] = jnp.zeros((N_LAYERS, 1, CTX_DIM), f32)
    p['lnf_g'] = jnp.ones((1, CTX_DIM), f32)
    p['lnf_b'] = jnp.zeros((1, CTX_DIM), f32)
    p['text_projection'] = nrm((CTX_DIM, VIS_DIM))
    p['logit_scale'] = jnp.array(math.log(1.0 / 0.07), f32)

    # ClsHead_v2 (fuse='cat'): Linear(in, in//2) -> LeakyReLU -> Linear(_, n_cls)
    p['cls_w1'] = nrm((IN_FEA, IN_FEA // 2))
    p['cls_b1'] = jnp.zeros((1, IN_FEA // 2), f32)
    p['cls_w2'] = nrm((IN_FEA // 2, N_CLS))
    p['cls_b2'] = jnp.zeros((1, N_CLS), f32)
    return p


# ----------------------------------------------------------------------------
# Plain-JAX reference (mirrors the torch forward) for correctness checking
# ----------------------------------------------------------------------------
def reference_forward(p, image):
    f32 = jnp.float32

    def ln(x, g, b):
        mu = jnp.mean(x, -1, keepdims=True)
        var = jnp.mean((x - mu) ** 2, -1, keepdims=True)
        return (x - mu) * jax.lax.rsqrt(var + 1e-5) * g + b

    def l2n(x):
        return x * jax.lax.rsqrt(jnp.sum(x * x, -1, keepdims=True) + 1e-12)

    def leaky(x):
        return jnp.where(x > 0, x, 0.01 * x)

    img = image.reshape(image.shape[0], -1).astype(f32)
    imf = l2n(img @ p['vis_w'] + p['vis_b'])
    h = leaky(imf @ p['meta_w1'] + p['meta_b1'])
    bias = h @ p['meta_w2'] + p['meta_b2']
    ctx_shifted = p['ctx'][None] + bias[:, None, :]
    eot = jnp.argmax(p['tokenized_prompts'][0])

    row = jnp.arange(SEQ)[:, None]
    col = jnp.arange(SEQ)[None, :]
    causal = col <= row
    scale = 1.0 / math.sqrt(HEAD_DIM)

    logits = []
    for i in range(image.shape[0]):
        x = jnp.concatenate(
            [p['token_prefix'][0], ctx_shifted[i], p['token_suffix'][0]], 0)
        x = x + p['pos_emb']
        for l in range(N_LAYERS):
            h1 = ln(x, p['ln1_g'][l], p['ln1_b'][l])
            qkv = h1 @ p['wqkv'][l] + p['bqkv'][l]
            q, k, v = jnp.split(qkv, 3, axis=-1)
            q = q.reshape(SEQ, N_HEADS, HEAD_DIM).transpose(1, 0, 2)
            k = k.reshape(SEQ, N_HEADS, HEAD_DIM).transpose(1, 0, 2)
            v = v.reshape(SEQ, N_HEADS, HEAD_DIM).transpose(1, 0, 2)
            s = jnp.einsum('hqd,hkd->hqk', q, k) * scale
            s = jnp.where(causal[None], s, -1e30)
            a = jnp.einsum('hqk,hkd->hqd', jax.nn.softmax(s, -1), v)
            a = a.transpose(1, 0, 2).reshape(SEQ, CTX_DIM)
            x = x + a @ p['wo'][l] + p['bo'][l]
            h2 = ln(x, p['ln2_g'][l], p['ln2_b'][l])
            m = h2 @ p['mw1'][l] + p['mb1'][l]
            m = m * jax.nn.sigmoid(1.702 * m)
            x = x + m @ p['mw2'][l] + p['mb2'][l]
        x = ln(x, p['lnf_g'], p['lnf_b'])
        tf = l2n(x[eot][None, :] @ p['text_projection'])
        fused = jnp.concatenate([tf, imf[i][None, :]], axis=1)
        c = leaky(fused @ p['cls_w1'] + p['cls_b1'])
        logits.append(c @ p['cls_w2'] + p['cls_b2'])
    return jnp.concatenate(logits, axis=0)


# ----------------------------------------------------------------------------
if __name__ == "__main__":
    key = jax.random.PRNGKey(0)
    pkey, xkey = jax.random.split(key)
    params = init_params(pkey)
    image = jax.random.normal(xkey, (B, C, IH, IW), dtype=jnp.float32)

    fwd = jax.jit(functools.partial(custom_clip_v2_forward, training=False))
    logits = fwd(params, image)
    jax.block_until_ready(logits)
    assert logits.shape == (B, N_CLS) and logits.dtype == jnp.float32
    assert bool(jnp.all(jnp.isfinite(logits)))

    ref = jax.jit(reference_forward)(params, image)
    jax.block_until_ready(ref)
    max_diff = float(jnp.max(jnp.abs(logits - ref)))
    assert jnp.allclose(logits, ref, atol=1e-2, rtol=1e-2), \
        f"kernel vs reference mismatch, max abs diff = {max_diff}"

    print("KERNEL_OK")
</pallas_src>

<mosaic_0001>
module attributes {stable_mosaic.version = 11 : i64} {
  func.func @_fused_forward_kernel(%arg0: i32, %arg1: memref<1x1x768xf32, #tpu.memory_space<vmem>>, %arg2: memref<1x8xf32, #tpu.memory_space<vmem>>, %arg3: memref<768x64xf32, #tpu.memory_space<vmem>>, %arg4: memref<1x64xf32, #tpu.memory_space<vmem>>, %arg5: memref<64x4xf32, #tpu.memory_space<vmem>>, %arg6: memref<1x4xf32, #tpu.memory_space<vmem>>, %arg7: memref<4x64xf32, #tpu.memory_space<vmem>>, %arg8: memref<1x64xf32, #tpu.memory_space<vmem>>, %arg9: memref<8x64xf32, #tpu.memory_space<vmem>>, %arg10: memref<8x64xf32, #tpu.memory_space<vmem>>, %arg11: memref<8x64xf32, #tpu.memory_space<vmem>>, %arg12: memref<2x1x64xf32, #tpu.memory_space<vmem>>, %arg13: memref<2x1x64xf32, #tpu.memory_space<vmem>>, %arg14: memref<2x64x192xf32, #tpu.memory_space<vmem>>, %arg15: memref<2x1x192xf32, #tpu.memory_space<vmem>>, %arg16: memref<2x64x64xf32, #tpu.memory_space<vmem>>, %arg17: memref<2x1x64xf32, #tpu.memory_space<vmem>>, %arg18: memref<2x1x64xf32, #tpu.memory_space<vmem>>, %arg19: memref<2x1x64xf32, #tpu.memory_space<vmem>>, %arg20: memref<2x64x256xf32, #tpu.memory_space<vmem>>, %arg21: memref<2x1x256xf32, #tpu.memory_space<vmem>>, %arg22: memref<2x256x64xf32, #tpu.memory_space<vmem>>, %arg23: memref<2x1x64xf32, #tpu.memory_space<vmem>>, %arg24: memref<1x64xf32, #tpu.memory_space<vmem>>, %arg25: memref<1x64xf32, #tpu.memory_space<vmem>>, %arg26: memref<64x64xf32, #tpu.memory_space<vmem>>, %arg27: memref<128x64xf32, #tpu.memory_space<vmem>>, %arg28: memref<1x64xf32, #tpu.memory_space<vmem>>, %arg29: memref<64x5xf32, #tpu.memory_space<vmem>>, %arg30: memref<1x5xf32, #tpu.memory_space<vmem>>, %arg31: memref<1x1x5xf32, #tpu.memory_space<vmem>>) attributes {dimension_semantics = [#tpu.dimension_semantics<parallel>], iteration_bounds = array<i64: 2>, scalar_prefetch = 0 : i64, scratch_operands = 0 : i64, tpu.core_type = #tpu.core_type<tc>, window_params = [{transform_indices = @transform_0, window_bounds = array<i64: 1, 1, 768>}, {pipeline_mode = #tpu.pipeline_mode<synchronous>, transform_indices = @transform_1, window_bounds = array<i64: 1, 8>}, {pipeline_mode = #tpu.pipeline_mode<synchronous>, transform_indices = @transform_2, window_bounds = array<i64: 768, 64>}, {pipeline_mode = #tpu.pipeline_mode<synchronous>, transform_indices = @transform_3, window_bounds = array<i64: 1, 64>}, {pipeline_mode = #tpu.pipeline_mode<synchronous>, transform_indices = @transform_4, window_bounds = array<i64: 64, 4>}, {pipeline_mode = #tpu.pipeline_mode<synchronous>, transform_indices = @transform_5, window_bounds = array<i64: 1, 4>}, {pipeline_mode = #tpu.pipeline_mode<synchronous>, transform_indices = @transform_6, window_bounds = array<i64: 4, 64>}, {pipeline_mode = #tpu.pipeline_mode<synchronous>, transform_indices = @transform_7, window_bounds = array<i64: 1, 64>}, {pipeline_mode = #tpu.pipeline_mode<synchronous>, transform_indices = @transform_8, window_bounds = array<i64: 8, 64>}, {pipeline_mode = #tpu.pipeline_mode<synchronous>, transform_indices = @transform_9, window_bounds = array<i64: 8, 64>}, {pipeline_mode = #tpu.pipeline_mode<synchronous>, transform_indices = @transform_10, window_bounds = array<i64: 8, 64>}, {pipeline_mode = #tpu.pipeline_mode<synchronous>, transform_indices = @transform_11, window_bounds = array<i64: 2, 1, 64>}, {pipeline_mode = #tpu.pipeline_mode<synchronous>, transform_indices = @transform_12, window_bounds = array<i64: 2, 1, 64>}, {pipeline_mode = #tpu.pipeline_mode<synchronous>, transform_indices = @transform_13, window_bounds = array<i64: 2, 64, 192>}, {pipeline_mode = #tpu.pipeline_mode<synchronous>, transform_indices = @transform_14, window_bounds = array<i64: 2, 1, 192>}, {pipeline_mode = #tpu.pipeline_mode<synchronous>, transform_indices = @transform_15, window_bounds = array<i64: 2, 64, 64>}, {pipeline_mode = #tpu.pipeline_mode<synchronous>, transform_indices = @transform_16, window_bounds = array<i64: 2, 1, 64>}, {pipeline_mode = #tpu.pipeline_mode<synchronous>, transform_indices = @transform_17, window_bounds = array<i64: 2, 1, 64>}, {pipeline_mode = #tpu.pipeline_mode<synchronous>, transform_indices = @transform_18, window_bounds = array<i64: 2, 1, 64>}, {pipeline_mode = #tpu.pipeline_mode<synchronous>, transform_indices = @transform_19, window_bounds = array<i64: 2, 64, 256>}, {pipeline_mode = #tpu.pipeline_mode<synchronous>, transform_indices = @transform_20, window_bounds = array<i64: 2, 1, 256>}, {pipeline_mode = #tpu.pipeline_mode<synchronous>, transform_indices = @transform_21, window_bounds = array<i64: 2, 256, 64>}, {pipeline_mode = #tpu.pipeline_mode<synchronous>, transform_indices = @transform_22, window_bounds = array<i64: 2, 1, 64>}, {pipeline_mode = #tpu.pipeline_mode<synchronous>, transform_indices = @transform_23, window_bounds = array<i64: 1, 64>}, {pipeline_mode = #tpu.pipeline_mode<synchronous>, transform_indices = @transform_24, window_bounds = array<i64: 1, 64>}, {pipeline_mode = #tpu.pipeline_mode<synchronous>, transform_indices = @transform_25, window_bounds = array<i64: 64, 64>}, {pipeline_mode = #tpu.pipeline_mode<synchronous>, transform_indices = @transform_26, window_bounds = array<i64: 128, 64>}, {pipeline_mode = #tpu.pipeline_mode<synchronous>, transform_indices = @transform_27, window_bounds = array<i64: 1, 64>}, {pipeline_mode = #tpu.pipeline_mode<synchronous>, transform_indices = @transform_28, window_bounds = array<i64: 64, 5>}, {pipeline_mode = #tpu.pipeline_mode<synchronous>, transform_indices = @transform_29, window_bounds = array<i64: 1, 5>}, {transform_indices = @transform_30, window_bounds = array<i64: 1, 1, 5>}]} {
    %c0 = arith.constant 0 : index
    %c0_0 = arith.constant 0 : index
    %c0_1 = arith.constant 0 : index
    %0 = vector.load %arg1[%c0, %c0_0, %c0_1] : memref<1x1x768xf32, #tpu.memory_space<vmem>>, vector<1x1x768xf32>
    %1 = vector.shape_cast %0 : vector<1x1x768xf32> to vector<1x768xf32>
    %c0_2 = arith.constant 0 : index
    %c0_3 = arith.constant 0 : index
    %2 = vector.load %arg3[%c0_2, %c0_3] : memref<768x64xf32, #tpu.memory_space<vmem>>, vector<768x64xf32>
    %cst = arith.constant dense<0.000000e+00> : vector<1x64xf32>
    %3 = tpu.matmul %1, %2, %cst {dimension_numbers = #tpu.dot_dimension_numbers<[1], [0], [0], [1], [0, 0, 1, 1], [], []>} : vector<1x768xf32>, vector<768x64xf32>, vector<1x64xf32> -> vector<1x64xf32>
    %c0_4 = arith.constant 0 : index
    %c0_5 = arith.constant 0 : index
    %4 = vector.load %arg4[%c0_4, %c0_5] : memref<1x64xf32, #tpu.memory_space<vmem>>, vector<1x64xf32>
    %5 = arith.addf %3, %4 : vector<1x64xf32>
    %6 = arith.mulf %5, %5 : vector<1x64xf32>
    %cst_6 = arith.constant dense<0.000000e+00> : vector<1xf32>
    %7 = vector.multi_reduction <add>, %6, %cst_6 [1] : vector<1x64xf32> to vector<1xf32>
    %8 = vector.shape_cast %7 : vector<1xf32> to vector<1x1xf32>
    %cst_7 = arith.constant 9.99999996E-13 : f32
    %9 = vector.broadcast %cst_7 : f32 to vector<1x1xf32>
    %10 = arith.addf %8, %9 : vector<1x1xf32>
    %11 = math.rsqrt %10 : vector<1x1xf32>
    %12 = vector.broadcast %11 : vector<1x1xf32> to vector<1x64xf32>
    %13 = arith.mulf %5, %12 : vector<1x64xf32>
    %c0_8 = arith.constant 0 : index
    %c0_9 = arith.constant 0 : index
    %14 = vector.load %arg5[%c0_8, %c0_9] : memref<64x4xf32, #tpu.memory_space<vmem>>, vector<64x4xf32>
    %cst_10 = arith.constant dense<0.000000e+00> : vector<1x4xf32>
    %15 = tpu.matmul %13, %14, %cst_10 {dimension_numbers = #tpu.dot_dimension_numbers<[1], [0], [0], [1], [0, 0, 1, 1], [], []>} : vector<1x64xf32>, vector<64x4xf32>, vector<1x4xf32> -> vector<1x4xf32>
    %c0_11 = arith.constant 0 : index
    %c0_12 = arith.constant 0 : index
    %16 = vector.load %arg6[%c0_11, %c0_12] : memref<1x4xf32, #tpu.memory_space<vmem>>, vector<1x4xf32>
    %17 = arith.addf %15, %16 : vector<1x4xf32>
    %cst_13 = arith.constant 0.000000e+00 : f32
    %18 = vector.broadcast %cst_13 : f32 to vector<1x4xf32>
    %19 = arith.cmpf ogt, %17, %18 : vector<1x4xf32>
    %cst_14 = arith.constant 0.00999999977 : f32
    %20 = vector.broadcast %cst_14 : f32 to vector<1x4xf32>
    %21 = arith.mulf %20, %17 : vector<1x4xf32>
    %22 = arith.select %19, %17, %21 : vector<1x4xi1>, vector<1x4xf32>
    %c0_15 = arith.constant 0 : index
    %c0_16 = arith.constant 0 : index
    %23 = vector.load %arg7[%c0_15, %c0_16] : memref<4x64xf32, #tpu.memory_space<vmem>>, vector<4x64xf32>
    %cst_17 = arith.constant dense<0.000000e+00> : vector<1x64xf32>
    %24 = tpu.matmul %22, %23, %cst_17 {dimension_numbers = #tpu.dot_dimension_numbers<[1], [0], [0], [1], [0, 0, 1, 1], [], []>} : vector<1x4xf32>, vector<4x64xf32>, vector<1x64xf32> -> vector<1x64xf32>
    %c0_18 = arith.constant 0 : index
    %c0_19 = arith.constant 0 : index
    %25 = vector.load %arg8[%c0_18, %c0_19] : memref<1x64xf32, #tpu.memory_space<vmem>>, vector<1x64xf32>
    %26 = arith.addf %24, %25 : vector<1x64xf32>
    %c0_20 = arith.constant 0 : index
    %c0_21 = arith.constant 0 : index
    %27 = vector.load %arg9[%c0_20, %c0_21] : memref<8x64xf32, #tpu.memory_space<vmem>>, vector<8x64xf32>
    %c0_22 = arith.constant 0 : index
    %c0_23 = arith.constant 0 : index
    %28 = vector.load %arg10[%c0_22, %c0_23] : memref<8x64xf32, #tpu.memory_space<vmem>>, vector<8x64xf32>
    %29 = vector.broadcast %26 : vector<1x64xf32> to vector<8x64xf32>
    %30 = arith.mulf %28, %29 : vector<8x64xf32>
    %31 = arith.addf %27, %30 : vector<8x64xf32>
    %c0_24 = arith.constant 0 : index
    %c0_25 = arith.constant 0 : index
    %32 = vector.load %arg11[%c0_24, %c0_25] : memref<8x64xf32, #tpu.memory_space<vmem>>, vector<8x64xf32>
    %33 = arith.addf %31, %32 : vector<8x64xf32>
    %34 = tpu.iota {dimensions = array<i32: 0>} : vector<8x8xi32>
    %35 = tpu.iota {dimensions = array<i32: 1>} : vector<8x8xi32>
    %36 = arith.cmpi sle, %35, %34 : vector<8x8xi32>
    %c0_26 = arith.constant 0 : index
    %c0_27 = arith.constant 0 : index
    %c0_28 = arith.constant 0 : index
    %37 = vector.load %arg12[%c0_26, %c0_27, %c0_28] : memref<2x1x64xf32, #tpu.memory_space<vmem>>, vector<1x1x64xf32>
    %38 = vector.shape_cast %37 : vector<1x1x64xf32> to vector<1x64xf32>
    %c0_29 = arith.constant 0 : index
    %c0_30 = arith.constant 0 : index
    %c0_31 = arith.constant 0 : index
    %39 = vector.load %arg13[%c0_29, %c0_30, %c0_31] : memref<2x1x64xf32, #tpu.memory_space<vmem>>, vector<1x1x64xf32>
    %40 = vector.shape_cast %39 : vector<1x1x64xf32> to vector<1x64xf32>
    %cst_32 = arith.constant dense<0.000000e+00> : vector<8xf32>
    %41 = vector.multi_reduction <add>, %33, %cst_32 [1] : vector<8x64xf32> to vector<8xf32>
    %42 = vector.shape_cast %41 : vector<8xf32> to vector<8x1xf32>
    %cst_33 = arith.constant 6.400000e+01 : f32
    %43 = vector.broadcast %cst_33 : f32 to vector<8x1xf32>
    %44 = arith.divf %42, %43 : vector<8x1xf32>
    %45 = vector.broadcast %44 : vector<8x1xf32> to vector<8x64xf32>
    %46 = arith.subf %33, %45 : vector<8x64xf32>
    %47 = arith.mulf %46, %46 : vector<8x64xf32>
    %cst_34 = arith.constant dense<0.000000e+00> : vector<8xf32>
    %48 = vector.multi_reduction <add>, %47, %cst_34 [1] : vector<8x64xf32> to vector<8xf32>
    %49 = vector.shape_cast %48 : vector<8xf32> to vector<8x1xf32>
    %cst_35 = arith.constant 6.400000e+01 : f32
    %50 = vector.broadcast %cst_35 : f32 to vector<8x1xf32>
    %51 = arith.divf %49, %50 : vector<8x1xf32>
    %52 = vector.broadcast %44 : vector<8x1xf32> to vector<8x64xf32>
    %53 = arith.subf %33, %52 : vector<8x64xf32>
    %cst_36 = arith.constant 9.99999974E-6 : f32
    %54 = vector.broadcast %cst_36 : f32 to vector<8x1xf32>
    %55 = arith.addf %51, %54 : vector<8x1xf32>
    %56 = math.rsqrt %55 : vector<8x1xf32>
    %57 = vector.broadcast %56 : vector<8x1xf32> to vector<8x64xf32>
    %58 = arith.mulf %53, %57 : vector<8x64xf32>
    %59 = vector.broadcast %38 : vector<1x64xf32> to vector<8x64xf32>
    %60 = arith.mulf %58, %59 : vector<8x64xf32>
    %61 = vector.broadcast %40 : vector<1x64xf32> to vector<8x64xf32>
    %62 = arith.addf %60, %61 : vector<8x64xf32>
    %c0_37 = arith.constant 0 : index
    %c0_38 = arith.constant 0 : index
    %c0_39 = arith.constant 0 : index
    %63 = vector.load %arg14[%c0_37, %c0_38, %c0_39] : memref<2x64x192xf32, #tpu.memory_space<vmem>>, vector<1x64x192xf32>
    %64 = vector.shape_cast %63 : vector<1x64x192xf32> to vector<64x192xf32>
    %cst_40 = arith.constant dense<0.000000e+00> : vector<8x192xf32>
    %65 = tpu.matmul %62, %64, %cst_40 {dimension_numbers = #tpu.dot_dimension_numbers<[1], [0], [0], [1], [0, 0, 1, 1], [], []>} : vector<8x64xf32>, vector<64x192xf32>, vector<8x192xf32> -> vector<8x192xf32>
    %c0_41 = arith.constant 0 : index
    %c0_42 = arith.constant 0 : index
    %c0_43 = arith.constant 0 : index
    %66 = vector.load %arg15[%c0_41, %c0_42, %c0_43] : memref<2x1x192xf32, #tpu.memory_space<vmem>>, vector<1x1x192xf32>
    %67 = vector.shape_cast %66 : vector<1x1x192xf32> to vector<1x192xf32>
    %68 = vector.broadcast %67 : vector<1x192xf32> to vector<8x192xf32>
    %69 = arith.addf %65, %68 : vector<8x192xf32>
    %c0_44 = arith.constant 0 : index
    %c0_45 = arith.constant 0 : index
    %c0_46 = arith.constant 0 : index
    %70 = vector.load %arg16[%c0_44, %c0_45, %c0_46] : memref<2x64x64xf32, #tpu.memory_space<vmem>>, vector<1x64x64xf32>
    %71 = vector.shape_cast %70 : vector<1x64x64xf32> to vector<64x64xf32>
    %cst_47 = arith.constant 0.000000e+00 : f32
    %72 = vector.broadcast %cst_47 : f32 to vector<8x64xf32>
    %73 = vector.extract_strided_slice %69 {offsets = [0, 0], sizes = [8, 16], strides = [1, 1]} : vector<8x192xf32> to vector<8x16xf32>
    %74 = vector.extract_strided_slice %69 {offsets = [0, 64], sizes = [8, 16], strides = [1, 1]} : vector<8x192xf32> to vector<8x16xf32>
    %75 = vector.extract_strided_slice %69 {offsets = [0, 128], sizes = [8, 16], strides = [1, 1]} : vector<8x192xf32> to vector<8x16xf32>
    %cst_48 = arith.constant dense<0.000000e+00> : vector<8x8xf32>
    %76 = tpu.matmul %73, %74, %cst_48 {dimension_numbers = #tpu.dot_dimension_numbers<[1], [1], [0], [0], [0, 0, 1, 0], [], []>} : vector<8x16xf32>, vector<8x16xf32>, vector<8x8xf32> -> vector<8x8xf32>
    %cst_49 = arith.constant 2.500000e-01 : f32
    %77 = vector.broadcast %cst_49 : f32 to vector<8x8xf32>
    %78 = arith.mulf %76, %77 : vector<8x8xf32>
    %cst_50 = arith.constant -1.000000e+30 : f32
    %79 = vector.broadcast %cst_50 : f32 to vector<8x8xf32>
    %80 = arith.select %36, %78, %79 : vector<8x8xi1>, vector<8x8xf32>
    %cst_51 = arith.constant dense<0xFF800000> : vector<8xf32>
    %81 = vector.multi_reduction <maximumf>, %80, %cst_51 [1] : vector<8x8xf32> to vector<8xf32>
    %cst_52 = arith.constant 0xFF800000 : f32
    %82 = vector.broadcast %cst_52 : f32 to vector<8xf32>
    %83 = arith.maximumf %82, %81 : vector<8xf32>
    %84 = vector.shape_cast %83 : vector<8xf32> to vector<8x1xf32>
    %85 = vector.broadcast %84 : vector<8x1xf32> to vector<8x8xf32>
    %86 = arith.subf %80, %85 : vector<8x8xf32>
    %87 = math.exp %86 : vector<8x8xf32>
    %cst_53 = arith.constant dense<0.000000e+00> : vector<8xf32>
    %88 = vector.multi_reduction <add>, %87, %cst_53 [1] : vector<8x8xf32> to vector<8xf32>
    %89 = vector.shape_cast %88 : vector<8xf32> to vector<8x1xf32>
    %90 = vector.broadcast %89 : vector<8x1xf32> to vector<8x8xf32>
    %91 = arith.divf %87, %90 : vector<8x8xf32>
    %cst_54 = arith.constant dense<0.000000e+00> : vector<8x16xf32>
    %92 = tpu.matmul %91, %75, %cst_54 {dimension_numbers = #tpu.dot_dimension_numbers<[1], [0], [0], [1], [0, 0, 1, 1], [], []>} : vector<8x8xf32>, vector<8x16xf32>, vector<8x16xf32> -> vector<8x16xf32>
    %93 = vector.extract_strided_slice %71 {offsets = [0, 0], sizes = [16, 64], strides = [1, 1]} : vector<64x64xf32> to vector<16x64xf32>
    %cst_55 = arith.constant dense<0.000000e+00> : vector<8x64xf32>
    %94 = tpu.matmul %92, %93, %cst_55 {dimension_numbers = #tpu.dot_dimension_numbers<[1], [0], [0], [1], [0, 0, 1, 1], [], []>} : vector<8x16xf32>, vector<16x64xf32>, vector<8x64xf32> -> vector<8x64xf32>
    %95 = arith.addf %72, %94 : vector<8x64xf32>
    %96 = vector.extract_strided_slice %69 {offsets = [0, 16], sizes = [8, 16], strides = [1, 1]} : vector<8x192xf32> to vector<8x16xf32>
    %97 = vector.extract_strided_slice %69 {offsets = [0, 80], sizes = [8, 16], strides = [1, 1]} : vector<8x192xf32> to vector<8x16xf32>
    %98 = vector.extract_strided_slice %69 {offsets = [0, 144], sizes = [8, 16], strides = [1, 1]} : vector<8x192xf32> to vector<8x16xf32>
    %cst_56 = arith.constant dense<0.000000e+00> : vector<8x8xf32>
    %99 = tpu.matmul %96, %97, %cst_56 {dimension_numbers = #tpu.dot_dimension_numbers<[1], [1], [0], [0], [0, 0, 1, 0], [], []>} : vector<8x16xf32>, vector<8x16xf32>, vector<8x8xf32> -> vector<8x8xf32>
    %cst_57 = arith.constant 2.500000e-01 : f32
    %100 = vector.broadcast %cst_57 : f32 to vector<8x8xf32>
    %101 = arith.mulf %99, %100 : vector<8x8xf32>
    %cst_58 = arith.constant -1.000000e+30 : f32
    %102 = vector.broadcast %cst_58 : f32 to vector<8x8xf32>
    %103 = arith.select %36, %101, %102 : vector<8x8xi1>, vector<8x8xf32>
    %cst_59 = arith.constant dense<0xFF800000> : vector<8xf32>
    %104 = vector.multi_reduction <maximumf>, %103, %cst_59 [1] : vector<8x8xf32> to vector<8xf32>
    %cst_60 = arith.constant 0xFF800000 : f32
    %105 = vector.broadcast %cst_60 : f32 to vector<8xf32>
    %106 = arith.maximumf %105, %104 : vector<8xf32>
    %107 = vector.shape_cast %106 : vector<8xf32> to vector<8x1xf32>
    %108 = vector.broadcast %107 : vector<8x1xf32> to vector<8x8xf32>
    %109 = arith.subf %103, %108 : vector<8x8xf32>
    %110 = math.exp %109 : vector<8x8xf32>
    %cst_61 = arith.constant dense<0.000000e+00> : vector<8xf32>
    %111 = vector.multi_reduction <add>, %110, %cst_61 [1] : vector<8x8xf32> to vector<8xf32>
    %112 = vector.shape_cast %111 : vector<8xf32> to vector<8x1xf32>
    %113 = vector.broadcast %112 : vector<8x1xf32> to vector<8x8xf32>
    %114 = arith.divf %110, %113 : vector<8x8xf32>
    %cst_62 = arith.constant dense<0.000000e+00> : vector<8x16xf32>
    %115 = tpu.matmul %114, %98, %cst_62 {dimension_numbers = #tpu.dot_dimension_numbers<[1], [0], [0], [1], [0, 0, 1, 1], [], []>} : vector<8x8xf32>, vector<8x16xf32>, vector<8x16xf32> -> vector<8x16xf32>
    %116 = vector.extract_strided_slice %71 {offsets = [16, 0], sizes = [16, 64], strides = [1, 1]} : vector<64x64xf32> to vector<16x64xf32>
    %cst_63 = arith.constant dense<0.000000e+00> : vector<8x64xf32>
    %117 = tpu.matmul %115, %116, %cst_63 {dimension_numbers = #tpu.dot_dimension_numbers<[1], [0], [0], [1], [0, 0, 1, 1], [], []>} : vector<8x16xf32>, vector<16x64xf32>, vector<8x64xf32> -> vector<8x64xf32>
    %118 = arith.addf %95, %117 : vector<8x64xf32>
    %119 = vector.extract_strided_slice %69 {offsets = [0, 32], sizes = [8, 16], strides = [1, 1]} : vector<8x192xf32> to vector<8x16xf32>
    %120 = vector.extract_strided_slice %69 {offsets = [0, 96], sizes = [8, 16], strides = [1, 1]} : vector<8x192xf32> to vector<8x16xf32>
    %121 = vector.extract_strided_slice %69 {offsets = [0, 160], sizes = [8, 16], strides = [1, 1]} : vector<8x192xf32> to vector<8x16xf32>
    %cst_64 = arith.constant dense<0.000000e+00> : vector<8x8xf32>
    %122 = tpu.matmul %119, %120, %cst_64 {dimension_numbers = #tpu.dot_dimension_numbers<[1], [1], [0], [0], [0, 0, 1, 0], [], []>} : vector<8x16xf32>, vector<8x16xf32>, vector<8x8xf32> -> vector<8x8xf32>
    %cst_65 = arith.constant 2.500000e-01 : f32
    %123 = vector.broadcast %cst_65 : f32 to vector<8x8xf32>
    %124 = arith.mulf %122, %123 : vector<8x8xf32>
    %cst_66 = arith.constant -1.000000e+30 : f32
    %125 = vector.broadcast %cst_66 : f32 to vector<8x8xf32>
    %126 = arith.select %36, %124, %125 : vector<8x8xi1>, vector<8x8xf32>
    %cst_67 = arith.constant dense<0xFF800000> : vector<8xf32>
    %127 = vector.multi_reduction <maximumf>, %126, %cst_67 [1] : vector<8x8xf32> to vector<8xf32>
    %cst_68 = arith.constant 0xFF800000 : f32
    %128 = vector.broadcast %cst_68 : f32 to vector<8xf32>
    %129 = arith.maximumf %128, %127 : vector<8xf32>
    %130 = vector.shape_cast %129 : vector<8xf32> to vector<8x1xf32>
    %131 = vector.broadcast %130 : vector<8x1xf32> to vector<8x8xf32>
    %132 = arith.subf %126, %131 : vector<8x8xf32>
    %133 = math.exp %132 : vector<8x8xf32>
    %cst_69 = arith.constant dense<0.000000e+00> : vector<8xf32>
    %134 = vector.multi_reduction <add>, %133, %cst_69 [1] : vector<8x8xf32> to vector<8xf32>
    %135 = vector.shape_cast %134 : vector<8xf32> to vector<8x1xf32>
    %136 = vector.broadcast %135 : vector<8x1xf32> to vector<8x8xf32>
    %137 = arith.divf %133, %136 : vector<8x8xf32>
    %cst_70 = arith.constant dense<0.000000e+00> : vector<8x16xf32>
    %138 = tpu.matmul %137, %121, %cst_70 {dimension_numbers = #tpu.dot_dimension_numbers<[1], [0], [0], [1], [0, 0, 1, 1], [], []>} : vector<8x8xf32>, vector<8x16xf32>, vector<8x16xf32> -> vector<8x16xf32>
    %139 = vector.extract_strided_slice %71 {offsets = [32, 0], sizes = [16, 64], strides = [1, 1]} : vector<64x64xf32> to vector<16x64xf32>
    %cst_71 = arith.constant dense<0.000000e+00> : vector<8x64xf32>
    %140 = tpu.matmul %138, %139, %cst_71 {dimension_numbers = #tpu.dot_dimension_numbers<[1], [0], [0], [1], [0, 0, 1, 1], [], []>} : vector<8x16xf32>, vector<16x64xf32>, vector<8x64xf32> -> vector<8x64xf32>
    %141 = arith.addf %118, %140 : vector<8x64xf32>
    %142 = vector.extract_strided_slice %69 {offsets = [0, 48], sizes = [8, 16], strides = [1, 1]} : vector<8x192xf32> to vector<8x16xf32>
    %143 = vector.extract_strided_slice %69 {offsets = [0, 112], sizes = [8, 16], strides = [1, 1]} : vector<8x192xf32> to vector<8x16xf32>
    %144 = vector.extract_strided_slice %69 {offsets = [0, 176], sizes = [8, 16], strides = [1, 1]} : vector<8x192xf32> to vector<8x16xf32>
    %cst_72 = arith.constant dense<0.000000e+00> : vector<8x8xf32>
    %145 = tpu.matmul %142, %143, %cst_72 {dimension_numbers = #tpu.dot_dimension_numbers<[1], [1], [0], [0], [0, 0, 1, 0], [], []>} : vector<8x16xf32>, vector<8x16xf32>, vector<8x8xf32> -> vector<8x8xf32>
    %cst_73 = arith.constant 2.500000e-01 : f32
    %146 = vector.broadcast %cst_73 : f32 to vector<8x8xf32>
    %147 = arith.mulf %145, %146 : vector<8x8xf32>
    %cst_74 = arith.constant -1.000000e+30 : f32
    %148 = vector.broadcast %cst_74 : f32 to vector<8x8xf32>
    %149 = arith.select %36, %147, %148 : vector<8x8xi1>, vector<8x8xf32>
    %cst_75 = arith.constant dense<0xFF800000> : vector<8xf32>
    %150 = vector.multi_reduction <maximumf>, %149, %cst_75 [1] : vector<8x8xf32> to vector<8xf32>
    %cst_76 = arith.constant 0xFF800000 : f32
    %151 = vector.broadcast %cst_76 : f32 to vector<8xf32>
    %152 = arith.maximumf %151, %150 : vector<8xf32>
    %153 = vector.shape_cast %152 : vector<8xf32> to vector<8x1xf32>
    %154 = vector.broadcast %153 : vector<8x1xf32> to vector<8x8xf32>
    %155 = arith.subf %149, %154 : vector<8x8xf32>
    %156 = math.exp %155 : vector<8x8xf32>
    %cst_77 = arith.constant dense<0.000000e+00> : vector<8xf32>
    %157 = vector.multi_reduction <add>, %156, %cst_77 [1] : vector<8x8xf32> to vector<8xf32>
    %158 = vector.shape_cast %157 : vector<8xf32> to vector<8x1xf32>
    %159 = vector.broadcast %158 : vector<8x1xf32> to vector<8x8xf32>
    %160 = arith.divf %156, %159 : vector<8x8xf32>
    %cst_78 = arith.constant dense<0.000000e+00> : vector<8x16xf32>
    %161 = tpu.matmul %160, %144, %cst_78 {dimension_numbers = #tpu.dot_dimension_numbers<[1], [0], [0], [1], [0, 0, 1, 1], [], []>} : vector<8x8xf32>, vector<8x16xf32>, vector<8x16xf32> -> vector<8x16xf32>
    %162 = vector.extract_strided_slice %71 {offsets = [48, 0], sizes = [16, 64], strides = [1, 1]} : vector<64x64xf32> to vector<16x64xf32>
    %cst_79 = arith.constant dense<0.000000e+00> : vector<8x64xf32>
    %163 = tpu.matmul %161, %162, %cst_79 {dimension_numbers = #tpu.dot_dimension_numbers<[1], [0], [0], [1], [0, 0, 1, 1], [], []>} : vector<8x16xf32>, vector<16x64xf32>, vector<8x64xf32> -> vector<8x64xf32>
    %164 = arith.addf %141, %163 : vector<8x64xf32>
    %165 = arith.addf %33, %164 : vector<8x64xf32>
    %c0_80 = arith.constant 0 : index
    %c0_81 = arith.constant 0 : index
    %c0_82 = arith.constant 0 : index
    %166 = vector.load %arg17[%c0_80, %c0_81, %c0_82] : memref<2x1x64xf32, #tpu.memory_space<vmem>>, vector<1x1x64xf32>
    %167 = vector.shape_cast %166 : vector<1x1x64xf32> to vector<1x64xf32>
    %168 = vector.broadcast %167 : vector<1x64xf32> to vector<8x64xf32>
    %169 = arith.addf %165, %168 : vector<8x64xf32>
    %c0_83 = arith.constant 0 : index
    %c0_84 = arith.constant 0 : index
    %c0_85 = arith.constant 0 : index
    %170 = vector.load %arg18[%c0_83, %c0_84, %c0_85] : memref<2x1x64xf32, #tpu.memory_space<vmem>>, vector<1x1x64xf32>
    %171 = vector.shape_cast %170 : vector<1x1x64xf32> to vector<1x64xf32>
    %c0_86 = arith.constant 0 : index
    %c0_87 = arith.constant 0 : index
    %c0_88 = arith.constant 0 : index
    %172 = vector.load %arg19[%c0_86, %c0_87, %c0_88] : memref<2x1x64xf32, #tpu.memory_space<vmem>>, vector<1x1x64xf32>
    %173 = vector.shape_cast %172 : vector<1x1x64xf32> to vector<1x64xf32>
    %cst_89 = arith.constant dense<0.000000e+00> : vector<8xf32>
    %174 = vector.multi_reduction <add>, %169, %cst_89 [1] : vector<8x64xf32> to vector<8xf32>
    %175 = vector.shape_cast %174 : vector<8xf32> to vector<8x1xf32>
    %cst_90 = arith.constant 6.400000e+01 : f32
    %176 = vector.broadcast %cst_90 : f32 to vector<8x1xf32>
    %177 = arith.divf %175, %176 : vector<8x1xf32>
    %178 = vector.broadcast %177 : vector<8x1xf32> to vector<8x64xf32>
    %179 = arith.subf %169, %178 : vector<8x64xf32>
    %180 = arith.mulf %179, %179 : vector<8x64xf32>
    %cst_91 = arith.constant dense<0.000000e+00> : vector<8xf32>
    %181 = vector.multi_reduction <add>, %180, %cst_91 [1] : vector<8x64xf32> to vector<8xf32>
    %182 = vector.shape_cast %181 : vector<8xf32> to vector<8x1xf32>
    %cst_92 = arith.constant 6.400000e+01 : f32
    %183 = vector.broadcast %cst_92 : f32 to vector<8x1xf32>
    %184 = arith.divf %182, %183 : vector<8x1xf32>
    %185 = vector.broadcast %177 : vector<8x1xf32> to vector<8x64xf32>
    %186 = arith.subf %169, %185 : vector<8x64xf32>
    %cst_93 = arith.constant 9.99999974E-6 : f32
    %187 = vector.broadcast %cst_93 : f32 to vector<8x1xf32>
    %188 = arith.addf %184, %187 : vector<8x1xf32>
    %189 = math.rsqrt %188 : vector<8x1xf32>
    %190 = vector.broadcast %189 : vector<8x1xf32> to vector<8x64xf32>
    %191 = arith.mulf %186, %190 : vector<8x64xf32>
    %192 = vector.broadcast %171 : vector<1x64xf32> to vector<8x64xf32>
    %193 = arith.mulf %191, %192 : vector<8x64xf32>
    %194 = vector.broadcast %173 : vector<1x64xf32> to vector<8x64xf32>
    %195 = arith.addf %193, %194 : vector<8x64xf32>
    %c0_94 = arith.constant 0 : index
    %c0_95 = arith.constant 0 : index
    %c0_96 = arith.constant 0 : index
    %196 = vector.load %arg20[%c0_94, %c0_95, %c0_96] : memref<2x64x256xf32, #tpu.memory_space<vmem>>, vector<1x64x256xf32>
    %197 = vector.shape_cast %196 : vector<1x64x256xf32> to vector<64x256xf32>
    %cst_97 = arith.constant dense<0.000000e+00> : vector<8x256xf32>
    %198 = tpu.matmul %195, %197, %cst_97 {dimension_numbers = #tpu.dot_dimension_numbers<[1], [0], [0], [1], [0, 0, 1, 1], [], []>} : vector<8x64xf32>, vector<64x256xf32>, vector<8x256xf32> -> vector<8x256xf32>
    %c0_98 = arith.constant 0 : index
    %c0_99 = arith.constant 0 : index
    %c0_100 = arith.constant 0 : index
    %199 = vector.load %arg21[%c0_98, %c0_99, %c0_100] : memref<2x1x256xf32, #tpu.memory_space<vmem>>, vector<1x1x256xf32>
    %200 = vector.shape_cast %199 : vector<1x1x256xf32> to vector<1x256xf32>
    %201 = vector.broadcast %200 : vector<1x256xf32> to vector<8x256xf32>
    %202 = arith.addf %198, %201 : vector<8x256xf32>
    %cst_101 = arith.constant 1.702000e+00 : f32
    %203 = vector.broadcast %cst_101 : f32 to vector<8x256xf32>
    %204 = arith.mulf %203, %202 : vector<8x256xf32>
    %205 = arith.negf %204 : vector<8x256xf32>
    %206 = math.exp %205 : vector<8x256xf32>
    %cst_102 = arith.constant 1.000000e+00 : f32
    %207 = vector.broadcast %cst_102 : f32 to vector<8x256xf32>
    %208 = arith.addf %207, %206 : vector<8x256xf32>
    %209 = arith.divf %207, %208 : vector<8x256xf32>
    %210 = arith.mulf %202, %209 : vector<8x256xf32>
    %c0_103 = arith.constant 0 : index
    %c0_104 = arith.constant 0 : index
    %c0_105 = arith.constant 0 : index
    %211 = vector.load %arg22[%c0_103, %c0_104, %c0_105] : memref<2x256x64xf32, #tpu.memory_space<vmem>>, vector<1x256x64xf32>
    %212 = vector.shape_cast %211 : vector<1x256x64xf32> to vector<256x64xf32>
    %cst_106 = arith.constant dense<0.000000e+00> : vector<8x64xf32>
    %213 = tpu.matmul %210, %212, %cst_106 {dimension_numbers = #tpu.dot_dimension_numbers<[1], [0], [0], [1], [0, 0, 1, 1], [], []>} : vector<8x256xf32>, vector<256x64xf32>, vector<8x64xf32> -> vector<8x64xf32>
    %214 = arith.addf %169, %213 : vector<8x64xf32>
    %c0_107 = arith.constant 0 : index
    %c0_108 = arith.constant 0 : index
    %c0_109 = arith.constant 0 : index
    %215 = vector.load %arg23[%c0_107, %c0_108, %c0_109] : memref<2x1x64xf32, #tpu.memory_space<vmem>>, vector<1x1x64xf32>
    %216 = vector.shape_cast %215 : vector<1x1x64xf32> to vector<1x64xf32>
    %217 = vector.broadcast %216 : vector<1x64xf32> to vector<8x64xf32>
    %218 = arith.addf %214, %217 : vector<8x64xf32>
    %c1 = arith.constant 1 : index
    %c0_110 = arith.constant 0 : index
    %c0_111 = arith.constant 0 : index
    %219 = vector.load %arg12[%c1, %c0_110, %c0_111] : memref<2x1x64xf32, #tpu.memory_space<vmem>>, vector<1x1x64xf32>
    %220 = vector.shape_cast %219 : vector<1x1x64xf32> to vector<1x64xf32>
    %c1_112 = arith.constant 1 : index
    %c0_113 = arith.constant 0 : index
    %c0_114 = arith.constant 0 : index
    %221 = vector.load %arg13[%c1_112, %c0_113, %c0_114] : memref<2x1x64xf32, #tpu.memory_space<vmem>>, vector<1x1x64xf32>
    %222 = vector.shape_cast %221 : vector<1x1x64xf32> to vector<1x64xf32>
    %cst_115 = arith.constant dense<0.000000e+00> : vector<8xf32>
    %223 = vector.multi_reduction <add>, %218, %cst_115 [1] : vector<8x64xf32> to vector<8xf32>
    %224 = vector.shape_cast %223 : vector<8xf32> to vector<8x1xf32>
    %cst_116 = arith.constant 6.400000e+01 : f32
    %225 = vector.broadcast %cst_116 : f32 to vector<8x1xf32>
    %226 = arith.divf %224, %225 : vector<8x1xf32>
    %227 = vector.broadcast %226 : vector<8x1xf32> to vector<8x64xf32>
    %228 = arith.subf %218, %227 : vector<8x64xf32>
    %229 = arith.mulf %228, %228 : vector<8x64xf32>
    %cst_117 = arith.constant dense<0.000000e+00> : vector<8xf32>
    %230 = vector.multi_reduction <add>, %229, %cst_117 [1] : vector<8x64xf32> to vector<8xf32>
    %231 = vector.shape_cast %230 : vector<8xf32> to vector<8x1xf32>
    %cst_118 = arith.constant 6.400000e+01 : f32
    %232 = vector.broadcast %cst_118 : f32 to vector<8x1xf32>
    %233 = arith.divf %231, %232 : vector<8x1xf32>
    %234 = vector.broadcast %226 : vector<8x1xf32> to vector<8x64xf32>
    %235 = arith.subf %218, %234 : vector<8x64xf32>
    %cst_119 = arith.constant 9.99999974E-6 : f32
    %236 = vector.broadcast %cst_119 : f32 to vector<8x1xf32>
    %237 = arith.addf %233, %236 : vector<8x1xf32>
    %238 = math.rsqrt %237 : vector<8x1xf32>
    %239 = vector.broadcast %238 : vector<8x1xf32> to vector<8x64xf32>
    %240 = arith.mulf %235, %239 : vector<8x64xf32>
    %241 = vector.broadcast %220 : vector<1x64xf32> to vector<8x64xf32>
    %242 = arith.mulf %240, %241 : vector<8x64xf32>
    %243 = vector.broadcast %222 : vector<1x64xf32> to vector<8x64xf32>
    %244 = arith.addf %242, %243 : vector<8x64xf32>
    %c1_120 = arith.constant 1 : index
    %c0_121 = arith.constant 0 : index
    %c0_122 = arith.constant 0 : index
    %245 = vector.load %arg14[%c1_120, %c0_121, %c0_122] : memref<2x64x192xf32, #tpu.memory_space<vmem>>, vector<1x64x192xf32>
    %246 = vector.shape_cast %245 : vector<1x64x192xf32> to vector<64x192xf32>
    %cst_123 = arith.constant dense<0.000000e+00> : vector<8x192xf32>
    %247 = tpu.matmul %244, %246, %cst_123 {dimension_numbers = #tpu.dot_dimension_numbers<[1], [0], [0], [1], [0, 0, 1, 1], [], []>} : vector<8x64xf32>, vector<64x192xf32>, vector<8x192xf32> -> vector<8x192xf32>
    %c1_124 = arith.constant 1 : index
    %c0_125 = arith.constant 0 : index
    %c0_126 = arith.constant 0 : index
    %248 = vector.load %arg15[%c1_124, %c0_125, %c0_126] : memref<2x1x192xf32, #tpu.memory_space<vmem>>, vector<1x1x192xf32>
    %249 = vector.shape_cast %248 : vector<1x1x192xf32> to vector<1x192xf32>
    %250 = vector.broadcast %249 : vector<1x192xf32> to vector<8x192xf32>
    %251 = arith.addf %247, %250 : vector<8x192xf32>
    %c1_127 = arith.constant 1 : index
    %c0_128 = arith.constant 0 : index
    %c0_129 = arith.constant 0 : index
    %252 = vector.load %arg16[%c1_127, %c0_128, %c0_129] : memref<2x64x64xf32, #tpu.memory_space<vmem>>, vector<1x64x64xf32>
    %253 = vector.shape_cast %252 : vector<1x64x64xf32> to vector<64x64xf32>
    %cst_130 = arith.constant 0.000000e+00 : f32
    %254 = vector.broadcast %cst_130 : f32 to vector<8x64xf32>
    %255 = vector.extract_strided_slice %251 {offsets = [0, 0], sizes = [8, 16], strides = [1, 1]} : vector<8x192xf32> to vector<8x16xf32>
    %256 = vector.extract_strided_slice %251 {offsets = [0, 64], sizes = [8, 16], strides = [1, 1]} : vector<8x192xf32> to vector<8x16xf32>
    %257 = vector.extract_strided_slice %251 {offsets = [0, 128], sizes = [8, 16], strides = [1, 1]} : vector<8x192xf32> to vector<8x16xf32>
    %cst_131 = arith.constant dense<0.000000e+00> : vector<8x8xf32>
    %258 = tpu.matmul %255, %256, %cst_131 {dimension_numbers = #tpu.dot_dimension_numbers<[1], [1], [0], [0], [0, 0, 1, 0], [], []>} : vector<8x16xf32>, vector<8x16xf32>, vector<8x8xf32> -> vector<8x8xf32>
    %cst_132 = arith.constant 2.500000e-01 : f32
    %259 = vector.broadcast %cst_132 : f32 to vector<8x8xf32>
    %260 = arith.mulf %258, %259 : vector<8x8xf32>
    %cst_133 = arith.constant -1.000000e+30 : f32
    %261 = vector.broadcast %cst_133 : f32 to vector<8x8xf32>
    %262 = arith.select %36, %260, %261 : vector<8x8xi1>, vector<8x8xf32>
    %cst_134 = arith.constant dense<0xFF800000> : vector<8xf32>
    %263 = vector.multi_reduction <maximumf>, %262, %cst_134 [1] : vector<8x8xf32> to vector<8xf32>
    %cst_135 = arith.constant 0xFF800000 : f32
    %264 = vector.broadcast %cst_135 : f32 to vector<8xf32>
    %265 = arith.maximumf %264, %263 : vector<8xf32>
    %266 = vector.shape_cast %265 : vector<8xf32> to vector<8x1xf32>
    %267 = vector.broadcast %266 : vector<8x1xf32> to vector<8x8xf32>
    %268 = arith.subf %262, %267 : vector<8x8xf32>
    %269 = math.exp %268 : vector<8x8xf32>
    %cst_136 = arith.constant dense<0.000000e+00> : vector<8xf32>
    %270 = vector.multi_reduction <add>, %269, %cst_136 [1] : vector<8x8xf32> to vector<8xf32>
    %271 = vector.shape_cast %270 : vector<8xf32> to vector<8x1xf32>
    %272 = vector.broadcast %271 : vector<8x1xf32> to vector<8x8xf32>
    %273 = arith.divf %269, %272 : vector<8x8xf32>
    %cst_137 = arith.constant dense<0.000000e+00> : vector<8x16xf32>
    %274 = tpu.matmul %273, %257, %cst_137 {dimension_numbers = #tpu.dot_dimension_numbers<[1], [0], [0], [1], [0, 0, 1, 1], [], []>} : vector<8x8xf32>, vector<8x16xf32>, vector<8x16xf32> -> vector<8x16xf32>
    %275 = vector.extract_strided_slice %253 {offsets = [0, 0], sizes = [16, 64], strides = [1, 1]} : vector<64x64xf32> to vector<16x64xf32>
    %cst_138 = arith.constant dense<0.000000e+00> : vector<8x64xf32>
    %276 = tpu.matmul %274, %275, %cst_138 {dimension_numbers = #tpu.dot_dimension_numbers<[1], [0], [0], [1], [0, 0, 1, 1], [], []>} : vector<8x16xf32>, vector<16x64xf32>, vector<8x64xf32> -> vector<8x64xf32>
    %277 = arith.addf %254, %276 : vector<8x64xf32>
    %278 = vector.extract_strided_slice %251 {offsets = [0, 16], sizes = [8, 16], strides = [1, 1]} : vector<8x192xf32> to vector<8x16xf32>
    %279 = vector.extract_strided_slice %251 {offsets = [0, 80], sizes = [8, 16], strides = [1, 1]} : vector<8x192xf32> to vector<8x16xf32>
    %280 = vector.extract_strided_slice %251 {offsets = [0, 144], sizes = [8, 16], strides = [1, 1]} : vector<8x192xf32> to vector<8x16xf32>
    %cst_139 = arith.constant dense<0.000000e+00> : vector<8x8xf32>
    %281 = tpu.matmul %278, %279, %cst_139 {dimension_numbers = #tpu.dot_dimension_numbers<[1], [1], [0], [0], [0, 0, 1, 0], [], []>} : vector<8x16xf32>, vector<8x16xf32>, vector<8x8xf32> -> vector<8x8xf32>
    %cst_140 = arith.constant 2.500000e-01 : f32
    %282 = vector.broadcast %cst_140 : f32 to vector<8x8xf32>
    %283 = arith.mulf %281, %282 : vector<8x8xf32>
    %cst_141 = arith.constant -1.000000e+30 : f32
    %284 = vector.broadcast %cst_141 : f32 to vector<8x8xf32>
    %285 = arith.select %36, %283, %284 : vector<8x8xi1>, vector<8x8xf32>
    %cst_142 = arith.constant dense<0xFF800000> : vector<8xf32>
    %286 = vector.multi_reduction <maximumf>, %285, %cst_142 [1] : vector<8x8xf32> to vector<8xf32>
    %cst_143 = arith.constant 0xFF800000 : f32
    %287 = vector.broadcast %cst_143 : f32 to vector<8xf32>
    %288 = arith.maximumf %287, %286 : vector<8xf32>
    %289 = vector.shape_cast %288 : vector<8xf32> to vector<8x1xf32>
    %290 = vector.broadcast %289 : vector<8x1xf32> to vector<8x8xf32>
    %291 = arith.subf %285, %290 : vector<8x8xf32>
    %292 = math.exp %291 : vector<8x8xf32>
    %cst_144 = arith.constant dense<0.000000e+00> : vector<8xf32>
    %293 = vector.multi_reduction <add>, %292, %cst_144 [1] : vector<8x8xf32> to vector<8xf32>
    %294 = vector.shape_cast %293 : vector<8xf32> to vector<8x1xf32>
    %295 = vector.broadcast %294 : vector<8x1xf32> to vector<8x8xf32>
    %296 = arith.divf %292, %295 : vector<8x8xf32>
    %cst_145 = arith.constant dense<0.000000e+00> : vector<8x16xf32>
    %297 = tpu.matmul %296, %280, %cst_145 {dimension_numbers = #tpu.dot_dimension_numbers<[1], [0], [0], [1], [0, 0, 1, 1], [], []>} : vector<8x8xf32>, vector<8x16xf32>, vector<8x16xf32> -> vector<8x16xf32>
    %298 = vector.extract_strided_slice %253 {offsets = [16, 0], sizes = [16, 64], strides = [1, 1]} : vector<64x64xf32> to vector<16x64xf32>
    %cst_146 = arith.constant dense<0.000000e+00> : vector<8x64xf32>
    %299 = tpu.matmul %297, %298, %cst_146 {dimension_numbers = #tpu.dot_dimension_numbers<[1], [0], [0], [1], [0, 0, 1, 1], [], []>} : vector<8x16xf32>, vector<16x64xf32>, vector<8x64xf32> -> vector<8x64xf32>
    %300 = arith.addf %277, %299 : vector<8x64xf32>
    %301 = vector.extract_strided_slice %251 {offsets = [0, 32], sizes = [8, 16], strides = [1, 1]} : vector<8x192xf32> to vector<8x16xf32>
    %302 = vector.extract_strided_slice %251 {offsets = [0, 96], sizes = [8, 16], strides = [1, 1]} : vector<8x192xf32> to vector<8x16xf32>
    %303 = vector.extract_strided_slice %251 {offsets = [0, 160], sizes = [8, 16], strides = [1, 1]} : vector<8x192xf32> to vector<8x16xf32>
    %cst_147 = arith.constant dense<0.000000e+00> : vector<8x8xf32>
    %304 = tpu.matmul %301, %302, %cst_147 {dimension_numbers = #tpu.dot_dimension_numbers<[1], [1], [0], [0], [0, 0, 1, 0], [], []>} : vector<8x16xf32>, vector<8x16xf32>, vector<8x8xf32> -> vector<8x8xf32>
    %cst_148 = arith.constant 2.500000e-01 : f32
    %305 = vector.broadcast %cst_148 : f32 to vector<8x8xf32>
    %306 = arith.mulf %304, %305 : vector<8x8xf32>
    %cst_149 = arith.constant -1.000000e+30 : f32
    %307 = vector.broadcast %cst_149 : f32 to vector<8x8xf32>
    %308 = arith.select %36, %306, %307 : vector<8x8xi1>, vector<8x8xf32>
    %cst_150 = arith.constant dense<0xFF800000> : vector<8xf32>
    %309 = vector.multi_reduction <maximumf>, %308, %cst_150 [1] : vector<8x8xf32> to vector<8xf32>
    %cst_151 = arith.constant 0xFF800000 : f32
    %310 = vector.broadcast %cst_151 : f32 to vector<8xf32>
    %311 = arith.maximumf %310, %309 : vector<8xf32>
    %312 = vector.shape_cast %311 : vector<8xf32> to vector<8x1xf32>
    %313 = vector.broadcast %312 : vector<8x1xf32> to vector<8x8xf32>
    %314 = arith.subf %308, %313 : vector<8x8xf32>
    %315 = math.exp %314 : vector<8x8xf32>
    %cst_152 = arith.constant dense<0.000000e+00> : vector<8xf32>
    %316 = vector.multi_reduction <add>, %315, %cst_152 [1] : vector<8x8xf32> to vector<8xf32>
    %317 = vector.shape_cast %316 : vector<8xf32> to vector<8x1xf32>
    %318 = vector.broadcast %317 : vector<8x1xf32> to vector<8x8xf32>
    %319 = arith.divf %315, %318 : vector<8x8xf32>
    %cst_153 = arith.constant dense<0.000000e+00> : vector<8x16xf32>
    %320 = tpu.matmul %319, %303, %cst_153 {dimension_numbers = #tpu.dot_dimension_numbers<[1], [0], [0], [1], [0, 0, 1, 1], [], []>} : vector<8x8xf32>, vector<8x16xf32>, vector<8x16xf32> -> vector<8x16xf32>
    %321 = vector.extract_strided_slice %253 {offsets = [32, 0], sizes = [16, 64], strides = [1, 1]} : vector<64x64xf32> to vector<16x64xf32>
    %cst_154 = arith.constant dense<0.000000e+00> : vector<8x64xf32>
    %322 = tpu.matmul %320, %321, %cst_154 {dimension_numbers = #tpu.dot_dimension_numbers<[1], [0], [0], [1], [0, 0, 1, 1], [], []>} : vector<8x16xf32>, vector<16x64xf32>, vector<8x64xf32> -> vector<8x64xf32>
    %323 = arith.addf %300, %322 : vector<8x64xf32>
    %324 = vector.extract_strided_slice %251 {offsets = [0, 48], sizes = [8, 16], strides = [1, 1]} : vector<8x192xf32> to vector<8x16xf32>
    %325 = vector.extract_strided_slice %251 {offsets = [0, 112], sizes = [8, 16], strides = [1, 1]} : vector<8x192xf32> to vector<8x16xf32>
    %326 = vector.extract_strided_slice %251 {offsets = [0, 176], sizes = [8, 16], strides = [1, 1]} : vector<8x192xf32> to vector<8x16xf32>
    %cst_155 = arith.constant dense<0.000000e+00> : vector<8x8xf32>
    %327 = tpu.matmul %324, %325, %cst_155 {dimension_numbers = #tpu.dot_dimension_numbers<[1], [1], [0], [0], [0, 0, 1, 0], [], []>} : vector<8x16xf32>, vector<8x16xf32>, vector<8x8xf32> -> vector<8x8xf32>
    %cst_156 = arith.constant 2.500000e-01 : f32
    %328 = vector.broadcast %cst_156 : f32 to vector<8x8xf32>
    %329 = arith.mulf %327, %328 : vector<8x8xf32>
    %cst_157 = arith.constant -1.000000e+30 : f32
    %330 = vector.broadcast %cst_157 : f32 to vector<8x8xf32>
    %331 = arith.select %36, %329, %330 : vector<8x8xi1>, vector<8x8xf32>
    %cst_158 = arith.constant dense<0xFF800000> : vector<8xf32>
    %332 = vector.multi_reduction <maximumf>, %331, %cst_158 [1] : vector<8x8xf32> to vector<8xf32>
    %cst_159 = arith.constant 0xFF800000 : f32
    %333 = vector.broadcast %cst_159 : f32 to vector<8xf32>
    %334 = arith.maximumf %333, %332 : vector<8xf32>
    %335 = vector.shape_cast %334 : vector<8xf32> to vector<8x1xf32>
    %336 = vector.broadcast %335 : vector<8x1xf32> to vector<8x8xf32>
    %337 = arith.subf %331, %336 : vector<8x8xf32>
    %338 = math.exp %337 : vector<8x8xf32>
    %cst_160 = arith.constant dense<0.000000e+00> : vector<8xf32>
    %339 = vector.multi_reduction <add>, %338, %cst_160 [1] : vector<8x8xf32> to vector<8xf32>
    %340 = vector.shape_cast %339 : vector<8xf32> to vector<8x1xf32>
    %341 = vector.broadcast %340 : vector<8x1xf32> to vector<8x8xf32>
    %342 = arith.divf %338, %341 : vector<8x8xf32>
    %cst_161 = arith.constant dense<0.000000e+00> : vector<8x16xf32>
    %343 = tpu.matmul %342, %326, %cst_161 {dimension_numbers = #tpu.dot_dimension_numbers<[1], [0], [0], [1], [0, 0, 1, 1], [], []>} : vector<8x8xf32>, vector<8x16xf32>, vector<8x16xf32> -> vector<8x16xf32>
    %344 = vector.extract_strided_slice %253 {offsets = [48, 0], sizes = [16, 64], strides = [1, 1]} : vector<64x64xf32> to vector<16x64xf32>
    %cst_162 = arith.constant dense<0.000000e+00> : vector<8x64xf32>
    %345 = tpu.matmul %343, %344, %cst_162 {dimension_numbers = #tpu.dot_dimension_numbers<[1], [0], [0], [1], [0, 0, 1, 1], [], []>} : vector<8x16xf32>, vector<16x64xf32>, vector<8x64xf32> -> vector<8x64xf32>
    %346 = arith.addf %323, %345 : vector<8x64xf32>
    %347 = arith.addf %218, %346 : vector<8x64xf32>
    %c1_163 = arith.constant 1 : index
    %c0_164 = arith.constant 0 : index
    %c0_165 = arith.constant 0 : index
    %348 = vector.load %arg17[%c1_163, %c0_164, %c0_165] : memref<2x1x64xf32, #tpu.memory_space<vmem>>, vector<1x1x64xf32>
    %349 = vector.shape_cast %348 : vector<1x1x64xf32> to vector<1x64xf32>
    %350 = vector.broadcast %349 : vector<1x64xf32> to vector<8x64xf32>
    %351 = arith.addf %347, %350 : vector<8x64xf32>
    %c1_166 = arith.constant 1 : index
    %c0_167 = arith.constant 0 : index
    %c0_168 = arith.constant 0 : index
    %352 = vector.load %arg18[%c1_166, %c0_167, %c0_168] : memref<2x1x64xf32, #tpu.memory_space<vmem>>, vector<1x1x64xf32>
    %353 = vector.shape_cast %352 : vector<1x1x64xf32> to vector<1x64xf32>
    %c1_169 = arith.constant 1 : index
    %c0_170 = arith.constant 0 : index
    %c0_171 = arith.constant 0 : index
    %354 = vector.load %arg19[%c1_169, %c0_170, %c0_171] : memref<2x1x64xf32, #tpu.memory_space<vmem>>, vector<1x1x64xf32>
    %355 = vector.shape_cast %354 : vector<1x1x64xf32> to vector<1x64xf32>
    %cst_172 = arith.constant dense<0.000000e+00> : vector<8xf32>
    %356 = vector.multi_reduction <add>, %351, %cst_172 [1] : vector<8x64xf32> to vector<8xf32>
    %357 = vector.shape_cast %356 : vector<8xf32> to vector<8x1xf32>
    %cst_173 = arith.constant 6.400000e+01 : f32
    %358 = vector.broadcast %cst_173 : f32 to vector<8x1xf32>
    %359 = arith.divf %357, %358 : vector<8x1xf32>
    %360 = vector.broadcast %359 : vector<8x1xf32> to vector<8x64xf32>
    %361 = arith.subf %351, %360 : vector<8x64xf32>
    %362 = arith.mulf %361, %361 : vector<8x64xf32>
    %cst_174 = arith.constant dense<0.000000e+00> : vector<8xf32>
    %363 = vector.multi_reduction <add>, %362, %cst_174 [1] : vector<8x64xf32> to vector<8xf32>
    %364 = vector.shape_cast %363 : vector<8xf32> to vector<8x1xf32>
    %cst_175 = arith.constant 6.400000e+01 : f32
    %365 = vector.broadcast %cst_175 : f32 to vector<8x1xf32>
    %366 = arith.divf %364, %365 : vector<8x1xf32>
    %367 = vector.broadcast %359 : vector<8x1xf32> to vector<8x64xf32>
    %368 = arith.subf %351, %367 : vector<8x64xf32>
    %cst_176 = arith.constant 9.99999974E-6 : f32
    %369 = vector.broadcast %cst_176 : f32 to vector<8x1xf32>
    %370 = arith.addf %366, %369 : vector<8x1xf32>
    %371 = math.rsqrt %370 : vector<8x1xf32>
    %372 = vector.broadcast %371 : vector<8x1xf32> to vector<8x64xf32>
    %373 = arith.mulf %368, %372 : vector<8x64xf32>
    %374 = vector.broadcast %353 : vector<1x64xf32> to vector<8x64xf32>
    %375 = arith.mulf %373, %374 : vector<8x64xf32>
    %376 = vector.broadcast %355 : vector<1x64xf32> to vector<8x64xf32>
    %377 = arith.addf %375, %376 : vector<8x64xf32>
    %c1_177 = arith.constant 1 : index
    %c0_178 = arith.constant 0 : index
    %c0_179 = arith.constant 0 : index
    %378 = vector.load %arg20[%c1_177, %c0_178, %c0_179] : memref<2x64x256xf32, #tpu.memory_space<vmem>>, vector<1x64x256xf32>
    %379 = vector.shape_cast %378 : vector<1x64x256xf32> to vector<64x256xf32>
    %cst_180 = arith.constant dense<0.000000e+00> : vector<8x256xf32>
    %380 = tpu.matmul %377, %379, %cst_180 {dimension_numbers = #tpu.dot_dimension_numbers<[1], [0], [0], [1], [0, 0, 1, 1], [], []>} : vector<8x64xf32>, vector<64x256xf32>, vector<8x256xf32> -> vector<8x256xf32>
    %c1_181 = arith.constant 1 : index
    %c0_182 = arith.constant 0 : index
    %c0_183 = arith.constant 0 : index
    %381 = vector.load %arg21[%c1_181, %c0_182, %c0_183] : memref<2x1x256xf32, #tpu.memory_space<vmem>>, vector<1x1x256xf32>
    %382 = vector.shape_cast %381 : vector<1x1x256xf32> to vector<1x256xf32>
    %383 = vector.broadcast %382 : vector<1x256xf32> to vector<8x256xf32>
    %384 = arith.addf %380, %383 : vector<8x256xf32>
    %cst_184 = arith.constant 1.702000e+00 : f32
    %385 = vector.broadcast %cst_184 : f32 to vector<8x256xf32>
    %386 = arith.mulf %385, %384 : vector<8x256xf32>
    %387 = arith.negf %386 : vector<8x256xf32>
    %388 = math.exp %387 : vector<8x256xf32>
    %cst_185 = arith.constant 1.000000e+00 : f32
    %389 = vector.broadcast %cst_185 : f32 to vector<8x256xf32>
    %390 = arith.addf %389, %388 : vector<8x256xf32>
    %391 = arith.divf %389, %390 : vector<8x256xf32>
    %392 = arith.mulf %384, %391 : vector<8x256xf32>
    %c1_186 = arith.constant 1 : index
    %c0_187 = arith.constant 0 : index
    %c0_188 = arith.constant 0 : index
    %393 = vector.load %arg22[%c1_186, %c0_187, %c0_188] : memref<2x256x64xf32, #tpu.memory_space<vmem>>, vector<1x256x64xf32>
    %394 = vector.shape_cast %393 : vector<1x256x64xf32> to vector<256x64xf32>
    %cst_189 = arith.constant dense<0.000000e+00> : vector<8x64xf32>
    %395 = tpu.matmul %392, %394, %cst_189 {dimension_numbers = #tpu.dot_dimension_numbers<[1], [0], [0], [1], [0, 0, 1, 1], [], []>} : vector<8x256xf32>, vector<256x64xf32>, vector<8x64xf32> -> vector<8x64xf32>
    %396 = arith.addf %351, %395 : vector<8x64xf32>
    %c1_190 = arith.constant 1 : index
    %c0_191 = arith.constant 0 : index
    %c0_192 = arith.constant 0 : index
    %397 = vector.load %arg23[%c1_190, %c0_191, %c0_192] : memref<2x1x64xf32, #tpu.memory_space<vmem>>, vector<1x1x64xf32>
    %398 = vector.shape_cast %397 : vector<1x1x64xf32> to vector<1x64xf32>
    %399 = vector.broadcast %398 : vector<1x64xf32> to vector<8x64xf32>
    %400 = arith.addf %396, %399 : vector<8x64xf32>
    %c0_193 = arith.constant 0 : index
    %c0_194 = arith.constant 0 : index
    %401 = vector.load %arg24[%c0_193, %c0_194] : memref<1x64xf32, #tpu.memory_space<vmem>>, vector<1x64xf32>
    %c0_195 = arith.constant 0 : index
    %c0_196 = arith.constant 0 : index
    %402 = vector.load %arg25[%c0_195, %c0_196] : memref<1x64xf32, #tpu.memory_space<vmem>>, vector<1x64xf32>
    %cst_197 = arith.constant dense<0.000000e+00> : vector<8xf32>
    %403 = vector.multi_reduction <add>, %400, %cst_197 [1] : vector<8x64xf32> to vector<8xf32>
    %404 = vector.shape_cast %403 : vector<8xf32> to vector<8x1xf32>
    %cst_198 = arith.constant 6.400000e+01 : f32
    %405 = vector.broadcast %cst_198 : f32 to vector<8x1xf32>
    %406 = arith.divf %404, %405 : vector<8x1xf32>
    %407 = vector.broadcast %406 : vector<8x1xf32> to vector<8x64xf32>
    %408 = arith.subf %400, %407 : vector<8x64xf32>
    %409 = arith.mulf %408, %408 : vector<8x64xf32>
    %cst_199 = arith.constant dense<0.000000e+00> : vector<8xf32>
    %410 = vector.multi_reduction <add>, %409, %cst_199 [1] : vector<8x64xf32> to vector<8xf32>
    %411 = vector.shape_cast %410 : vector<8xf32> to vector<8x1xf32>
    %cst_200 = arith.constant 6.400000e+01 : f32
    %412 = vector.broadcast %cst_200 : f32 to vector<8x1xf32>
    %413 = arith.divf %411, %412 : vector<8x1xf32>
    %414 = vector.broadcast %406 : vector<8x1xf32> to vector<8x64xf32>
    %415 = arith.subf %400, %414 : vector<8x64xf32>
    %cst_201 = arith.constant 9.99999974E-6 : f32
    %416 = vector.broadcast %cst_201 : f32 to vector<8x1xf32>
    %417 = arith.addf %413, %416 : vector<8x1xf32>
    %418 = math.rsqrt %417 : vector<8x1xf32>
    %419 = vector.broadcast %418 : vector<8x1xf32> to vector<8x64xf32>
    %420 = arith.mulf %415, %419 : vector<8x64xf32>
    %421 = vector.broadcast %401 : vector<1x64xf32> to vector<8x64xf32>
    %422 = arith.mulf %420, %421 : vector<8x64xf32>
    %423 = vector.broadcast %402 : vector<1x64xf32> to vector<8x64xf32>
    %424 = arith.addf %422, %423 : vector<8x64xf32>
    %c0_202 = arith.constant 0 : index
    %c0_203 = arith.constant 0 : index
    %425 = vector.load %arg2[%c0_202, %c0_203] : memref<1x8xf32, #tpu.memory_space<vmem>>, vector<1x8xf32>
    %cst_204 = arith.constant dense<0.000000e+00> : vector<1x64xf32>
    %426 = tpu.matmul %425, %424, %cst_204 {dimension_numbers = #tpu.dot_dimension_numbers<[1], [0], [0], [1], [0, 0, 1, 1], [], []>} : vector<1x8xf32>, vector<8x64xf32>, vector<1x64xf32> -> vector<1x64xf32>
    %c0_205 = arith.constant 0 : index
    %c0_206 = arith.constant 0 : index
    %427 = vector.load %arg26[%c0_205, %c0_206] : memref<64x64xf32, #tpu.memory_space<vmem>>, vector<64x64xf32>
    %cst_207 = arith.constant dense<0.000000e+00> : vector<1x64xf32>
    %428 = tpu.matmul %426, %427, %cst_207 {dimension_numbers = #tpu.dot_dimension_numbers<[1], [0], [0], [1], [0, 0, 1, 1], [], []>} : vector<1x64xf32>, vector<64x64xf32>, vector<1x64xf32> -> vector<1x64xf32>
    %429 = arith.mulf %428, %428 : vector<1x64xf32>
    %cst_208 = arith.constant dense<0.000000e+00> : vector<1xf32>
    %430 = vector.multi_reduction <add>, %429, %cst_208 [1] : vector<1x64xf32> to vector<1xf32>
    %431 = vector.shape_cast %430 : vector<1xf32> to vector<1x1xf32>
    %cst_209 = arith.constant 9.99999996E-13 : f32
    %432 = vector.broadcast %cst_209 : f32 to vector<1x1xf32>
    %433 = arith.addf %431, %432 : vector<1x1xf32>
    %434 = math.rsqrt %433 : vector<1x1xf32>
    %435 = vector.broadcast %434 : vector<1x1xf32> to vector<1x64xf32>
    %436 = arith.mulf %428, %435 : vector<1x64xf32>
    %c0_210 = arith.constant 0 : index
    %c0_211 = arith.constant 0 : index
    %437 = vector.load %arg27[%c0_210, %c0_211] : memref<128x64xf32, #tpu.memory_space<vmem>>, vector<128x64xf32>
    %438 = vector.extract_strided_slice %437 {offsets = [0, 0], sizes = [64, 64], strides = [1, 1]} : vector<128x64xf32> to vector<64x64xf32>
    %cst_212 = arith.constant dense<0.000000e+00> : vector<1x64xf32>
    %439 = tpu.matmul %436, %438, %cst_212 {dimension_numbers = #tpu.dot_dimension_numbers<[1], [0], [0], [1], [0, 0, 1, 1], [], []>} : vector<1x64xf32>, vector<64x64xf32>, vector<1x64xf32> -> vector<1x64xf32>
    %440 = vector.extract_strided_slice %437 {offsets = [64, 0], sizes = [64, 64], strides = [1, 1]} : vector<128x64xf32> to vector<64x64xf32>
    %cst_213 = arith.constant dense<0.000000e+00> : vector<1x64xf32>
    %441 = tpu.matmul %13, %440, %cst_213 {dimension_numbers = #tpu.dot_dimension_numbers<[1], [0], [0], [1], [0, 0, 1, 1], [], []>} : vector<1x64xf32>, vector<64x64xf32>, vector<1x64xf32> -> vector<1x64xf32>
    %442 = arith.addf %439, %441 : vector<1x64xf32>
    %c0_214 = arith.constant 0 : index
    %c0_215 = arith.constant 0 : index
    %443 = vector.load %arg28[%c0_214, %c0_215] : memref<1x64xf32, #tpu.memory_space<vmem>>, vector<1x64xf32>
    %444 = arith.addf %442, %443 : vector<1x64xf32>
    %cst_216 = arith.constant 0.000000e+00 : f32
    %445 = vector.broadcast %cst_216 : f32 to vector<1x64xf32>
    %446 = arith.cmpf ogt, %444, %445 : vector<1x64xf32>
    %cst_217 = arith.constant 0.00999999977 : f32
    %447 = vector.broadcast %cst_217 : f32 to vector<1x64xf32>
    %448 = arith.mulf %447, %444 : vector<1x64xf32>
    %449 = arith.select %446, %444, %448 : vector<1x64xi1>, vector<1x64xf32>
    %c0_218 = arith.constant 0 : index
    %c0_219 = arith.constant 0 : index
    %450 = vector.load %arg29[%c0_218, %c0_219] : memref<64x5xf32, #tpu.memory_space<vmem>>, vector<64x5xf32>
    %cst_220 = arith.constant dense<0.000000e+00> : vector<1x5xf32>
    %451 = tpu.matmul %449, %450, %cst_220 {dimension_numbers = #tpu.dot_dimension_numbers<[1], [0], [0], [1], [0, 0, 1, 1], [], []>} : vector<1x64xf32>, vector<64x5xf32>, vector<1x5xf32> -> vector<1x5xf32>
    %c0_221 = arith.constant 0 : index
    %c0_222 = arith.constant 0 : index
    %452 = vector.load %arg30[%c0_221, %c0_222] : memref<1x5xf32, #tpu.memory_space<vmem>>, vector<1x5xf32>
    %453 = arith.addf %451, %452 : vector<1x5xf32>
    %c0_223 = arith.constant 0 : index
    %c0_224 = arith.constant 0 : index
    %c0_225 = arith.constant 0 : index
    %454 = vector.load %arg31[%c0_223, %c0_224, %c0_225] : memref<1x1x5xf32, #tpu.memory_space<vmem>>, vector<1x1x5xf32>
    %455 = vector.shape_cast %454 : vector<1x1x5xf32> to vector<1x5xf32>
    %456 = vector.shape_cast %453 : vector<1x5xf32> to vector<1x1x5xf32>
    tpu.vector_store %arg31[%c0_223, %c0_224, %c0_225], %456 {strides = array<i32>} : memref<1x1x5xf32, #tpu.memory_space<vmem>>, vector<1x1x5xf32>,
    return
  }
  func.func @transform_0(%arg0: i32) -> (i32, i32, i32) {
    %c0_i32 = arith.constant 0 : i32
    %c0_i32_0 = arith.constant 0 : i32
    %c0_i32_1 = arith.constant 0 : i32
    return %arg0, %c0_i32, %c0_i32_0 : i32, i32, i32
  }
  func.func @transform_1(%arg0: i32) -> (i32, i32) {
    %c0_i32 = arith.constant 0 : i32
    %c0_i32_0 = arith.constant 0 : i32
    %c0_i32_1 = arith.constant 0 : i32
    return %c0_i32, %c0_i32_0 : i32, i32
  }
  func.func @transform_2(%arg0: i32) -> (i32, i32) {
    %c0_i32 = arith.constant 0 : i32
    %c0_i32_0 = arith.constant 0 : i32
    %c0_i32_1 = arith.constant 0 : i32
    return %c0_i32, %c0_i32_0 : i32, i32
  }
  func.func @transform_3(%arg0: i32) -> (i32, i32) {
    %c0_i32 = arith.constant 0 : i32
    %c0_i32_0 = arith.constant 0 : i32
    %c0_i32_1 = arith.constant 0 : i32
    return %c0_i32, %c0_i32_0 : i32, i32
  }
  func.func @transform_4(%arg0: i32) -> (i32, i32) {
    %c0_i32 = arith.constant 0 : i32
    %c0_i32_0 = arith.constant 0 : i32
    %c0_i32_1 = arith.constant 0 : i32
    return %c0_i32, %c0_i32_0 : i32, i32
  }
  func.func @transform_5(%arg0: i32) -> (i32, i32) {
    %c0_i32 = arith.constant 0 : i32
    %c0_i32_0 = arith.constant 0 : i32
    %c0_i32_1 = arith.constant 0 : i32
    return %c0_i32, %c0_i32_0 : i32, i32
  }
  func.func @transform_6(%arg0: i32) -> (i32, i32) {
    %c0_i32 = arith.constant 0 : i32
    %c0_i32_0 = arith.constant 0 : i32
    %c0_i32_1 = arith.constant 0 : i32
    return %c0_i32, %c0_i32_0 : i32, i32
  }
  func.func @transform_7(%arg0: i32) -> (i32, i32) {
    %c0_i32 = arith.constant 0 : i32
    %c0_i32_0 = arith.constant 0 : i32
    %c0_i32_1 = arith.constant 0 : i32
    return %c0_i32, %c0_i32_0 : i32, i32
  }
  func.func @transform_8(%arg0: i32) -> (i32, i32) {
    %c0_i32 = arith.constant 0 : i32
    %c0_i32_0 = arith.constant 0 : i32
    %c0_i32_1 = arith.constant 0 : i32
    return %c0_i32, %c0_i32_0 : i32, i32
  }
  func.func @transform_9(%arg0: i32) -> (i32, i32) {
    %c0_i32 = arith.constant 0 : i32
    %c0_i32_0 = arith.constant 0 : i32
    %c0_i32_1 = arith.constant 0 : i32
    return %c0_i32, %c0_i32_0 : i32, i32
  }
  func.func @transform_10(%arg0: i32) -> (i32, i32) {
    %c0_i32 = arith.constant 0 : i32
    %c0_i32_0 = arith.constant 0 : i32
    %c0_i32_1 = arith.constant 0 : i32
    return %c0_i32, %c0_i32_0 : i32, i32
  }
  func.func @transform_11(%arg0: i32) -> (i32, i32, i32) {
    %c0_i32 = arith.constant 0 : i32
    %c0_i32_0 = arith.constant 0 : i32
    %c0_i32_1 = arith.constant 0 : i32
    %c0_i32_2 = arith.constant 0 : i32
    return %c0_i32, %c0_i32_0, %c0_i32_1 : i32, i32, i32
  }
  func.func @transform_12(%arg0: i32) -> (i32, i32, i32) {
    %c0_i32 = arith.constant 0 : i32
    %c0_i32_0 = arith.constant 0 : i32
    %c0_i32_1 = arith.constant 0 : i32
    %c0_i32_2 = arith.constant 0 : i32
    return %c0_i32, %c0_i32_0, %c0_i32_1 : i32, i32, i32
  }
  func.func @transform_13(%arg0: i32) -> (i32, i32, i32) {
    %c0_i32 = arith.constant 0 : i32
    %c0_i32_0 = arith.constant 0 : i32
    %c0_i32_1 = arith.constant 0 : i32
    %c0_i32_2 = arith.constant 0 : i32
    return %c0_i32, %c0_i32_0, %c0_i32_1 : i32, i32, i32
  }
  func.func @transform_14(%arg0: i32) -> (i32, i32, i32) {
    %c0_i32 = arith.constant 0 : i32
    %c0_i32_0 = arith.constant 0 : i32
    %c0_i32_1 = arith.constant 0 : i32
    %c0_i32_2 = arith.constant 0 : i32
    return %c0_i32, %c0_i32_0, %c0_i32_1 : i32, i32, i32
  }
  func.func @transform_15(%arg0: i32) -> (i32, i32, i32) {
    %c0_i32 = arith.constant 0 : i32
    %c0_i32_0 = arith.constant 0 : i32
    %c0_i32_1 = arith.constant 0 : i32
    %c0_i32_2 = arith.constant 0 : i32
    return %c0_i32, %c0_i32_0, %c0_i32_1 : i32, i32, i32
  }
  func.func @transform_16(%arg0: i32) -> (i32, i32, i32) {
    %c0_i32 = arith.constant 0 : i32
    %c0_i32_0 = arith.constant 0 : i32
    %c0_i32_1 = arith.constant 0 : i32
    %c0_i32_2 = arith.constant 0 : i32
    return %c0_i32, %c0_i32_0, %c0_i32_1 : i32, i32, i32
  }
  func.func @transform_17(%arg0: i32) -> (i32, i32, i32) {
    %c0_i32 = arith.constant 0 : i32
    %c0_i32_0 = arith.constant 0 : i32
    %c0_i32_1 = arith.constant 0 : i32
    %c0_i32_2 = arith.constant 0 : i32
    return %c0_i32, %c0_i32_0, %c0_i32_1 : i32, i32, i32
  }
  func.func @transform_18(%arg0: i32) -> (i32, i32, i32) {
    %c0_i32 = arith.constant 0 : i32
    %c0_i32_0 = arith.constant 0 : i32
    %c0_i32_1 = arith.constant 0 : i32
    %c0_i32_2 = arith.constant 0 : i32
    return %c0_i32, %c0_i32_0, %c0_i32_1 : i32, i32, i32
  }
  func.func @transform_19(%arg0: i32) -> (i32, i32, i32) {
    %c0_i32 = arith.constant 0 : i32
    %c0_i32_0 = arith.constant 0 : i32
    %c0_i32_1 = arith.constant 0 : i32
    %c0_i32_2 = arith.constant 0 : i32
    return %c0_i32, %c0_i32_0, %c0_i32_1 : i32, i32, i32
  }
  func.func @transform_20(%arg0: i32) -> (i32, i32, i32) {
    %c0_i32 = arith.constant 0 : i32
    %c0_i32_0 = arith.constant 0 : i32
    %c0_i32_1 = arith.constant 0 : i32
    %c0_i32_2 = arith.constant 0 : i32
    return %c0_i32, %c0_i32_0, %c0_i32_1 : i32, i32, i32
  }
  func.func @transform_21(%arg0: i32) -> (i32, i32, i32) {
    %c0_i32 = arith.constant 0 : i32
    %c0_i32_0 = arith.constant 0 : i32
    %c0_i32_1 = arith.constant 0 : i32
    %c0_i32_2 = arith.constant 0 : i32
    return %c0_i32, %c0_i32_0, %c0_i32_1 : i32, i32, i32
  }
  func.func @transform_22(%arg0: i32) -> (i32, i32, i32) {
    %c0_i32 = arith.constant 0 : i32
    %c0_i32_0 = arith.constant 0 : i32
    %c0_i32_1 = arith.constant 0 : i32
    %c0_i32_2 = arith.constant 0 : i32
    return %c0_i32, %c0_i32_0, %c0_i32_1 : i32, i32, i32
  }
  func.func @transform_23(%arg0: i32) -> (i32, i32) {
    %c0_i32 = arith.constant 0 : i32
    %c0_i32_0 = arith.constant 0 : i32
    %c0_i32_1 = arith.constant 0 : i32
    return %c0_i32, %c0_i32_0 : i32, i32
  }
  func.func @transform_24(%arg0: i32) -> (i32, i32) {
    %c0_i32 = arith.constant 0 : i32
    %c0_i32_0 = arith.constant 0 : i32
    %c0_i32_1 = arith.constant 0 : i32
    return %c0_i32, %c0_i32_0 : i32, i32
  }
  func.func @transform_25(%arg0: i32) -> (i32, i32) {
    %c0_i32 = arith.constant 0 : i32
    %c0_i32_0 = arith.constant 0 : i32
    %c0_i32_1 = arith.constant 0 : i32
    return %c0_i32, %c0_i32_0 : i32, i32
  }
  func.func @transform_26(%arg0: i32) -> (i32, i32) {
    %c0_i32 = arith.constant 0 : i32
    %c0_i32_0 = arith.constant 0 : i32
    %c0_i32_1 = arith.constant 0 : i32
    return %c0_i32, %c0_i32_0 : i32, i32
  }
  func.func @transform_27(%arg0: i32) -> (i32, i32) {
    %c0_i32 = arith.constant 0 : i32
    %c0_i32_0 = arith.constant 0 : i32
    %c0_i32_1 = arith.constant 0 : i32
    return %c0_i32, %c0_i32_0 : i32, i32
  }
  func.func @transform_28(%arg0: i32) -> (i32, i32) {
    %c0_i32 = arith.constant 0 : i32
    %c0_i32_0 = arith.constant 0 : i32
    %c0_i32_1 = arith.constant 0 : i32
    return %c0_i32, %c0_i32_0 : i32, i32
  }
  func.func @transform_29(%arg0: i32) -> (i32, i32) {
    %c0_i32 = arith.constant 0 : i32
    %c0_i32_0 = arith.constant 0 : i32
    %c0_i32_1 = arith.constant 0 : i32
    return %c0_i32, %c0_i32_0 : i32, i32
  }
  func.func @transform_30(%arg0: i32) -> (i32, i32, i32) {
    %c0_i32 = arith.constant 0 : i32
    %c0_i32_0 = arith.constant 0 : i32
    %c0_i32_1 = arith.constant 0 : i32
    return %arg0, %c0_i32, %c0_i32_0 : i32, i32, i32
  }
}

</mosaic_0001>

<llo_original>
// kernel: custom_clip_v2_forward.1
$region0: #{custom_clip_v2_forward.1}
  #allocation0 [shape = 'u32[]', space=smem, size = 0x4, offset = 0x4, fixed_abs, tag = 'smem constant byte address 0x4 - core index']
  #allocation1 [shape = 'u32[144,128]{1,0:T(1,128)}', space=vmem, size = 0x12000, scoped, tag = 'internal scratch']
  %s0 = inlined_call_operand.smem [shape: u32[31], index: -1, kind: input, shape index: {}]
  %s1 = sld [smem:[%s0]]
  %s2 = scalar_lea.smem %s0, 1
  %s3 = sld [smem:[%s2]]
  %s4 = scalar_lea.smem %s0, 2
  %s5 = sld [smem:[%s4]]
  %s6 = scalar_lea.smem %s0, 3
  %s7 = sld [smem:[%s6]]
  %s8 = scalar_lea.smem %s0, 4
  %s9 = sld [smem:[%s8]]
  %s10 = scalar_lea.smem %s0, 5
  %s11 = sld [smem:[%s10]]
  %s12 = scalar_lea.smem %s0, 6
  %s13 = sld [smem:[%s12]]
  %s14 = scalar_lea.smem %s0, 7
  %s15 = sld [smem:[%s14]]
  %s16 = scalar_lea.smem %s0, 8
  %s17 = sld [smem:[%s16]]
  %s18 = scalar_lea.smem %s0, 9
  %s19 = sld [smem:[%s18]]
  %s20 = scalar_lea.smem %s0, 10
  %s21 = sld [smem:[%s20]]
  %s22 = scalar_lea.smem %s0, 11
  %s23 = sld [smem:[%s22]]
  %s24 = scalar_lea.smem %s0, 12
  %s25 = sld [smem:[%s24]]
  %s26 = scalar_lea.smem %s0, 13
  %s27 = sld [smem:[%s26]]
  %s28 = scalar_lea.smem %s0, 14
  %s29 = sld [smem:[%s28]]
  %s30 = scalar_lea.smem %s0, 15
  %s31 = sld [smem:[%s30]]
  %s32 = scalar_lea.smem %s0, 16
  %s33 = sld [smem:[%s32]]
  %s34 = scalar_lea.smem %s0, 17
  %s35 = sld [smem:[%s34]]
  %s36 = scalar_lea.smem %s0, 18
  %s37 = sld [smem:[%s36]]
  %s38 = scalar_lea.smem %s0, 19
  %s39 = sld [smem:[%s38]]
  %s40 = scalar_lea.smem %s0, 20
  %s41 = sld [smem:[%s40]]
  %s42 = scalar_lea.smem %s0, 21
  %s43 = sld [smem:[%s42]]
  %s44 = scalar_lea.smem %s0, 22
  %s45 = sld [smem:[%s44]]
  %s46 = scalar_lea.smem %s0, 23
  %s47 = sld [smem:[%s46]]
  %s48 = scalar_lea.smem %s0, 24
  %s49 = sld [smem:[%s48]]
  %s50 = scalar_lea.smem %s0, 25
  %s51 = sld [smem:[%s50]]
  %s52 = scalar_lea.smem %s0, 26
  %s53 = sld [smem:[%s52]]
  %s54 = scalar_lea.smem %s0, 27
  %s55 = sld [smem:[%s54]]
  %s56 = scalar_lea.smem %s0, 28
  %s57 = sld [smem:[%s56]]
  %s58 = scalar_lea.smem %s0, 29
  %s59 = sld [smem:[%s58]]
  %s60 = scalar_lea.smem %s0, 30
  %s61 = sld [smem:[%s60]]
  %s62 = sld [smem:[#allocation0]]
  $region153: #{custom_clip_v2_forward.1} parent=0
    _
  %s64 = ssub.s32 1, %s62
  %s65 = scalar_select 0, %s64, %s62
  $region1: #{custom_clip_v2_forward.1} parent=0
    #allocation2 [shape = 'u8[1024]{0}', space=vmem, size = 0x400, scoped, tag = 'output window, operand 0']
    #allocation3 [shape = 's32[2]{0}', space=sflag, size = 0x8, scoped, tag = 'scoped memory for custom_clip_v2_forward.1']
    %66 = vsyncpa [#allocation3], 0
    %s67 = scalar_lea.sflag [#allocation3], 1
    %68 = vsyncpa %s67, 0
    loop: start=0, step=1, limit=4
    $region2: #{custom_clip_v2_forward.1} parent=1 // loop_pre_header
      _
    $region3: #{custom_clip_v2_forward.1} parent=1 // loop_header
      %s70 = sphi 0, %s74
      %p71 = scmp.ge.s32.totalorder %s70, 4
      %s80 = sphi 0, %s82
      %s83 = sphi 0, %s80
      %s84 = sphi 0, %s83
      %s100 = sphi 0, %s84
      %s104 = sphi 0, %s104
      %s106 = sphi 0, %s104
      %s107 = sphi 0, %s106
      %s121 = sphi 0, %s107
      %s125 = sphi 0, %s125
      %s127 = sphi 0, %s125
      %s128 = sphi 0, %s127
      %s142 = sphi 0, %s128
      %s146 = sphi 0, %s146
      %s148 = sphi 0, %s146
      %s149 = sphi 0, %s148
      %s163 = sphi 0, %s149
      %s167 = sphi 0, %s167
      %s169 = sphi 0, %s167
      %s170 = sphi 0, %s169
      %s184 = sphi 0, %s170
      %s188 = sphi 0, %s188
      %s190 = sphi 0, %s188
      %s191 = sphi 0, %s190
      %s205 = sphi 0, %s191
      %s209 = sphi 0, %s209
      %s211 = sphi 0, %s209
      %s212 = sphi 0, %s211
      %s226 = sphi 0, %s212
      %s230 = sphi 0, %s230
      %s232 = sphi 0, %s230
      %s233 = sphi 0, %s232
      %s247 = sphi 0, %s233
      %s251 = sphi 0, %s251
      %s253 = sphi 0, %s251
      %s254 = sphi 0, %s253
      %s268 = sphi 0, %s254
      %s272 = sphi 0, %s272
      %s274 = sphi 0, %s272
      %s275 = sphi 0, %s274
      %s289 = sphi 0, %s275
      %s293 = sphi 0, %s293
      %s295 = sphi 0, %s293
      %s296 = sphi 0, %s295
      %s310 = sphi 0, %s296
      %s314 = sphi 0, %s314
      %s316 = sphi 0, %s314
      %s317 = sphi 0, %s316
      %s331 = sphi 0, %s317
      %s335 = sphi 0, %s335
      %s337 = sphi 0, %s335
      %s338 = sphi 0, %s337
      %s352 = sphi 0, %s338
      %s356 = sphi 0, %s356
      %s358 = sphi 0, %s356
      %s359 = sphi 0, %s358
      %s373 = sphi 0, %s359
      %s377 = sphi 0, %s377
      %s379 = sphi 0, %s377
      %s380 = sphi 0, %s379
      %s394 = sphi 0, %s380
      %s398 = sphi 0, %s398
      %s400 = sphi 0, %s398
      %s401 = sphi 0, %s400
      %s415 = sphi 0, %s401
      %s419 = sphi 0, %s419
      %s421 = sphi 0, %s419
      %s422 = sphi 0, %s421
      %s436 = sphi 0, %s422
      %s440 = sphi 0, %s440
      %s442 = sphi 0, %s440
      %s443 = sphi 0, %s442
      %s457 = sphi 0, %s443
      %s461 = sphi 0, %s461
      %s463 = sphi 0, %s461
      %s464 = sphi 0, %s463
      %s478 = sphi 0, %s464
      %s482 = sphi 0, %s482
      %s484 = sphi 0, %s482
      %s485 = sphi 0, %s484
      %s499 = sphi 0, %s485
      %s503 = sphi 0, %s503
      %s505 = sphi 0, %s503
      %s506 = sphi 0, %s505
      %s520 = sphi 0, %s506
      %s524 = sphi 0, %s524
      %s526 = sphi 0, %s524
      %s527 = sphi 0, %s526
      %s541 = sphi 0, %s527
      %s545 = sphi 0, %s545
      %s547 = sphi 0, %s545
      %s548 = sphi 0, %s547
      %s562 = sphi 0, %s548
      %s566 = sphi 0, %s566
      %s568 = sphi 0, %s566
      %s569 = sphi 0, %s568
      %s583 = sphi 0, %s569
      %s587 = sphi 0, %s587
      %s589 = sphi 0, %s587
      %s590 = sphi 0, %s589
      %s604 = sphi 0, %s590
      %s608 = sphi 0, %s608
      %s610 = sphi 0, %s608
      %s611 = sphi 0, %s610
      %s625 = sphi 0, %s611
      %s629 = sphi 0, %s629
      %s631 = sphi 0, %s629
      %s632 = sphi 0, %s631
      %s646 = sphi 0, %s632
      %s650 = sphi 0, %s650
      %s652 = sphi 0, %s650
      %s653 = sphi 0, %s652
      %s667 = sphi 0, %s653
      %s671 = sphi 0, %s671
      %s673 = sphi 0, %s671
      %s674 = sphi 0, %s673
      %s688 = sphi 0, %s674
      %s692 = sphi 0, %s692
      %s694 = sphi 0, %s692
      %s695 = sphi 0, %s694
      %s709 = sphi 0, %s695
      %s715 = sphi 0, %s717
      %s718 = sphi 0, %s715
      %s719 = sphi 0, %s718
      %s735 = sphi 0, %s719
    $region4: #{custom_clip_v2_forward.1} parent=1 // loop_header_branch
      %73 = sbr.rel (%p71) target = $region8
    $region5: #{custom_clip_v2_forward.1} parent=1 // loop_body
      %s75 = ssub.s32 %s70, 1
      %s76 = ssub.s32 %s70, 2
      %s77 = sadd.s32 %s70, 1
      %s78 = ssub.s32 %s70, %s77
      %p79 = scmp.eq.s32.totalorder %s78, 0
      %s81 = sadd.s32 %s80, 1
      %s82 = scalar_select %p79, %s80, %s81
      %p85 = pneg %p79
      %p86 = scmp.eq.s32.totalorder %s70, 1
      %p87 = por %p85, %p86
      %p88 = scmp.ne.s32.totalorder %s80, %s83
      %p89 = scmp.eq.s32.totalorder %s70, 0
      %p90 = por %p88, %p89
      %p91 = scmp.ne.s32.totalorder %s80, %s83
      %p92 = scmp.eq.s32.totalorder %s75, 1
      %p93 = por %p91, %p92
      %p94 = scmp.ne.s32.totalorder %s83, %s84
      %p95 = scmp.eq.s32.totalorder %s75, 0
      %p96 = por %p94, %p95
      %p97 = scmp.ne.s32.totalorder %s83, %s84
      %p98 = scmp.eq.s32.totalorder %s76, 1
      %p99 = por %p97, %p98
      %p101 = scmp.ne.s32.totalorder %s84, %s100
      %p102 = scmp.eq.s32.totalorder %s76, 0
      %p103 = por %p101, %p102
      %s105 = sadd.s32 %s104, 1
      %p108 = scmp.eq.s32.totalorder %s70, 1
      %p109 = scmp.ne.s32.totalorder %s104, %s106
      %p110 = scmp.eq.s32.totalorder %s70, 0
      %p111 = por %p109, %p110
      %p112 = scmp.ne.s32.totalorder %s104, %s106
      %p113 = scmp.eq.s32.totalorder %s75, 1
      %p114 = por %p112, %p113
      %p115 = scmp.ne.s32.totalorder %s106, %s107
      %p116 = scmp.eq.s32.totalorder %s75, 0
      %p117 = por %p115, %p116
      %p118 = scmp.ne.s32.totalorder %s106, %s107
      %p119 = scmp.eq.s32.totalorder %s76, 1
      %p120 = por %p118, %p119
      %p122 = scmp.ne.s32.totalorder %s107, %s121
      %p123 = scmp.eq.s32.totalorder %s76, 0
      %p124 = por %p122, %p123
      %s126 = sadd.s32 %s125, 1
      %p129 = scmp.eq.s32.totalorder %s70, 1
      %p130 = scmp.ne.s32.totalorder %s125, %s127
      %p131 = scmp.eq.s32.totalorder %s70, 0
      %p132 = por %p130, %p131
      %p133 = scmp.ne.s32.totalorder %s125, %s127
      %p134 = scmp.eq.s32.totalorder %s75, 1
      %p135 = por %p133, %p134
      %p136 = scmp.ne.s32.totalorder %s127, %s128
      %p137 = scmp.eq.s32.totalorder %s75, 0
      %p138 = por %p136, %p137
      %p139 = scmp.ne.s32.totalorder %s127, %s128
      %p140 = scmp.eq.s32.totalorder %s76, 1
      %p141 = por %p139, %p140
      %p143 = scmp.ne.s32.totalorder %s128, %s142
      %p144 = scmp.eq.s32.totalorder %s76, 0
      %p145 = por %p143, %p144
      %s147 = sadd.s32 %s146, 1
      %p150 = scmp.eq.s32.totalorder %s70, 1
      %p151 = scmp.ne.s32.totalorder %s146, %s148
      %p152 = scmp.eq.s32.totalorder %s70, 0
      %p153 = por %p151, %p152
      %p154 = scmp.ne.s32.totalorder %s146, %s148
      %p155 = scmp.eq.s32.totalorder %s75, 1
      %p156 = por %p154, %p155
      %p157 = scmp.ne.s32.totalorder %s148, %s149
      %p158 = scmp.eq.s32.totalorder %s75, 0
      %p159 = por %p157, %p158
      %p160 = scmp.ne.s32.totalorder %s148, %s149
      %p161 = scmp.eq.s32.totalorder %s76, 1
      %p162 = por %p160, %p161
      %p164 = scmp.ne.s32.totalorder %s149, %s163
      %p165 = scmp.eq.s32.totalorder %s76, 0
      %p166 = por %p164, %p165
      %s168 = sadd.s32 %s167, 1
      %p171 = scmp.eq.s32.totalorder %s70, 1
      %p172 = scmp.ne.s32.totalorder %s167, %s169
      %p173 = scmp.eq.s32.totalorder %s70, 0
      %p174 = por %p172, %p173
      %p175 = scmp.ne.s32.totalorder %s167, %s169
      %p176 = scmp.eq.s32.totalorder %s75, 1
      %p177 = por %p175, %p176
      %p178 = scmp.ne.s32.totalorder %s169, %s170
      %p179 = scmp.eq.s32.totalorder %s75, 0
      %p180 = por %p178, %p179
      %p181 = scmp.ne.s32.totalorder %s169, %s170
      %p182 = scmp.eq.s32.totalorder %s76, 1
      %p183 = por %p181, %p182
      %p185 = scmp.ne.s32.totalorder %s170, %s184
      %p186 = scmp.eq.s32.totalorder %s76, 0
      %p187 = por %p185, %p186
      %s189 = sadd.s32 %s188, 1
      %p192 = scmp.eq.s32.totalorder %s70, 1
      %p193 = scmp.ne.s32.totalorder %s188, %s190
      %p194 = scmp.eq.s32.totalorder %s70, 0
      %p195 = por %p193, %p194
      %p196 = scmp.ne.s32.totalorder %s188, %s190
      %p197 = scmp.eq.s32.totalorder %s75, 1
      %p198 = por %p196, %p197
      %p199 = scmp.ne.s32.totalorder %s190, %s191
      %p200 = scmp.eq.s32.totalorder %s75, 0
      %p201 = por %p199, %p200
      %p202 = scmp.ne.s32.totalorder %s190, %s191
      %p203 = scmp.eq.s32.totalorder %s76, 1
      %p204 = por %p202, %p203
      %p206 = scmp.ne.s32.totalorder %s191, %s205
      %p207 = scmp.eq.s32.totalorder %s76, 0
      %p208 = por %p206, %p207
      %s210 = sadd.s32 %s209, 1
      %p213 = scmp.eq.s32.totalorder %s70, 1
      %p214 = scmp.ne.s32.totalorder %s209, %s211
      %p215 = scmp.eq.s32.totalorder %s70, 0
      %p216 = por %p214, %p215
      %p217 = scmp.ne.s32.totalorder %s209, %s211
      %p218 = scmp.eq.s32.totalorder %s75, 1
      %p219 = por %p217, %p218
      %p220 = scmp.ne.s32.totalorder %s211, %s212
      %p221 = scmp.eq.s32.totalorder %s75, 0
      %p222 = por %p220, %p221
      %p223 = scmp.ne.s32.totalorder %s211, %s212
      %p224 = scmp.eq.s32.totalorder %s76, 1
      %p225 = por %p223, %p224
      %p227 = scmp.ne.s32.totalorder %s212, %s226
      %p228 = scmp.eq.s32.totalorder %s76, 0
      %p229 = por %p227, %p228
      %s231 = sadd.s32 %s230, 1
      %p234 = scmp.eq.s32.totalorder %s70, 1
      %p235 = scmp.ne.s32.totalorder %s230, %s232
      %p236 = scmp.eq.s32.totalorder %s70, 0
      %p237 = por %p235, %p236
      %p238 = scmp.ne.s32.totalorder %s230, %s232
      %p239 = scmp.eq.s32.totalorder %s75, 1
      %p240 = por %p238, %p239
      %p241 = scmp.ne.s32.totalorder %s232, %s233
      %p242 = scmp.eq.s32.totalorder %s75, 0
      %p243 = por %p241, %p242
      %p244 = scmp.ne.s32.totalorder %s232, %s233
      %p245 = scmp.eq.s32.totalorder %s76, 1
      %p246 = por %p244, %p245
      %p248 = scmp.ne.s32.totalorder %s233, %s247
      %p249 = scmp.eq.s32.totalorder %s76, 0
      %p250 = por %p248, %p249
      %s252 = sadd.s32 %s251, 1
      %p255 = scmp.eq.s32.totalorder %s70, 1
      %p256 = scmp.ne.s32.totalorder %s251, %s253
      %p257 = scmp.eq.s32.totalorder %s70, 0
      %p258 = por %p256, %p257
      %p259 = scmp.ne.s32.totalorder %s251, %s253
      %p260 = scmp.eq.s32.totalorder %s75, 1
      %p261 = por %p259, %p260
      %p262 = scmp.ne.s32.totalorder %s253, %s254
      %p263 = scmp.eq.s32.totalorder %s75, 0
      %p264 = por %p262, %p263
      %p265 = scmp.ne.s32.totalorder %s253, %s254
      %p266 = scmp.eq.s32.totalorder %s76, 1
      %p267 = por %p265, %p266
      %p269 = scmp.ne.s32.totalorder %s254, %s268
      %p270 = scmp.eq.s32.totalorder %s76, 0
      %p271 = por %p269, %p270
      %s273 = sadd.s32 %s272, 1
      %p276 = scmp.eq.s32.totalorder %s70, 1
      %p277 = scmp.ne.s32.totalorder %s272, %s274
      %p278 = scmp.eq.s32.totalorder %s70, 0
      %p279 = por %p277, %p278
      %p280 = scmp.ne.s32.totalorder %s272, %s274
      %p281 = scmp.eq.s32.totalorder %s75, 1
      %p282 = por %p280, %p281
      %p283 = scmp.ne.s32.totalorder %s274, %s275
      %p284 = scmp.eq.s32.totalorder %s75, 0
      %p285 = por %p283, %p284
      %p286 = scmp.ne.s32.totalorder %s274, %s275
      %p287 = scmp.eq.s32.totalorder %s76, 1
      %p288 = por %p286, %p287
      %p290 = scmp.ne.s32.totalorder %s275, %s289
      %p291 = scmp.eq.s32.totalorder %s76, 0
      %p292 = por %p290, %p291
      %s294 = sadd.s32 %s293, 1
      %p297 = scmp.eq.s32.totalorder %s70, 1
      %p298 = scmp.ne.s32.totalorder %s293, %s295
      %p299 = scmp.eq.s32.totalorder %s70, 0
      %p300 = por %p298, %p299
      %p301 = scmp.ne.s32.totalorder %s293, %s295
      %p302 = scmp.eq.s32.totalorder %s75, 1
      %p303 = por %p301, %p302
      %p304 = scmp.ne.s32.totalorder %s295, %s296
      %p305 = scmp.eq.s32.totalorder %s75, 0
      %p306 = por %p304, %p305
      %p307 = scmp.ne.s32.totalorder %s295, %s296
      %p308 = scmp.eq.s32.totalorder %s76, 1
      %p309 = por %p307, %p308
      %p311 = scmp.ne.s32.totalorder %s296, %s310
      %p312 = scmp.eq.s32.totalorder %s76, 0
      %p313 = por %p311, %p312
      %s315 = sadd.s32 %s314, 1
      %p318 = scmp.eq.s32.totalorder %s70, 1
      %p319 = scmp.ne.s32.totalorder %s314, %s316
      %p320 = scmp.eq.s32.totalorder %s70, 0
      %p321 = por %p319, %p320
      %p322 = scmp.ne.s32.totalorder %s314, %s316
      %p323 = scmp.eq.s32.totalorder %s75, 1
      %p324 = por %p322, %p323
      %p325 = scmp.ne.s32.totalorder %s316, %s317
      %p326 = scmp.eq.s32.totalorder %s75, 0
      %p327 = por %p325, %p326
      %p328 = scmp.ne.s32.totalorder %s316, %s317
      %p329 = scmp.eq.s32.totalorder %s76, 1
      %p330 = por %p328, %p329
      %p332 = scmp.ne.s32.totalorder %s317, %s331
      %p333 = scmp.eq.s32.totalorder %s76, 0
      %p334 = por %p332, %p333
      %s336 = sadd.s32 %s335, 1
      %p339 = scmp.eq.s32.totalorder %s70, 1
      %p340 = scmp.ne.s32.totalorder %s335, %s337
      %p341 = scmp.eq.s32.totalorder %s70, 0
      %p342 = por %p340, %p341
      %p343 = scmp.ne.s32.totalorder %s335, %s337
      %p344 = scmp.eq.s32.totalorder %s75, 1
      %p345 = por %p343, %p344
      %p346 = scmp.ne.s32.totalorder %s337, %s338
      %p347 = scmp.eq.s32.totalorder %s75, 0
      %p348 = por %p346, %p347
      %p349 = scmp.ne.s32.totalorder %s337, %s338
      %p350 = scmp.eq.s32.totalorder %s76, 1
      %p351 = por %p349, %p350
      %p353 = scmp.ne.s32.totalorder %s338, %s352
      %p354 = scmp.eq.s32.totalorder %s76, 0
      %p355 = por %p353, %p354
      %s357 = sadd.s32 %s356, 1
      %p360 = scmp.eq.s32.totalorder %s70, 1
      %p361 = scmp.ne.s32.totalorder %s356, %s358
      %p362 = scmp.eq.s32.totalorder %s70, 0
      %p363 = por %p361, %p362
      %p364 = scmp.ne.s32.totalorder %s356, %s358
      %p365 = scmp.eq.s32.totalorder %s75, 1
      %p366 = por %p364, %p365
      %p367 = scmp.ne.s32.totalorder %s358, %s359
      %p368 = scmp.eq.s32.totalorder %s75, 0
      %p369 = por %p367, %p368
      %p370 = scmp.ne.s32.totalorder %s358, %s359
      %p371 = scmp.eq.s32.totalorder %s76, 1
      %p372 = por %p370, %p371
      %p374 = scmp.ne.s32.totalorder %s359, %s373
      %p375 = scmp.eq.s32.totalorder %s76, 0
      %p376 = por %p374, %p375
      %s378 = sadd.s32 %s377, 1
      %p381 = scmp.eq.s32.totalorder %s70, 1
      %p382 = scmp.ne.s32.totalorder %s377, %s379
      %p383 = scmp.eq.s32.totalorder %s70, 0
      %p384 = por %p382, %p383
      %p385 = scmp.ne.s32.totalorder %s377, %s379
      %p386 = scmp.eq.s32.totalorder %s75, 1
      %p387 = por %p385, %p386
      %p388 = scmp.ne.s32.totalorder %s379, %s380
      %p389 = scmp.eq.s32.totalorder %s75, 0
      %p390 = por %p388, %p389
      %p391 = scmp.ne.s32.totalorder %s379, %s380
      %p392 = scmp.eq.s32.totalorder %s76, 1
      %p393 = por %p391, %p392
      %p395 = scmp.ne.s32.totalorder %s380, %s394
      %p396 = scmp.eq.s32.totalorder %s76, 0
      %p397 = por %p395, %p396
      %s399 = sadd.s32 %s398, 1
      %p402 = scmp.eq.s32.totalorder %s70, 1
      %p403 = scmp.ne.s32.totalorder %s398, %s400
      %p404 = scmp.eq.s32.totalorder %s70, 0
      %p405 = por %p403, %p404
      %p406 = scmp.ne.s32.totalorder %s398, %s400
      %p407 = scmp.eq.s32.totalorder %s75, 1
      %p408 = por %p406, %p407
      %p409 = scmp.ne.s32.totalorder %s400, %s401
      %p410 = scmp.eq.s32.totalorder %s75, 0
      %p411 = por %p409, %p410
      %p412 = scmp.ne.s32.totalorder %s400, %s401
      %p413 = scmp.eq.s32.totalorder %s76, 1
      %p414 = por %p412, %p413
      %p416 = scmp.ne.s32.totalorder %s401, %s415
      %p417 = scmp.eq.s32.totalorder %s76, 0
      %p418 = por %p416, %p417
      %s420 = sadd.s32 %s419, 1
      %p423 = scmp.eq.s32.totalorder %s70, 1
      %p424 = scmp.ne.s32.totalorder %s419, %s421
      %p425 = scmp.eq.s32.totalorder %s70, 0
      %p426 = por %p424, %p425
      %p427 = scmp.ne.s32.totalorder %s419, %s421
      %p428 = scmp.eq.s32.totalorder %s75, 1
      %p429 = por %p427, %p428
      %p430 = scmp.ne.s32.totalorder %s421, %s422
      %p431 = scmp.eq.s32.totalorder %s75, 0
      %p432 = por %p430, %p431
      %p433 = scmp.ne.s32.totalorder %s421, %s422
      %p434 = scmp.eq.s32.totalorder %s76, 1
      %p435 = por %p433, %p434
      %p437 = scmp.ne.s32.totalorder %s422, %s436
      %p438 = scmp.eq.s32.totalorder %s76, 0
      %p439 = por %p437, %p438
      %s441 = sadd.s32 %s440, 1
      %p444 = scmp.eq.s32.totalorder %s70, 1
      %p445 = scmp.ne.s32.totalorder %s440, %s442
      %p446 = scmp.eq.s32.totalorder %s70, 0
      %p447 = por %p445, %p446
      %p448 = scmp.ne.s32.totalorder %s440, %s442
      %p449 = scmp.eq.s32.totalorder %s75, 1
      %p450 = por %p448, %p449
      %p451 = scmp.ne.s32.totalorder %s442, %s443
      %p452 = scmp.eq.s32.totalorder %s75, 0
      %p453 = por %p451, %p452
      %p454 = scmp.ne.s32.totalorder %s442, %s443
      %p455 = scmp.eq.s32.totalorder %s76, 1
      %p456 = por %p454, %p455
      %p458 = scmp.ne.s32.totalorder %s443, %s457
      %p459 = scmp.eq.s32.totalorder %s76, 0
      %p460 = por %p458, %p459
      %s462 = sadd.s32 %s461, 1
      %p465 = scmp.eq.s32.totalorder %s70, 1
      %p466 = scmp.ne.s32.totalorder %s461, %s463
      %p467 = scmp.eq.s32.totalorder %s70, 0
      %p468 = por %p466, %p467
      %p469 = scmp.ne.s32.totalorder %s461, %s463
      %p470 = scmp.eq.s32.totalorder %s75, 1
      %p471 = por %p469, %p470
      %p472 = scmp.ne.s32.totalorder %s463, %s464
      %p473 = scmp.eq.s32.totalorder %s75, 0
      %p474 = por %p472, %p473
      %p475 = scmp.ne.s32.totalorder %s463, %s464
      %p476 = scmp.eq.s32.totalorder %s76, 1
      %p477 = por %p475, %p476
      %p479 = scmp.ne.s32.totalorder %s464, %s478
      %p480 = scmp.eq.s32.totalorder %s76, 0
      %p481 = por %p479, %p480
      %s483 = sadd.s32 %s482, 1
      %p486 = scmp.eq.s32.totalorder %s70, 1
      %p487 = scmp.ne.s32.totalorder %s482, %s484
      %p488 = scmp.eq.s32.totalorder %s70, 0
      %p489 = por %p487, %p488
      %p490 = scmp.ne.s32.totalorder %s482, %s484
      %p491 = scmp.eq.s32.totalorder %s75, 1
      %p492 = por %p490, %p491
      %p493 = scmp.ne.s32.totalorder %s484, %s485
      %p494 = scmp.eq.s32.totalorder %s75, 0
      %p495 = por %p493, %p494
      %p496 = scmp.ne.s32.totalorder %s484, %s485
      %p497 = scmp.eq.s32.totalorder %s76, 1
      %p498 = por %p496, %p497
      %p500 = scmp.ne.s32.totalorder %s485, %s499
      %p501 = scmp.eq.s32.totalorder %s76, 0
      %p502 = por %p500, %p501
      %s504 = sadd.s32 %s503, 1
      %p507 = scmp.eq.s32.totalorder %s70, 1
      %p508 = scmp.ne.s32.totalorder %s503, %s505
      %p509 = scmp.eq.s32.totalorder %s70, 0
      %p510 = por %p508, %p509
      %p511 = scmp.ne.s32.totalorder %s503, %s505
      %p512 = scmp.eq.s32.totalorder %s75, 1
      %p513 = por %p511, %p512
      %p514 = scmp.ne.s32.totalorder %s505, %s506
      %p515 = scmp.eq.s32.totalorder %s75, 0
      %p516 = por %p514, %p515
      %p517 = scmp.ne.s32.totalorder %s505, %s506
      %p518 = scmp.eq.s32.totalorder %s76, 1
      %p519 = por %p517, %p518
      %p521 = scmp.ne.s32.totalorder %s506, %s520
      %p522 = scmp.eq.s32.totalorder %s76, 0
      %p523 = por %p521, %p522
      %s525 = sadd.s32 %s524, 1
      %p528 = scmp.eq.s32.totalorder %s70, 1
      %p529 = scmp.ne.s32.totalorder %s524, %s526
      %p530 = scmp.eq.s32.totalorder %s70, 0
      %p531 = por %p529, %p530
      %p532 = scmp.ne.s32.totalorder %s524, %s526
      %p533 = scmp.eq.s32.totalorder %s75, 1
      %p534 = por %p532, %p533
      %p535 = scmp.ne.s32.totalorder %s526, %s527
      %p536 = scmp.eq.s32.totalorder %s75, 0
      %p537 = por %p535, %p536
      %p538 = scmp.ne.s32.totalorder %s526, %s527
      %p539 = scmp.eq.s32.totalorder %s76, 1
      %p540 = por %p538, %p539
      %p542 = scmp.ne.s32.totalorder %s527, %s541
      %p543 = scmp.eq.s32.totalorder %s76, 0
      %p544 = por %p542, %p543
      %s546 = sadd.s32 %s545, 1
      %p549 = scmp.eq.s32.totalorder %s70, 1
      %p550 = scmp.ne.s32.totalorder %s545, %s547
      %p551 = scmp.eq.s32.totalorder %s70, 0
      %p552 = por %p550, %p551
      %p553 = scmp.ne.s32.totalorder %s545, %s547
      %p554 = scmp.eq.s32.totalorder %s75, 1
      %p555 = por %p553, %p554
      %p556 = scmp.ne.s32.totalorder %s547, %s548
      %p557 = scmp.eq.s32.totalorder %s75, 0
      %p558 = por %p556, %p557
      %p559 = scmp.ne.s32.totalorder %s547, %s548
      %p560 = scmp.eq.s32.totalorder %s76, 1
      %p561 = por %p559, %p560
      %p563 = scmp.ne.s32.totalorder %s548, %s562
      %p564 = scmp.eq.s32.totalorder %s76, 0
      %p565 = por %p563, %p564
      %s567 = sadd.s32 %s566, 1
      %p570 = scmp.eq.s32.totalorder %s70, 1
      %p571 = scmp.ne.s32.totalorder %s566, %s568
      %p572 = scmp.eq.s32.totalorder %s70, 0
      %p573 = por %p571, %p572
      %p574 = scmp.ne.s32.totalorder %s566, %s568
      %p575 = scmp.eq.s32.totalorder %s75, 1
      %p576 = por %p574, %p575
      %p577 = scmp.ne.s32.totalorder %s568, %s569
      %p578 = scmp.eq.s32.totalorder %s75, 0
      %p579 = por %p577, %p578
      %p580 = scmp.ne.s32.totalorder %s568, %s569
      %p581 = scmp.eq.s32.totalorder %s76, 1
      %p582 = por %p580, %p581
      %p584 = scmp.ne.s32.totalorder %s569, %s583
      %p585 = scmp.eq.s32.totalorder %s76, 0
      %p586 = por %p584, %p585
      %s588 = sadd.s32 %s587, 1
      %p591 = scmp.eq.s32.totalorder %s70, 1
      %p592 = scmp.ne.s32.totalorder %s587, %s589
      %p593 = scmp.eq.s32.totalorder %s70, 0
      %p594 = por %p592, %p593
      %p595 = scmp.ne.s32.totalorder %s587, %s589
      %p596 = scmp.eq.s32.totalorder %s75, 1
      %p597 = por %p595, %p596
      %p598 = scmp.ne.s32.totalorder %s589, %s590
      %p599 = scmp.eq.s32.totalorder %s75, 0
      %p600 = por %p598, %p599
      %p601 = scmp.ne.s32.totalorder %s589, %s590
      %p602 = scmp.eq.s32.totalorder %s76, 1
      %p603 = por %p601, %p602
      %p605 = scmp.ne.s32.totalorder %s590, %s604
      %p606 = scmp.eq.s32.totalorder %s76, 0
      %p607 = por %p605, %p606
      %s609 = sadd.s32 %s608, 1
      %p612 = scmp.eq.s32.totalorder %s70, 1
      %p613 = scmp.ne.s32.totalorder %s608, %s610
      %p614 = scmp.eq.s32.totalorder %s70, 0
      %p615 = por %p613, %p614
      %p616 = scmp.ne.s32.totalorder %s608, %s610
      %p617 = scmp.eq.s32.totalorder %s75, 1
      %p618 = por %p616, %p617
      %p619 = scmp.ne.s32.totalorder %s610, %s611
      %p620 = scmp.eq.s32.totalorder %s75, 0
      %p621 = por %p619, %p620
      %p622 = scmp.ne.s32.totalorder %s610, %s611
      %p623 = scmp.eq.s32.totalorder %s76, 1
      %p624 = por %p622, %p623
      %p626 = scmp.ne.s32.totalorder %s611, %s625
      %p627 = scmp.eq.s32.totalorder %s76, 0
      %p628 = por %p626, %p627
      %s630 = sadd.s32 %s629, 1
      %p633 = scmp.eq.s32.totalorder %s70, 1
      %p634 = scmp.ne.s32.totalorder %s629, %s631
      %p635 = scmp.eq.s32.totalorder %s70, 0
      %p636 = por %p634, %p635
      %p637 = scmp.ne.s32.totalorder %s629, %s631
      %p638 = scmp.eq.s32.totalorder %s75, 1
      %p639 = por %p637, %p638
      %p640 = scmp.ne.s32.totalorder %s631, %s632
      %p641 = scmp.eq.s32.totalorder %s75, 0
      %p642 = por %p640, %p641
      %p643 = scmp.ne.s32.totalorder %s631, %s632
      %p644 = scmp.eq.s32.totalorder %s76, 1
      %p645 = por %p643, %p644
      %p647 = scmp.ne.s32.totalorder %s632, %s646
      %p648 = scmp.eq.s32.totalorder %s76, 0
      %p649 = por %p647, %p648
      %s651 = sadd.s32 %s650, 1
      %p654 = scmp.eq.s32.totalorder %s70, 1
      %p655 = scmp.ne.s32.totalorder %s650, %s652
      %p656 = scmp.eq.s32.totalorder %s70, 0
      %p657 = por %p655, %p656
      %p658 = scmp.ne.s32.totalorder %s650, %s652
      %p659 = scmp.eq.s32.totalorder %s75, 1
      %p660 = por %p658, %p659
      %p661 = scmp.ne.s32.totalorder %s652, %s653
      %p662 = scmp.eq.s32.totalorder %s75, 0
      %p663 = por %p661, %p662
      %p664 = scmp.ne.s32.totalorder %s652, %s653
      %p665 = scmp.eq.s32.totalorder %s76, 1
      %p666 = por %p664, %p665
      %p668 = scmp.ne.s32.totalorder %s653, %s667
      %p669 = scmp.eq.s32.totalorder %s76, 0
      %p670 = por %p668, %p669
      %s672 = sadd.s32 %s671, 1
      %p675 = scmp.eq.s32.totalorder %s70, 1
      %p676 = scmp.ne.s32.totalorder %s671, %s673
      %p677 = scmp.eq.s32.totalorder %s70, 0
      %p678 = por %p676, %p677
      %p679 = scmp.ne.s32.totalorder %s671, %s673
      %p680 = scmp.eq.s32.totalorder %s75, 1
      %p681 = por %p679, %p680
      %p682 = scmp.ne.s32.totalorder %s673, %s674
      %p683 = scmp.eq.s32.totalorder %s75, 0
      %p684 = por %p682, %p683
      %p685 = scmp.ne.s32.totalorder %s673, %s674
      %p686 = scmp.eq.s32.totalorder %s76, 1
      %p687 = por %p685, %p686
      %p689 = scmp.ne.s32.totalorder %s674, %s688
      %p690 = scmp.eq.s32.totalorder %s76, 0
      %p691 = por %p689, %p690
      %s693 = sadd.s32 %s692, 1
      %p696 = scmp.eq.s32.totalorder %s70, 1
      %p697 = scmp.ne.s32.totalorder %s692, %s694
      %p698 = scmp.eq.s32.totalorder %s70, 0
      %p699 = por %p697, %p698
      %p700 = scmp.ne.s32.totalorder %s692, %s694
      %p701 = scmp.eq.s32.totalorder %s75, 1
      %p702 = por %p700, %p701
      %p703 = scmp.ne.s32.totalorder %s694, %s695
      %p704 = scmp.eq.s32.totalorder %s75, 0
      %p705 = por %p703, %p704
      %p706 = scmp.ne.s32.totalorder %s694, %s695
      %p707 = scmp.eq.s32.totalorder %s76, 1
      %p708 = por %p706, %p707
      %p710 = scmp.ne.s32.totalorder %s695, %s709
      %p711 = scmp.eq.s32.totalorder %s76, 0
      %p712 = por %p710, %p711
      %s713 = ssub.s32 %s70, %s77
      %p714 = scmp.eq.s32.totalorder %s713, 0
      %s716 = sadd.s32 %s715, 1
      %s717 = scalar_select %p714, %s715, %s716
      %p720 = pneg %p714
      %p721 = scmp.eq.s32.totalorder %s70, 1
      %p722 = por %p720, %p721
      %p723 = scmp.ne.s32.totalorder %s715, %s718
      %p724 = scmp.eq.s32.totalorder %s70, 0
      %p725 = por %p723, %p724
      %p726 = scmp.ne.s32.totalorder %s715, %s718
      %p727 = scmp.eq.s32.totalorder %s75, 1
      %p728 = por %p726, %p727
      %p729 = scmp.ne.s32.totalorder %s718, %s719
      %p730 = scmp.eq.s32.totalorder %s75, 0
      %p731 = por %p729, %p730
      %p732 = scmp.ne.s32.totalorder %s718, %s719
      %p733 = scmp.eq.s32.totalorder %s76, 1
      %p734 = por %p732, %p733
      %p736 = scmp.ne.s32.totalorder %s719, %s735
      %p737 = scmp.eq.s32.totalorder %s76, 0
      %p738 = por %p736, %p737
      %p739 = scmp.le.s32.totalorder 1, %s70
      %p740 = scmp.lt.s32.totalorder %s70, 3
      %p741 = pnand %p739, %p740
      %p742 = pneg %p741
      // Predicated region
      $region9: #{custom_clip_v2_forward.1} parent=5 // pred_check
        _
      $region10: #{custom_clip_v2_forward.1} parent=5 // pred_check_branch
        %744 = sbr.rel (%p741) target = $region12
      $region11: #{custom_clip_v2_forward.1} parent=5 // pred_region
        %s745 = ssub.s32 %s70, 1
        // Predicated region
        $region13: #{custom_clip_v2_forward.1} parent=11 // pred_check
          %p746 = pneg %p117
        $region14: #{custom_clip_v2_forward.1} parent=11 // pred_check_branch
          %748 = sbr.rel (%p746) target = $region16
        $region15: #{custom_clip_v2_forward.1} parent=11 // pred_region
          _
        $region16: #{custom_clip_v2_forward.1} parent=11 // pred_fallthru
          _
        // Predicated region
        $region17: #{custom_clip_v2_forward.1} parent=11 // pred_check
          %p749 = pneg %p138
        $region18: #{custom_clip_v2_forward.1} parent=11 // pred_check_branch
          %751 = sbr.rel (%p749) target = $region20
        $region19: #{custom_clip_v2_forward.1} parent=11 // pred_region
          _
        $region20: #{custom_clip_v2_forward.1} parent=11 // pred_fallthru
          _
        // Predicated region
        $region21: #{custom_clip_v2_forward.1} parent=11 // pred_check
          %p752 = pneg %p159
        $region22: #{custom_clip_v2_forward.1} parent=11 // pred_check_branch
          %754 = sbr.rel (%p752) target = $region24
        $region23: #{custom_clip_v2_forward.1} parent=11 // pred_region
          _
        $region24: #{custom_clip_v2_forward.1} parent=11 // pred_fallthru
          _
        // Predicated region
        $region25: #{custom_clip_v2_forward.1} parent=11 // pred_check
          %p755 = pneg %p180
        $region26: #{custom_clip_v2_forward.1} parent=11 // pred_check_branch
          %757 = sbr.rel (%p755) target = $region28
        $region27: #{custom_clip_v2_forward.1} parent=11 // pred_region
          _
        $region28: #{custom_clip_v2_forward.1} parent=11 // pred_fallthru
          _
        // Predicated region
        $region29: #{custom_clip_v2_forward.1} parent=11 // pred_check
          %p758 = pneg %p201
        $region30: #{custom_clip_v2_forward.1} parent=11 // pred_check_branch
          %760 = sbr.rel (%p758) target = $region32
        $region31: #{custom_clip_v2_forward.1} parent=11 // pred_region
          _
        $region32: #{custom_clip_v2_forward.1} parent=11 // pred_fallthru
          _
        // Predicated region
        $region33: #{custom_clip_v2_forward.1} parent=11 // pred_check
          %p761 = pneg %p222
        $region34: #{custom_clip_v2_forward.1} parent=11 // pred_check_branch
          %763 = sbr.rel (%p761) target = $region36
        $region35: #{custom_clip_v2_forward.1} parent=11 // pred_region
          _
        $region36: #{custom_clip_v2_forward.1} parent=11 // pred_fallthru
          _
        // Predicated region
        $region37: #{custom_clip_v2_forward.1} parent=11 // pred_check
          %p764 = pneg %p243
        $region38: #{custom_clip_v2_forward.1} parent=11 // pred_check_branch
          %766 = sbr.rel (%p764) target = $region40
        $region39: #{custom_clip_v2_forward.1} parent=11 // pred_region
          _
        $region40: #{custom_clip_v2_forward.1} parent=11 // pred_fallthru
          _
        // Predicated region
        $region41: #{custom_clip_v2_forward.1} parent=11 // pred_check
          %p767 = pneg %p264
        $region42: #{custom_clip_v2_forward.1} parent=11 // pred_check_branch
          %769 = sbr.rel (%p767) target = $region44
        $region43: #{custom_clip_v2_forward.1} parent=11 // pred_region
          _
        $region44: #{custom_clip_v2_forward.1} parent=11 // pred_fallthru
          _
        // Predicated region
        $region45: #{custom_clip_v2_forward.1} parent=11 // pred_check
          %p770 = pneg %p285
        $region46: #{custom_clip_v2_forward.1} parent=11 // pred_check_branch
          %772 = sbr.rel (%p770) target = $region48
        $region47: #{custom_clip_v2_forward.1} parent=11 // pred_region
          _
        $region48: #{custom_clip_v2_forward.1} parent=11 // pred_fallthru
          _
        // Predicated region
        $region49: #{custom_clip_v2_forward.1} parent=11 // pred_check
          %p773 = pneg %p306
        $region50: #{custom_clip_v2_forward.1} parent=11 // pred_check_branch
          %775 = sbr.rel (%p773) target = $region52
        $region51: #{custom_clip_v2_forward.1} parent=11 // pred_region
          _
        $region52: #{custom_clip_v2_forward.1} parent=11 // pred_fallthru
          _
        // Predicated region
        $region53: #{custom_clip_v2_forward.1} parent=11 // pred_check
          %p776 = pneg %p327
        $region54: #{custom_clip_v2_forward.1} parent=11 // pred_check_branch
          %778 = sbr.rel (%p776) target = $region56
        $region55: #{custom_clip_v2_forward.1} parent=11 // pred_region
          _
        $region56: #{custom_clip_v2_forward.1} parent=11 // pred_fallthru
          _
        // Predicated region
        $region57: #{custom_clip_v2_forward.1} parent=11 // pred_check
          %p779 = pneg %p348
        $region58: #{custom_clip_v2_forward.1} parent=11 // pred_check_branch
          %781 = sbr.rel (%p779) target = $region60
        $region59: #{custom_clip_v2_forward.1} parent=11 // pred_region
          _
        $region60: #{custom_clip_v2_forward.1} parent=11 // pred_fallthru
          _
        // Predicated region
        $region61: #{custom_clip_v2_forward.1} parent=11 // pred_check
          %p782 = pneg %p369
        $region62: #{custom_clip_v2_forward.1} parent=11 // pred_check_branch
          %784 = sbr.rel (%p782) target = $region64
        $region63: #{custom_clip_v2_forward.1} parent=11 // pred_region
          _
        $region64: #{custom_clip_v2_forward.1} parent=11 // pred_fallthru
          _
        // Predicated region
        $region65: #{custom_clip_v2_forward.1} parent=11 // pred_check
          %p785 = pneg %p390
        $region66: #{custom_clip_v2_forward.1} parent=11 // pred_check_branch
          %787 = sbr.rel (%p785) target = $region68
        $region67: #{custom_clip_v2_forward.1} parent=11 // pred_region
          _
        $region68: #{custom_clip_v2_forward.1} parent=11 // pred_fallthru
          _
        // Predicated region
        $region69: #{custom_clip_v2_forward.1} parent=11 // pred_check
          %p788 = pneg %p411
        $region70: #{custom_clip_v2_forward.1} parent=11 // pred_check_branch
          %790 = sbr.rel (%p788) target = $region72
        $region71: #{custom_clip_v2_forward.1} parent=11 // pred_region
          _
        $region72: #{custom_clip_v2_forward.1} parent=11 // pred_fallthru
          _
        // Predicated region
        $region73: #{custom_clip_v2_forward.1} parent=11 // pred_check
          %p791 = pneg %p432
        $region74: #{custom_clip_v2_forward.1} parent=11 // pred_check_branch
          %793 = sbr.rel (%p791) target = $region76
        $region75: #{custom_clip_v2_forward.1} parent=11 // pred_region
          _
        $region76: #{custom_clip_v2_forward.1} parent=11 // pred_fallthru
          _
        // Predicated region
        $region77: #{custom_clip_v2_forward.1} parent=11 // pred_check
          %p794 = pneg %p453
        $region78: #{custom_clip_v2_forward.1} parent=11 // pred_check_branch
          %796 = sbr.rel (%p794) target = $region80
        $region79: #{custom_clip_v2_forward.1} parent=11 // pred_region
          _
        $region80: #{custom_clip_v2_forward.1} parent=11 // pred_fallthru
          _
        // Predicated region
        $region81: #{custom_clip_v2_forward.1} parent=11 // pred_check
          %p797 = pneg %p474
        $region82: #{custom_clip_v2_forward.1} parent=11 // pred_check_branch
          %799 = sbr.rel (%p797) target = $region84
        $region83: #{custom_clip_v2_forward.1} parent=11 // pred_region
          _
        $region84: #{custom_clip_v2_forward.1} parent=11 // pred_fallthru
          _
        // Predicated region
        $region85: #{custom_clip_v2_forward.1} parent=11 // pred_check
          %p800 = pneg %p495
        $region86: #{custom_clip_v2_forward.1} parent=11 // pred_check_branch
          %802 = sbr.rel (%p800) target = $region88
        $region87: #{custom_clip_v2_forward.1} parent=11 // pred_region
          _
        $region88: #{custom_clip_v2_forward.1} parent=11 // pred_fallthru
          _
        // Predicated region
        $region89: #{custom_clip_v2_forward.1} parent=11 // pred_check
          %p803 = pneg %p516
        $region90: #{custom_clip_v2_forward.1} parent=11 // pred_check_branch
          %805 = sbr.rel (%p803) target = $region92
        $region91: #{custom_clip_v2_forward.1} parent=11 // pred_region
          _
        $region92: #{custom_clip_v2_forward.1} parent=11 // pred_fallthru
          _
        // Predicated region
        $region93: #{custom_clip_v2_forward.1} parent=11 // pred_check
          %p806 = pneg %p537
        $region94: #{custom_clip_v2_forward.1} parent=11 // pred_check_branch
          %808 = sbr.rel (%p806) target = $region96
        $region95: #{custom_clip_v2_forward.1} parent=11 // pred_region
          _
        $region96: #{custom_clip_v2_forward.1} parent=11 // pred_fallthru
          _
        // Predicated region
        $region97: #{custom_clip_v2_forward.1} parent=11 // pred_check
          %p809 = pneg %p558
        $region98: #{custom_clip_v2_forward.1} parent=11 // pred_check_branch
          %811 = sbr.rel (%p809) target = $region100
        $region99: #{custom_clip_v2_forward.1} parent=11 // pred_region
          _
        $region100: #{custom_clip_v2_forward.1} parent=11 // pred_fallthru
          _
        // Predicated region
        $region101: #{custom_clip_v2_forward.1} parent=11 // pred_check
          %p812 = pneg %p579
        $region102: #{custom_clip_v2_forward.1} parent=11 // pred_check_branch
          %814 = sbr.rel (%p812) target = $region104
        $region103: #{custom_clip_v2_forward.1} parent=11 // pred_region
          _
        $region104: #{custom_clip_v2_forward.1} parent=11 // pred_fallthru
          _
        // Predicated region
        $region105: #{custom_clip_v2_forward.1} parent=11 // pred_check
          %p815 = pneg %p600
        $region106: #{custom_clip_v2_forward.1} parent=11 // pred_check_branch
          %817 = sbr.rel (%p815) target = $region108
        $region107: #{custom_clip_v2_forward.1} parent=11 // pred_region
          _
        $region108: #{custom_clip_v2_forward.1} parent=11 // pred_fallthru
          _
        // Predicated region
        $region109: #{custom_clip_v2_forward.1} parent=11 // pred_check
          %p818 = pneg %p621
        $region110: #{custom_clip_v2_forward.1} parent=11 // pred_check_branch
          %820 = sbr.rel (%p818) target = $region112
        $region111: #{custom_clip_v2_forward.1} parent=11 // pred_region
          _
        $region112: #{custom_clip_v2_forward.1} parent=11 // pred_fallthru
          _
        // Predicated region
        $region113: #{custom_clip_v2_forward.1} parent=11 // pred_check
          %p821 = pneg %p642
        $region114: #{custom_clip_v2_forward.1} parent=11 // pred_check_branch
          %823 = sbr.rel (%p821) target = $region116
        $region115: #{custom_clip_v2_forward.1} parent=11 // pred_region
          _
        $region116: #{custom_clip_v2_forward.1} parent=11 // pred_fallthru
          _
        // Predicated region
        $region117: #{custom_clip_v2_forward.1} parent=11 // pred_check
          %p824 = pneg %p663
        $region118: #{custom_clip_v2_forward.1} parent=11 // pred_check_branch
          %826 = sbr.rel (%p824) target = $region120
        $region119: #{custom_clip_v2_forward.1} parent=11 // pred_region
          _
        $region120: #{custom_clip_v2_forward.1} parent=11 // pred_fallthru
          _
        // Predicated region
        $region121: #{custom_clip_v2_forward.1} parent=11 // pred_check
          %p827 = pneg %p684
        $region122: #{custom_clip_v2_forward.1} parent=11 // pred_check_branch
          %829 = sbr.rel (%p827) target = $region124
        $region123: #{custom_clip_v2_forward.1} parent=11 // pred_region
          _
        $region124: #{custom_clip_v2_forward.1} parent=11 // pred_fallthru
          _
        // Predicated region
        $region125: #{custom_clip_v2_forward.1} parent=11 // pred_check
          %p830 = pneg %p705
        $region126: #{custom_clip_v2_forward.1} parent=11 // pred_check_branch
          %832 = sbr.rel (%p830) target = $region128
        $region127: #{custom_clip_v2_forward.1} parent=11 // pred_region
          _
        $region128: #{custom_clip_v2_forward.1} parent=11 // pred_fallthru
          _
      $region12: #{custom_clip_v2_forward.1} parent=5 // pred_fallthru
        _
      %p833 = scmp.lt.s32.totalorder %s70, 2
      // Predicated region
      $region129: #{custom_clip_v2_forward.1} parent=5 // pred_check
        %p834 = pneg %p833
      $region130: #{custom_clip_v2_forward.1} parent=5 // pred_check_branch
        %836 = sbr.rel (%p834) target = $region132
      $region131: #{custom_clip_v2_forward.1} parent=5 // pred_region
        // Predicated region
        $region133: #{custom_clip_v2_forward.1} parent=131 // pred_check
          %p837 = pneg %p90
        $region134: #{custom_clip_v2_forward.1} parent=131 // pred_check_branch
          %839 = sbr.rel (%p837) target = $region136
        $region135: #{custom_clip_v2_forward.1} parent=131 // pred_region
          %p840 = scmp.lt.s32.totalorder %s70, 1
          %s841 = scalar_select %p840, %s70, 1
          %s842 = smul.addr %s841, 6
          %s843 = scalar_lea.vmem %s1, %s842
        $region136: #{custom_clip_v2_forward.1} parent=131 // pred_fallthru
          _
      $region132: #{custom_clip_v2_forward.1} parent=5 // pred_fallthru
        _
      %p844 = scmp.le.s32.totalorder 1, %s70
      %p845 = scmp.lt.s32.totalorder %s70, 3
      %p846 = pnand %p844, %p845
      %p847 = pneg %p846
      // Predicated region
      $region137: #{custom_clip_v2_forward.1} parent=5 // pred_check
        _
      $region138: #{custom_clip_v2_forward.1} parent=5 // pred_check_branch
        %849 = sbr.rel (%p846) target = $region140
      $region139: #{custom_clip_v2_forward.1} parent=5 // pred_region
        %s850 = ssub.s32 %s70, 1
        %p851 = scmp.lt.s32.totalorder %s75, 1
        %s852 = scalar_select %p851, %s75, 1
        %s853 = smul.addr %s852, 6
        %s854 = scalar_lea.vmem %s1, %s853
        %p855 = pneg %p96
        %p856 = pneg %p93
        %p857 = pneg %p117
        %p858 = pneg %p114
        %p859 = pneg %p138
        %p860 = pneg %p135
        %p861 = pneg %p159
        %p862 = pneg %p156
        %p863 = pneg %p180
        %p864 = pneg %p177
        %p865 = pneg %p201
        %p866 = pneg %p198
        %p867 = pneg %p222
        %p868 = pneg %p219
        %p869 = pneg %p243
        %p870 = pneg %p240
        %p871 = pneg %p264
        %p872 = pneg %p261
        %p873 = pneg %p285
        %p874 = pneg %p282
        %p875 = pneg %p306
        %p876 = pneg %p303
        %p877 = pneg %p327
        %p878 = pneg %p324
        %p879 = pneg %p348
        %p880 = pneg %p345
        %p881 = pneg %p369
        %p882 = pneg %p366
        %p883 = pneg %p390
        %p884 = pneg %p387
        %p885 = pneg %p411
        %p886 = pneg %p408
        %p887 = pneg %p432
        %p888 = pneg %p429
        %p889 = pneg %p453
        %p890 = pneg %p450
        %p891 = pneg %p474
        %p892 = pneg %p471
        %p893 = pneg %p495
        %p894 = pneg %p492
        %p895 = pneg %p516
        %p896 = pneg %p513
        %p897 = pneg %p537
        %p898 = pneg %p534
        %p899 = pneg %p558
        %p900 = pneg %p555
        %p901 = pneg %p579
        %p902 = pneg %p576
        %p903 = pneg %p600
        %p904 = pneg %p597
        %p905 = pneg %p621
        %p906 = pneg %p618
        %p907 = pneg %p642
        %p908 = pneg %p639
        %p909 = pneg %p663
        %p910 = pneg %p660
        %p911 = pneg %p684
        %p912 = pneg %p681
        %p913 = pneg %p705
        %p914 = pneg %p702
        %p915 = pneg %p731
        %p916 = pneg %p728
        %s917 = sand.u32 %s718, 1
        %s918 = scalar_lea.sflag [#allocation3], %s917
        %s919 = sand.u32 %s718, 1
        %s920 = scalar_lea.vmem [#allocation2], %s919
        %p921 = scmp.lt.s32.totalorder %s75, 1
        %s922 = scalar_select %p921, %s75, 1
        %s923 = smul.addr %s922, 6
        %s924 = scalar_lea.vmem %s1, %s923
        %v925 = vld [vmem:[%s924] sm:$0x3f]
        %v926 = vld [vmem:[%s5] sm:$0xff]
        %v927 = vld [vmem:[%s5 + $0x8] sm:$0xff]
        %v928 = vld [vmem:[%s5 + $0x10] sm:$0xff]
        %v929 = vld [vmem:[%s5 + $0x18] sm:$0xff]
        %v930 = vld [vmem:[%s5 + $0x20] sm:$0xff]
        %v931 = vld [vmem:[%s5 + $0x28] sm:$0xff]
        %v932 = vld [vmem:[%s5 + $0x30] sm:$0xff]
        %v933 = vld [vmem:[%s5 + $0x38] sm:$0xff]
        %v934 = vld [vmem:[%s5 + $0x40] sm:$0xff]
        %v935 = vld [vmem:[%s5 + $0x48] sm:$0xff]
        %v936 = vld [vmem:[%s5 + $0x50] sm:$0xff]
        %v937 = vld [vmem:[%s5 + $0x58] sm:$0xff]
        %v938 = vld [vmem:[%s5 + $0x60] sm:$0xff]
        %v939 = vld [vmem:[%s5 + $0x68] sm:$0xff]
        %v940 = vld [vmem:[%s5 + $0x70] sm:$0xff]
        %v941 = vld [vmem:[%s5 + $0x78] sm:$0xff]
        %v942 = vld [vmem:[%s5 + $0x80] sm:$0xff]
        %v943 = vld [vmem:[%s5 + $0x88] sm:$0xff]
        %v944 = vld [vmem:[%s5 + $0x90] sm:$0xff]
        %v945 = vld [vmem:[%s5 + $0x98] sm:$0xff]
        %v946 = vld [vmem:[%s5 + $0xa0] sm:$0xff]
        %v947 = vld [vmem:[%s5 + $0xa8] sm:$0xff]
        %v948 = vld [vmem:[%s5 + $0xb0] sm:$0xff]
        %v949 = vld [vmem:[%s5 + $0xb8] sm:$0xff]
        %v950 = vld [vmem:[%s5 + $0xc0] sm:$0xff]
        %v951 = vld [vmem:[%s5 + $0xc8] sm:$0xff]
        %v952 = vld [vmem:[%s5 + $0xd0] sm:$0xff]
        %v953 = vld [vmem:[%s5 + $0xd8] sm:$0xff]
        %v954 = vld [vmem:[%s5 + $0xe0] sm:$0xff]
        %v955 = vld [vmem:[%s5 + $0xe8] sm:$0xff]
        %v956 = vld [vmem:[%s5 + $0xf0] sm:$0xff]
        %v957 = vld [vmem:[%s5 + $0xf8] sm:$0xff]
        %v958 = vld [vmem:[%s5 + $0x100] sm:$0xff]
        %v959 = vld [vmem:[%s5 + $0x108] sm:$0xff]
        %v960 = vld [vmem:[%s5 + $0x110] sm:$0xff]
        %v961 = vld [vmem:[%s5 + $0x118] sm:$0xff]
        %v962 = vld [vmem:[%s5 + $0x120] sm:$0xff]
        %v963 = vld [vmem:[%s5 + $0x128] sm:$0xff]
        %v964 = vld [vmem:[%s5 + $0x130] sm:$0xff]
        %v965 = vld [vmem:[%s5 + $0x138] sm:$0xff]
        %v966 = vld [vmem:[%s5 + $0x140] sm:$0xff]
        %v967 = vld [vmem:[%s5 + $0x148] sm:$0xff]
        %v968 = vld [vmem:[%s5 + $0x150] sm:$0xff]
        %v969 = vld [vmem:[%s5 + $0x158] sm:$0xff]
        %v970 = vld [vmem:[%s5 + $0x160] sm:$0xff]
        %v971 = vld [vmem:[%s5 + $0x168] sm:$0xff]
        %v972 = vld [vmem:[%s5 + $0x170] sm:$0xff]
        %v973 = vld [vmem:[%s5 + $0x178] sm:$0xff]
        %v974 = vld [vmem:[%s5 + $0x180] sm:$0xff]
        %v975 = vld [vmem:[%s5 + $0x188] sm:$0xff]
        %v976 = vld [vmem:[%s5 + $0x190] sm:$0xff]
        %v977 = vld [vmem:[%s5 + $0x198] sm:$0xff]
        %v978 = vld [vmem:[%s5 + $0x1a0] sm:$0xff]
        %v979 = vld [vmem:[%s5 + $0x1a8] sm:$0xff]
        %v980 = vld [vmem:[%s5 + $0x1b0] sm:$0xff]
        %v981 = vld [vmem:[%s5 + $0x1b8] sm:$0xff]
        %v982 = vld [vmem:[%s5 + $0x1c0] sm:$0xff]
        %v983 = vld [vmem:[%s5 + $0x1c8] sm:$0xff]
        %v984 = vld [vmem:[%s5 + $0x1d0] sm:$0xff]
        %v985 = vld [vmem:[%s5 + $0x1d8] sm:$0xff]
        %v986 = vld [vmem:[%s5 + $0x1e0] sm:$0xff]
        %v987 = vld [vmem:[%s5 + $0x1e8] sm:$0xff]
        %v988 = vld [vmem:[%s5 + $0x1f0] sm:$0xff]
        %v989 = vld [vmem:[%s5 + $0x1f8] sm:$0xff]
        %v990 = vld [vmem:[%s5 + $0x200] sm:$0xff]
        %v991 = vld [vmem:[%s5 + $0x208] sm:$0xff]
        %v992 = vld [vmem:[%s5 + $0x210] sm:$0xff]
        %v993 = vld [vmem:[%s5 + $0x218] sm:$0xff]
        %v994 = vld [vmem:[%s5 + $0x220] sm:$0xff]
        %v995 = vld [vmem:[%s5 + $0x228] sm:$0xff]
        %v996 = vld [vmem:[%s5 + $0x230] sm:$0xff]
        %v997 = vld [vmem:[%s5 + $0x238] sm:$0xff]
        %v998 = vld [vmem:[%s5 + $0x240] sm:$0xff]
        %v999 = vld [vmem:[%s5 + $0x248] sm:$0xff]
        %v1000 = vld [vmem:[%s5 + $0x250] sm:$0xff]
        %v1001 = vld [vmem:[%s5 + $0x258] sm:$0xff]
        %v1002 = vld [vmem:[%s5 + $0x260] sm:$0xff]
        %v1003 = vld [vmem:[%s5 + $0x268] sm:$0xff]
        %v1004 = vld [vmem:[%s5 + $0x270] sm:$0xff]
        %v1005 = vld [vmem:[%s5 + $0x278] sm:$0xff]
        %v1006 = vld [vmem:[%s5 + $0x280] sm:$0xff]
        %v1007 = vld [vmem:[%s5 + $0x288] sm:$0xff]
        %v1008 = vld [vmem:[%s5 + $0x290] sm:$0xff]
        %v1009 = vld [vmem:[%s5 + $0x298] sm:$0xff]
        %v1010 = vld [vmem:[%s5 + $0x2a0] sm:$0xff]
        %v1011 = vld [vmem:[%s5 + $0x2a8] sm:$0xff]
        %v1012 = vld [vmem:[%s5 + $0x2b0] sm:$0xff]
        %v1013 = vld [vmem:[%s5 + $0x2b8] sm:$0xff]
        %v1014 = vld [vmem:[%s5 + $0x2c0] sm:$0xff]
        %v1015 = vld [vmem:[%s5 + $0x2c8] sm:$0xff]
        %v1016 = vld [vmem:[%s5 + $0x2d0] sm:$0xff]
        %v1017 = vld [vmem:[%s5 + $0x2d8] sm:$0xff]
        %v1018 = vld [vmem:[%s5 + $0x2e0] sm:$0xff]
        %v1019 = vld [vmem:[%s5 + $0x2e8] sm:$0xff]
        %v1020 = vld [vmem:[%s5 + $0x2f0] sm:$0xff]
        %v1021 = vld [vmem:[%s5 + $0x2f8] sm:$0xff]
        %v1022 = vld [vmem:[%s7] sm:$0x1]
        %v1024 = vlaneseq
        %v1025 = vshrl.u32 %v1024, 7
        %v1026 = vsub.s32 0, %v1025
        %v1027 = vrot.slane %v925, %v1026
        %v1028 = vlaneseq
        %v1029 = vshrl.u32 %v1028, 7
        %v1030 = vsub.s32 1, %v1029
        %v1031 = vrot.slane %v925, %v1030
        %v1032 = vlaneseq
        %v1033 = vshrl.u32 %v1032, 7
        %v1034 = vsub.s32 2, %v1033
        %v1035 = vrot.slane %v925, %v1034
        %v1036 = vlaneseq
        %v1037 = vshrl.u32 %v1036, 7
        %v1038 = vsub.s32 3, %v1037
        %v1039 = vrot.slane %v925, %v1038
        %v1040 = vlaneseq
        %v1041 = vshrl.u32 %v1040, 7
        %v1042 = vsub.s32 4, %v1041
        %v1043 = vrot.slane %v925, %v1042
        %v1044 = vlaneseq
        %v1045 = vshrl.u32 %v1044, 7
        %v1046 = vsub.s32 5, %v1045
        %v1047 = vrot.slane %v925, %v1046
        %1054 = vmatprep.subr.mxu0 0.0
        %1055 = vmatpush1.msra.mxu0 %v926
        %1056 = vmatprep.subr.mxu0 0.0
        %1057 = vmatpush1.msra.mxu0 %v927
        %1058 = vmatprep.subr.mxu0 0.0
        %1059 = vmatpush1.msra.mxu0 %v928
        %1060 = vmatprep.subr.mxu0 0.0
        %1061 = vmatpush1.msra.mxu0 %v929
        %1062 = vmatprep.subr.mxu0 0.0
        %1063 = vmatpush1.msra.mxu0 %v930
        %1064 = vmatprep.subr.mxu0 0.0
        %1065 = vmatpush1.msra.mxu0 %v931
        %1066 = vmatprep.subr.mxu0 0.0
        %1067 = vmatpush1.msra.mxu0 %v932
        %1068 = vmatprep.subr.mxu0 0.0
        %1069 = vmatpush1.msra.mxu0 %v933
        %1070 = vmatprep.subr.mxu0 0.0
        %1071 = vmatpush1.msra.mxu0 %v934
        %1072 = vmatprep.subr.mxu0 0.0
        %1073 = vmatpush1.msra.mxu0 %v935
        %1074 = vmatprep.subr.mxu0 0.0
        %1075 = vmatpush1.msra.mxu0 %v936
        %1076 = vmatprep.subr.mxu0 0.0
        %1077 = vmatpush1.msra.mxu0 %v937
        %1078 = vmatprep.subr.mxu0 0.0
        %1079 = vmatpush1.msra.mxu0 %v938
        %1080 = vmatprep.subr.mxu0 0.0
        %1081 = vmatpush1.msra.mxu0 %v939
        %1082 = vmatprep.subr.mxu0 0.0
        %1083 = vmatpush1.msra.mxu0 %v940
        %1084 = vmatprep.subr.mxu0 0.0
        %1085 = vmatpush1.msra.mxu0 %v941
        %1086 = vmatprep.subr.mxu0 0.0
        %1087 = vmatpush1.msra.mxu0 %v942
        %1088 = vmatprep.subr.mxu0 0.0
        %1089 = vmatpush1.msra.mxu0 %v943
        %1090 = vmatprep.subr.mxu0 0.0
        %1091 = vmatpush1.msra.mxu0 %v944
        %1092 = vmatprep.subr.mxu0 0.0
        %1093 = vmatpush1.msra.mxu0 %v945
        %1094 = vmatprep.subr.mxu0 0.0
        %1095 = vmatpush1.msra.mxu0 %v946
        %1096 = vmatprep.subr.mxu0 0.0
        %1097 = vmatpush1.msra.mxu0 %v947
        %1098 = vmatprep.subr.mxu0 0.0
        %1099 = vmatpush1.msra.mxu0 %v948
        %1100 = vmatprep.subr.mxu0 0.0
        %1101 = vmatpush1.msra.mxu0 %v949
        %1102 = vmatprep.subr.mxu0 0.0
        %1103 = vmatpush1.msra.mxu0 %v950
        %1104 = vmatprep.subr.mxu0 0.0
        %1105 = vmatpush1.msra.mxu0 %v951
        %1106 = vmatprep.subr.mxu0 0.0
        %1107 = vmatpush1.msra.mxu0 %v952
        %1108 = vmatprep.subr.mxu0 0.0
        %1109 = vmatpush1.msra.mxu0 %v953
        %1110 = vmatprep.subr.mxu0 0.0
        %1111 = vmatpush1.msra.mxu0 %v954
        %1112 = vmatprep.subr.mxu0 0.0
        %1113 = vmatpush1.msra.mxu0 %v955
        %1114 = vmatprep.subr.mxu0 0.0
        %1115 = vmatpush1.msra.mxu0 %v956
        %1116 = vmatprep.subr.mxu0 0.0
        %1117 = vmatpush1.msra.mxu0 %v957
        %1118 = vmatprep.mubr.f32.mxu0 %v1031
        %1119 = vmatmul.mubr.f32.gmra.mrb[0].mxu0 %v1027
        %v1120 = vpop.f32.mrb[0].mxu0
        %v1121 = vadd.f32 %v1022, %v1120
        %v1122 = vpop.f32.mrb[0].mxu0
        %1123 = vdwg.mxu0
        %1124 = vmatprep.subr.mxu0 0.0
        %1125 = vmatpush1.msra.mxu0 %v958
        %1126 = vmatprep.subr.mxu0 0.0
        %1127 = vmatpush1.msra.mxu0 %v959
        %1128 = vmatprep.subr.mxu0 0.0
        %1129 = vmatpush1.msra.mxu0 %v960
        %1130 = vmatprep.subr.mxu0 0.0
        %1131 = vmatpush1.msra.mxu0 %v961
        %1132 = vmatprep.subr.mxu0 0.0
        %1133 = vmatpush1.msra.mxu0 %v962
        %1134 = vmatprep.subr.mxu0 0.0
        %1135 = vmatpush1.msra.mxu0 %v963
        %1136 = vmatprep.subr.mxu0 0.0
        %1137 = vmatpush1.msra.mxu0 %v964
        %1138 = vmatprep.subr.mxu0 0.0
        %1139 = vmatpush1.msra.mxu0 %v965
        %1140 = vmatprep.subr.mxu0 0.0
        %1141 = vmatpush1.msra.mxu0 %v966
        %1142 = vmatprep.subr.mxu0 0.0
        %1143 = vmatpush1.msra.mxu0 %v967
        %1144 = vmatprep.subr.mxu0 0.0
        %1145 = vmatpush1.msra.mxu0 %v968
        %1146 = vmatprep.subr.mxu0 0.0
        %1147 = vmatpush1.msra.mxu0 %v969
        %1148 = vmatprep.subr.mxu0 0.0
        %1149 = vmatpush1.msra.mxu0 %v970
        %1150 = vmatprep.subr.mxu0 0.0
        %1151 = vmatpush1.msra.mxu0 %v971
        %1152 = vmatprep.subr.mxu0 0.0
        %1153 = vmatpush1.msra.mxu0 %v972
        %1154 = vmatprep.subr.mxu0 0.0
        %1155 = vmatpush1.msra.mxu0 %v973
        %1156 = vmatprep.subr.mxu0 0.0
        %1157 = vmatpush1.msra.mxu0 %v974
        %1158 = vmatprep.subr.mxu0 0.0
        %1159 = vmatpush1.msra.mxu0 %v975
        %1160 = vmatprep.subr.mxu0 0.0
        %1161 = vmatpush1.msra.mxu0 %v976
        %1162 = vmatprep.subr.mxu0 0.0
        %1163 = vmatpush1.msra.mxu0 %v977
        %1164 = vmatprep.subr.mxu0 0.0
        %1165 = vmatpush1.msra.mxu0 %v978
        %1166 = vmatprep.subr.mxu0 0.0
        %1167 = vmatpush1.msra.mxu0 %v979
        %1168 = vmatprep.subr.mxu0 0.0
        %1169 = vmatpush1.msra.mxu0 %v980
        %1170 = vmatprep.subr.mxu0 0.0
        %1171 = vmatpush1.msra.mxu0 %v981
        %1172 = vmatprep.subr.mxu0 0.0
        %1173 = vmatpush1.msra.mxu0 %v982
        %1174 = vmatprep.subr.mxu0 0.0
        %1175 = vmatpush1.msra.mxu0 %v983
        %1176 = vmatprep.subr.mxu0 0.0
        %1177 = vmatpush1.msra.mxu0 %v984
        %1178 = vmatprep.subr.mxu0 0.0
        %1179 = vmatpush1.msra.mxu0 %v985
        %1180 = vmatprep.subr.mxu0 0.0
        %1181 = vmatpush1.msra.mxu0 %v986
        %1182 = vmatprep.subr.mxu0 0.0
        %1183 = vmatpush1.msra.mxu0 %v987
        %1184 = vmatprep.subr.mxu0 0.0
        %1185 = vmatpush1.msra.mxu0 %v988
        %1186 = vmatprep.subr.mxu0 0.0
        %1187 = vmatpush1.msra.mxu0 %v989
        %1188 = vmatprep.mubr.f32.mxu0 %v1039
        %1189 = vmatmul.mubr.f32.gmra.mrb[0].mxu0 %v1035
        %v1190 = vpop.f32.mrb[0].mxu0
        %v1191 = vadd.f32 %v1121, %v1190
        %v1192 = vpop.f32.mrb[0].mxu0
        %1193 = vdwg.mxu0
        %1194 = vmatprep.subr.mxu0 0.0
        %1195 = vmatpush1.msra.mxu0 %v990
        %1196 = vmatprep.subr.mxu0 0.0
        %1197 = vmatpush1.msra.mxu0 %v991
        %1198 = vmatprep.subr.mxu0 0.0
        %1199 = vmatpush1.msra.mxu0 %v992
        %1200 = vmatprep.subr.mxu0 0.0
        %1201 = vmatpush1.msra.mxu0 %v993
        %1202 = vmatprep.subr.mxu0 0.0
        %1203 = vmatpush1.msra.mxu0 %v994
        %1204 = vmatprep.subr.mxu0 0.0
        %1205 = vmatpush1.msra.mxu0 %v995
        %1206 = vmatprep.subr.mxu0 0.0
        %1207 = vmatpush1.msra.mxu0 %v996
        %1208 = vmatprep.subr.mxu0 0.0
        %1209 = vmatpush1.msra.mxu0 %v997
        %1210 = vmatprep.subr.mxu0 0.0
        %1211 = vmatpush1.msra.mxu0 %v998
        %1212 = vmatprep.subr.mxu0 0.0
        %1213 = vmatpush1.msra.mxu0 %v999
        %1214 = vmatprep.subr.mxu0 0.0
        %1215 = vmatpush1.msra.mxu0 %v1000
        %1216 = vmatprep.subr.mxu0 0.0
        %1217 = vmatpush1.msra.mxu0 %v1001
        %1218 = vmatprep.subr.mxu0 0.0
        %1219 = vmatpush1.msra.mxu0 %v1002
        %1220 = vmatprep.subr.mxu0 0.0
        %1221 = vmatpush1.msra.mxu0 %v1003
        %1222 = vmatprep.subr.mxu0 0.0
        %1223 = vmatpush1.msra.mxu0 %v1004
        %1224 = vmatprep.subr.mxu0 0.0
        %1225 = vmatpush1.msra.mxu0 %v1005
        %1226 = vmatprep.subr.mxu0 0.0
        %1227 = vmatpush1.msra.mxu0 %v1006
        %1228 = vmatprep.subr.mxu0 0.0
        %1229 = vmatpush1.msra.mxu0 %v1007
        %1230 = vmatprep.subr.mxu0 0.0
        %1231 = vmatpush1.msra.mxu0 %v1008
        %1232 = vmatprep.subr.mxu0 0.0
        %1233 = vmatpush1.msra.mxu0 %v1009
        %1234 = vmatprep.subr.mxu0 0.0
        %1235 = vmatpush1.msra.mxu0 %v1010
        %1236 = vmatprep.subr.mxu0 0.0
        %1237 = vmatpush1.msra.mxu0 %v1011
        %1238 = vmatprep.subr.mxu0 0.0
        %1239 = vmatpush1.msra.mxu0 %v1012
        %1240 = vmatprep.subr.mxu0 0.0
        %1241 = vmatpush1.msra.mxu0 %v1013
        %1242 = vmatprep.subr.mxu0 0.0
        %1243 = vmatpush1.msra.mxu0 %v1014
        %1244 = vmatprep.subr.mxu0 0.0
        %1245 = vmatpush1.msra.mxu0 %v1015
        %1246 = vmatprep.subr.mxu0 0.0
        %1247 = vmatpush1.msra.mxu0 %v1016
        %1248 = vmatprep.subr.mxu0 0.0
        %1249 = vmatpush1.msra.mxu0 %v1017
        %1250 = vmatprep.subr.mxu0 0.0
        %1251 = vmatpush1.msra.mxu0 %v1018
        %1252 = vmatprep.subr.mxu0 0.0
        %1253 = vmatpush1.msra.mxu0 %v1019
        %1254 = vmatprep.subr.mxu0 0.0
        %1255 = vmatpush1.msra.mxu0 %v1020
        %1256 = vmatprep.subr.mxu0 0.0
        %1257 = vmatpush1.msra.mxu0 %v1021
        %1258 = vmatprep.mubr.f32.mxu0 %v1047
        %1259 = vmatmul.mubr.f32.gmra.mrb[0].mxu0 %v1043
        %v1260 = vpop.f32.mrb[0].mxu0
        %v1261 = vadd.f32 %v1191, %v1260
        %v1262 = vpop.f32.mrb[0].mxu0
        %1263 = vdwg.mxu0
        %v1264 = vmul.f32 %v1261, %v1261
        %vm1265 = vcmask 516096
        %v1266 = vsel %vm1265, %v1264, 0.0
        %1267 = vadd.xlane.f32.xlu0 %v1266
        %v1268 = vpop.xlane.xlu0 %1267
        %v1269 = vadd.f32 %v1268, 1e-12
        %v1270 = vrsqrt.pop %v1269
        %v1271 = vmul.f32 %v1261, %v1270
        %v1272 = vld [vmem:[%s9] sm:$0xff]
        %v1273 = vld [vmem:[%s9 + $0x8] sm:$0xff]
        %v1274 = vld [vmem:[%s9 + $0x10] sm:$0xff]
        %v1275 = vld [vmem:[%s9 + $0x18] sm:$0xff]
        %v1276 = vld [vmem:[%s9 + $0x20] sm:$0xff]
        %v1277 = vld [vmem:[%s9 + $0x28] sm:$0xff]
        %v1278 = vld [vmem:[%s9 + $0x30] sm:$0xff]
        %v1279 = vld [vmem:[%s9 + $0x38] sm:$0xff]
        %v1280 = vld [vmem:[%s11] sm:$0x1]
        %vm1281 = vcmask 523264
        %v1283 = vsel %vm1281, %v1271, 0
        %1285 = vmatprep.subr.mxu0 0.0
        %1286 = vmatpush1.msra.mxu0 %v1272
        %1287 = vmatprep.subr.mxu0 0.0
        %1288 = vmatpush1.msra.mxu0 %v1273
        %1289 = vmatprep.subr.mxu0 0.0
        %1290 = vmatpush1.msra.mxu0 %v1274
        %1291 = vmatprep.subr.mxu0 0.0
        %1292 = vmatpush1.msra.mxu0 %v1275
        %1293 = vmatprep.subr.mxu0 0.0
        %1294 = vmatpush1.msra.mxu0 %v1276
        %1295 = vmatprep.subr.mxu0 0.0
        %1296 = vmatpush1.msra.mxu0 %v1277
        %1297 = vmatprep.subr.mxu0 0.0
        %1298 = vmatpush1.msra.mxu0 %v1278
        %1299 = vmatprep.subr.mxu0 0.0
        %1300 = vmatpush1.msra.mxu0 %v1279
        %1301 = vmatprep.subr.mxu0 0.0
        %1302 = vmatpush1.msra.mxu0 0.0
        %1303 = vmatprep.subr.mxu0 0.0
        %1304 = vmatpush1.msra.mxu0 0.0
        %1305 = vmatprep.subr.mxu0 0.0
        %1306 = vmatpush1.msra.mxu0 0.0
        %1307 = vmatprep.subr.mxu0 0.0
        %1308 = vmatpush1.msra.mxu0 0.0
        %1309 = vmatprep.subr.mxu0 0.0
        %1310 = vmatpush1.msra.mxu0 0.0
        %1311 = vmatprep.subr.mxu0 0.0
        %1312 = vmatpush1.msra.mxu0 0.0
        %1313 = vmatprep.subr.mxu0 0.0
        %1314 = vmatpush1.msra.mxu0 0.0
        %1315 = vmatprep.subr.mxu0 0.0
        %1316 = vmatpush1.msra.mxu0 0.0
        %1317 = vmatprep.subr.mxu0 0.0
        %1318 = vmatpush1.msra.mxu0 0.0
        %1319 = vmatprep.subr.mxu0 0.0
        %1320 = vmatpush1.msra.mxu0 0.0
        %1321 = vmatprep.subr.mxu0 0.0
        %1322 = vmatpush1.msra.mxu0 0.0
        %1323 = vmatprep.subr.mxu0 0.0
        %1324 = vmatpush1.msra.mxu0 0.0
        %1325 = vmatprep.subr.mxu0 0.0
        %1326 = vmatpush1.msra.mxu0 0.0
        %1327 = vmatprep.subr.mxu0 0.0
        %1328 = vmatpush1.msra.mxu0 0.0
        %1329 = vmatprep.subr.mxu0 0.0
        %1330 = vmatpush1.msra.mxu0 0.0
        %1331 = vmatprep.subr.mxu0 0.0
        %1332 = vmatpush1.msra.mxu0 0.0
        %1333 = vmatprep.subr.mxu0 0.0
        %1334 = vmatpush1.msra.mxu0 0.0
        %1335 = vmatprep.subr.mxu0 0.0
        %1336 = vmatpush1.msra.mxu0 0.0
        %1337 = vmatprep.subr.mxu0 0.0
        %1338 = vmatpush1.msra.mxu0 0.0
        %1339 = vmatprep.subr.mxu0 0.0
        %1340 = vmatpush1.msra.mxu0 0.0
        %1341 = vmatprep.subr.mxu0 0.0
        %1342 = vmatpush1.msra.mxu0 0.0
        %1343 = vmatprep.subr.mxu0 0.0
        %1344 = vmatpush1.msra.mxu0 0.0
        %1345 = vmatprep.subr.mxu0 0.0
        %1346 = vmatpush1.msra.mxu0 0.0
        %1347 = vmatprep.subr.mxu0 0.0
        %1348 = vmatpush1.msra.mxu0 0.0
        %1349 = vmatprep.mubr.f32.mxu0 0.0
        %1350 = vmatmul.mubr.f32.gmra.mrb[0].mxu0 %v1283
        %v1351 = vpop.f32.mrb[0].mxu0
        %v1352 = vadd.f32 %v1280, %v1351
        %v1353 = vpop.f32.mrb[0].mxu0
        %1354 = vdwg.mxu0
        %vm1355 = vcmp.gt.f32.partialorder %v1352, 0.0
        %v1356 = vmul.f32 %v1352, 0.01
        %v1357 = vsel %vm1355, %v1352, %v1356
        %v1358 = vld [vmem:[%s13] sm:$0xf]
        %v1359 = vld [vmem:[%s15] sm:$0x1]
        %vm1360 = vcmask 31744
        %v1362 = vsel %vm1360, %v1357, 0
        %vm1364 = vcmask 1043456
        %v1366 = vsel %vm1364, %v1358, 0
        %1368 = vmatprep.subr.mxu0 0.0
        %1369 = vmatpush1.msra.mxu0 %v1366
        %1370 = vmatprep.subr.mxu0 0.0
        %1371 = vmatpush1.msra.mxu0 0.0
        %1372 = vmatprep.subr.mxu0 0.0
        %1373 = vmatpush1.msra.mxu0 0.0
        %1374 = vmatprep.subr.mxu0 0.0
        %1375 = vmatpush1.msra.mxu0 0.0
        %1376 = vmatprep.subr.mxu0 0.0
        %1377 = vmatpush1.msra.mxu0 0.0
        %1378 = vmatprep.subr.mxu0 0.0
        %1379 = vmatpush1.msra.mxu0 0.0
        %1380 = vmatprep.subr.mxu0 0.0
        %1381 = vmatpush1.msra.mxu0 0.0
        %1382 = vmatprep.subr.mxu0 0.0
        %1383 = vmatpush1.msra.mxu0 0.0
        %1384 = vmatprep.subr.mxu0 0.0
        %1385 = vmatpush1.msra.mxu0 0.0
        %1386 = vmatprep.subr.mxu0 0.0
        %1387 = vmatpush1.msra.mxu0 0.0
        %1388 = vmatprep.subr.mxu0 0.0
        %1389 = vmatpush1.msra.mxu0 0.0
        %1390 = vmatprep.subr.mxu0 0.0
        %1391 = vmatpush1.msra.mxu0 0.0
        %1392 = vmatprep.subr.mxu0 0.0
        %1393 = vmatpush1.msra.mxu0 0.0
        %1394 = vmatprep.subr.mxu0 0.0
        %1395 = vmatpush1.msra.mxu0 0.0
        %1396 = vmatprep.subr.mxu0 0.0
        %1397 = vmatpush1.msra.mxu0 0.0
        %1398 = vmatprep.subr.mxu0 0.0
        %1399 = vmatpush1.msra.mxu0 0.0
        %1400 = vmatprep.subr.mxu0 0.0
        %1401 = vmatpush1.msra.mxu0 0.0
        %1402 = vmatprep.subr.mxu0 0.0
        %1403 = vmatpush1.msra.mxu0 0.0
        %1404 = vmatprep.subr.mxu0 0.0
        %1405 = vmatpush1.msra.mxu0 0.0
        %1406 = vmatprep.subr.mxu0 0.0
        %1407 = vmatpush1.msra.mxu0 0.0
        %1408 = vmatprep.subr.mxu0 0.0
        %1409 = vmatpush1.msra.mxu0 0.0
        %1410 = vmatprep.subr.mxu0 0.0
        %1411 = vmatpush1.msra.mxu0 0.0
        %1412 = vmatprep.subr.mxu0 0.0
        %1413 = vmatpush1.msra.mxu0 0.0
        %1414 = vmatprep.subr.mxu0 0.0
        %1415 = vmatpush1.msra.mxu0 0.0
        %1416 = vmatprep.subr.mxu0 0.0
        %1417 = vmatpush1.msra.mxu0 0.0
        %1418 = vmatprep.subr.mxu0 0.0
        %1419 = vmatpush1.msra.mxu0 0.0
        %1420 = vmatprep.subr.mxu0 0.0
        %1421 = vmatpush1.msra.mxu0 0.0
        %1422 = vmatprep.subr.mxu0 0.0
        %1423 = vmatpush1.msra.mxu0 0.0
        %1424 = vmatprep.subr.mxu0 0.0
        %1425 = vmatpush1.msra.mxu0 0.0
        %1426 = vmatprep.subr.mxu0 0.0
        %1427 = vmatpush1.msra.mxu0 0.0
        %1428 = vmatprep.subr.mxu0 0.0
        %1429 = vmatpush1.msra.mxu0 0.0
        %1430 = vmatprep.subr.mxu0 0.0
        %1431 = vmatpush1.msra.mxu0 0.0
        %1432 = vmatprep.mubr.f32.mxu0 0.0
        %1433 = vmatmul.mubr.f32.gmra.mrb[0].mxu0 %v1362
        %v1434 = vpop.f32.mrb[0].mxu0
        %v1435 = vadd.f32 %v1359, %v1434
        %v1436 = vpop.f32.mrb[0].mxu0
        %1437 = vdwg.mxu0
        %v1438 = vld [vmem:[%s17] sm:$0xff]
        %v1439 = vld [vmem:[%s19] sm:$0xff]
        %v1440 = vlaneseq
        %v1441 = vshrl.u32 %v1440, 7
        %v1442 = vsub.s32 0, %v1441
        %v1443 = vrot.slane %v1435, %v1442
        %v1444 = vmul.f32 %v1439, %v1443
        %v1445 = vadd.f32 %v1438, %v1444
        %v1446 = vld [vmem:[%s21] sm:$0xff]
        %v1447 = vadd.f32 %v1445, %v1446
        %v1448 = vlaneseq
        %v1449 = vshrl.u32 %v1448, 7
        %v1450 = vlaneseq
        %v1451 = vand.u32 %v1450, 127
        %vm1452 = vcmp.le.s32.totalorder %v1451, %v1449
        %v1453 = vld [vmem:[%s23] sm:$0x1]
        %v1454 = vld [vmem:[%s25] sm:$0x1]
        %v1455 = vsel %vm1281, %v1447, 0.0
        %1456 = vadd.xlane.f32.xlu0 %v1455
        %v1457 = vpop.xlane.xlu0 %1456
        %v1458 = vrcp.pop 64.0
        %v1459 = vmul.f32 %v1457, %v1458
        %v1460 = vsub.f32 %v1447, %v1459
        %v1461 = vmul.f32 %v1460, %v1460
        %v1462 = vsel %vm1281, %v1461, 0.0
        %1463 = vadd.xlane.f32.xlu0 %v1462
        %v1464 = vpop.xlane.xlu0 %1463
        %v1465 = vmul.f32 %v1464, %v1458
        %v1466 = vadd.f32 %v1465, 1e-05
        %v1467 = vrsqrt.pop %v1466
        %v1468 = vmul.f32 %v1460, %v1467
        %v1470 = vlaneseq
        %v1471 = vshrl.u32 %v1470, 7
        %v1472 = vsub.s32 0, %v1471
        %v1473 = vrot.slane %v1453, %v1472
        %v1475 = vmul.f32 %v1468, %v1473
        %v1477 = vlaneseq
        %v1478 = vshrl.u32 %v1477, 7
        %v1479 = vsub.s32 0, %v1478
        %v1480 = vrot.slane %v1454, %v1479
        %v1482 = vadd.f32 %v1475, %v1480
        %v1483 = vld [vmem:[%s27] sm:$0xff]
        %v1484 = vld [vmem:[%s27 + $0x8] sm:$0xff]
        %v1485 = vld [vmem:[%s27 + $0x10] sm:$0xff]
        %v1486 = vld [vmem:[%s27 + $0x18] sm:$0xff]
        %v1487 = vld [vmem:[%s27 + $0x20] sm:$0xff]
        %v1488 = vld [vmem:[%s27 + $0x28] sm:$0xff]
        %v1489 = vld [vmem:[%s27 + $0x30] sm:$0xff]
        %v1490 = vld [vmem:[%s27 + $0x38] sm:$0xff]
        %v1491 = vld [vmem:[%s27 + $0x40] sm:$0xff]
        %v1492 = vld [vmem:[%s27 + $0x48] sm:$0xff]
        %v1493 = vld [vmem:[%s27 + $0x50] sm:$0xff]
        %v1494 = vld [vmem:[%s27 + $0x58] sm:$0xff]
        %v1495 = vld [vmem:[%s27 + $0x60] sm:$0xff]
        %v1496 = vld [vmem:[%s27 + $0x68] sm:$0xff]
        %v1497 = vld [vmem:[%s27 + $0x70] sm:$0xff]
        %v1498 = vld [vmem:[%s27 + $0x78] sm:$0xff]
        %v1499 = vld [vmem:[%s29] sm:$0x3]
        %v1501 = vlaneseq
        %v1502 = vshrl.u32 %v1501, 7
        %v1503 = vsub.s32 0, %v1502
        %v1504 = vrot.slane %v1499, %v1503
        %v1505 = vlaneseq
        %v1506 = vshrl.u32 %v1505, 7
        %v1507 = vsub.s32 1, %v1506
        %v1508 = vrot.slane %v1499, %v1507
        %v1512 = vsel %vm1281, %v1482, 0
        %1514 = vmatprep.subr.mxu0 %v1484
        %1515 = vmatpush1.msra.mxu0 %v1483
        %1516 = vmatprep.subr.mxu0 %v1486
        %1517 = vmatpush1.msra.mxu0 %v1485
        %1518 = vmatprep.subr.mxu0 %v1488
        %1519 = vmatpush1.msra.mxu0 %v1487
        %1520 = vmatprep.subr.mxu0 %v1490
        %1521 = vmatpush1.msra.mxu0 %v1489
        %1522 = vmatprep.subr.mxu0 %v1492
        %1523 = vmatpush1.msra.mxu0 %v1491
        %1524 = vmatprep.subr.mxu0 %v1494
        %1525 = vmatpush1.msra.mxu0 %v1493
        %1526 = vmatprep.subr.mxu0 %v1496
        %1527 = vmatpush1.msra.mxu0 %v1495
        %1528 = vmatprep.subr.mxu0 %v1498
        %1529 = vmatpush1.msra.mxu0 %v1497
        %1530 = vmatprep.subr.mxu0 0.0
        %1531 = vmatpush1.msra.mxu0 0.0
        %1532 = vmatprep.subr.mxu0 0.0
        %1533 = vmatpush1.msra.mxu0 0.0
        %1534 = vmatprep.subr.mxu0 0.0
        %1535 = vmatpush1.msra.mxu0 0.0
        %1536 = vmatprep.subr.mxu0 0.0
        %1537 = vmatpush1.msra.mxu0 0.0
        %1538 = vmatprep.subr.mxu0 0.0
        %1539 = vmatpush1.msra.mxu0 0.0
        %1540 = vmatprep.subr.mxu0 0.0
        %1541 = vmatpush1.msra.mxu0 0.0
        %1542 = vmatprep.subr.mxu0 0.0
        %1543 = vmatpush1.msra.mxu0 0.0
        %1544 = vmatprep.subr.mxu0 0.0
        %1545 = vmatpush1.msra.mxu0 0.0
        %1546 = vmatprep.subr.mxu0 0.0
        %1547 = vmatpush1.msra.mxu0 0.0
        %1548 = vmatprep.subr.mxu0 0.0
        %1549 = vmatpush1.msra.mxu0 0.0
        %1550 = vmatprep.subr.mxu0 0.0
        %1551 = vmatpush1.msra.mxu0 0.0
        %1552 = vmatprep.subr.mxu0 0.0
        %1553 = vmatpush1.msra.mxu0 0.0
        %1554 = vmatprep.subr.mxu0 0.0
        %1555 = vmatpush1.msra.mxu0 0.0
        %1556 = vmatprep.subr.mxu0 0.0
        %1557 = vmatpush1.msra.mxu0 0.0
        %1558 = vmatprep.subr.mxu0 0.0
        %1559 = vmatpush1.msra.mxu0 0.0
        %1560 = vmatprep.subr.mxu0 0.0
        %1561 = vmatpush1.msra.mxu0 0.0
        %1562 = vmatprep.subr.mxu0 0.0
        %1563 = vmatpush1.msra.mxu0 0.0
        %1564 = vmatprep.subr.mxu0 0.0
        %1565 = vmatpush1.msra.mxu0 0.0
        %1566 = vmatprep.subr.mxu0 0.0
        %1567 = vmatpush1.msra.mxu0 0.0
        %1568 = vmatprep.subr.mxu0 0.0
        %1569 = vmatpush1.msra.mxu0 0.0
        %1570 = vmatprep.subr.mxu0 0.0
        %1571 = vmatpush1.msra.mxu0 0.0
        %1572 = vmatprep.subr.mxu0 0.0
        %1573 = vmatpush1.msra.mxu0 0.0
        %1574 = vmatprep.subr.mxu0 0.0
        %1575 = vmatpush1.msra.mxu0 0.0
        %1576 = vmatprep.subr.mxu0 0.0
        %1577 = vmatpush1.msra.mxu0 0.0
        %1578 = vmatprep.mubr.f32.mxu0 0.0
        %1579 = vmatmul.mubr.f32.gmra.mrb[0].mxu0 %v1512
        %v1580 = vpop.f32.mrb[0].mxu0
        %v1581 = vadd.f32 %v1504, %v1580
        %v1582 = vpop.f32.mrb[0].mxu0
        %v1583 = vadd.f32 %v1508, %v1582
        %1584 = vdwg.mxu0
        %v1585 = vld [vmem:[%s31] sm:$0xff]
        %v1586 = vld [vmem:[%s31 + $0x8] sm:$0xff]
        %v1587 = vld [vmem:[%s31 + $0x10] sm:$0xff]
        %v1588 = vld [vmem:[%s31 + $0x18] sm:$0xff]
        %v1589 = vld [vmem:[%s31 + $0x20] sm:$0xff]
        %v1590 = vld [vmem:[%s31 + $0x28] sm:$0xff]
        %v1591 = vld [vmem:[%s31 + $0x30] sm:$0xff]
        %v1592 = vld [vmem:[%s31 + $0x38] sm:$0xff]
        %1594 = vrot.lane.b32.xlu0 %v1581, 64
        %v1595 = vpop.permute.xlu0 %1594
        %vm1596 = vcmask 130048
        %v1597 = vsel %vm1596, %v1581, 0
        %v1599 = vsel %vm1596, %v1595, 0
        %1601 = vmatprep.subr.mxu0 0.0
        %1602 = vmatpush1.xpose.msra.mxu0 %v1599
        %1603 = vmatprep.subr.mxu0 0.0
        %1604 = vmatpush1.xpose.msra.mxu0 0.0
        %1605 = vmatprep.subr.mxu0 0.0
        %1606 = vmatpush1.xpose.msra.mxu0 0.0
        %1607 = vmatprep.subr.mxu0 0.0
        %1608 = vmatpush1.xpose.msra.mxu0 0.0
        %1609 = vmatprep.subr.mxu0 0.0
        %1610 = vmatpush1.xpose.msra.mxu0 0.0
        %1611 = vmatprep.subr.mxu0 0.0
        %1612 = vmatpush1.xpose.msra.mxu0 0.0
        %1613 = vmatprep.subr.mxu0 0.0
        %1614 = vmatpush1.xpose.msra.mxu0 0.0
        %1615 = vmatprep.subr.mxu0 0.0
        %1616 = vmatpush1.xpose.msra.mxu0 0.0
        %1617 = vmatprep.subr.mxu0 0.0
        %1618 = vmatpush1.xpose.msra.mxu0 0.0
        %1619 = vmatprep.subr.mxu0 0.0
        %1620 = vmatpush1.xpose.msra.mxu0 0.0
        %1621 = vmatprep.subr.mxu0 0.0
        %1622 = vmatpush1.xpose.msra.mxu0 0.0
        %1623 = vmatprep.subr.mxu0 0.0
        %1624 = vmatpush1.xpose.msra.mxu0 0.0
        %1625 = vmatprep.subr.mxu0 0.0
        %1626 = vmatpush1.xpose.msra.mxu0 0.0
        %1627 = vmatprep.subr.mxu0 0.0
        %1628 = vmatpush1.xpose.msra.mxu0 0.0
        %1629 = vmatprep.subr.mxu0 0.0
        %1630 = vmatpush1.xpose.msra.mxu0 0.0
        %1631 = vmatprep.subr.mxu0 0.0
        %1632 = vmatpush1.xpose.msra.mxu0 0.0
        %1633 = vmatprep.subr.mxu0 0.0
        %1634 = vmatpush1.xpose.msra.mxu0 0.0
        %1635 = vmatprep.subr.mxu0 0.0
        %1636 = vmatpush1.xpose.msra.mxu0 0.0
        %1637 = vmatprep.subr.mxu0 0.0
        %1638 = vmatpush1.xpose.msra.mxu0 0.0
        %1639 = vmatprep.subr.mxu0 0.0
        %1640 = vmatpush1.xpose.msra.mxu0 0.0
        %1641 = vmatprep.subr.mxu0 0.0
        %1642 = vmatpush1.xpose.msra.mxu0 0.0
        %1643 = vmatprep.subr.mxu0 0.0
        %1644 = vmatpush1.xpose.msra.mxu0 0.0
        %1645 = vmatprep.subr.mxu0 0.0
        %1646 = vmatpush1.xpose.msra.mxu0 0.0
        %1647 = vmatprep.subr.mxu0 0.0
        %1648 = vmatpush1.xpose.msra.mxu0 0.0
        %1649 = vmatprep.subr.mxu0 0.0
        %1650 = vmatpush1.xpose.msra.mxu0 0.0
        %1651 = vmatprep.subr.mxu0 0.0
        %1652 = vmatpush1.xpose.msra.mxu0 0.0
        %1653 = vmatprep.subr.mxu0 0.0
        %1654 = vmatpush1.xpose.msra.mxu0 0.0
        %1655 = vmatprep.subr.mxu0 0.0
        %1656 = vmatpush1.xpose.msra.mxu0 0.0
        %1657 = vmatprep.subr.mxu0 0.0
        %1658 = vmatpush1.xpose.msra.mxu0 0.0
        %1659 = vmatprep.subr.mxu0 0.0
        %1660 = vmatpush1.xpose.msra.mxu0 0.0
        %1661 = vmatprep.subr.mxu0 0.0
        %1662 = vmatpush1.xpose.msra.mxu0 0.0
        %1663 = vmatprep.subr.mxu0 0.0
        %1664 = vmatpush1.xpose.msra.mxu0 0.0
        %1665 = vmatprep.mubr.f32.mxu0 0.0
        %1666 = vmatmul.mubr.f32.gmra.mrb[0].mxu0 %v1597
        %v1667 = vpop.f32.mrb[0].mxu0
        %v1668 = vadd.f32 0.0, %v1667
        %v1669 = vpop.f32.mrb[0].mxu0
        %1670 = vdwg.mxu0
        %v1671 = vmul.f32 %v1668, 0.25
        %v1672 = vsel %vm1452, %v1671, -1e+30
        %vm1673 = vcmask 64512
        %v1674 = vsel %vm1673, %v1672, -inf
        %1675 = vmax.xlane.f32.xlu0 %v1674
        %v1676 = vpop.xlane.xlu0 %1675
        %v1677 = vsub.f32 %v1672, %v1676
        %v1678 = vmul.f32 %v1677, 1.442695
        %v1679 = vpow.pop %v1678
        %v1680 = vsel %vm1673, %v1679, 0.0
        %1681 = vadd.xlane.f32.xlu0 %v1680
        %v1682 = vpop.xlane.xlu0 %1681
        %v1683 = vrcp.pop %v1682
        %v1684 = vmul.f32 %v1679, %v1683
        %v1686 = vsel %vm1673, %v1684, 0
        %1688 = vmatprep.subr.mxu0 0.0
        %1689 = vmatpush1.msra.mxu0 %v1583
        %1690 = vmatprep.subr.mxu0 0.0
        %1691 = vmatpush1.msra.mxu0 0.0
        %1692 = vmatprep.subr.mxu0 0.0
        %1693 = vmatpush1.msra.mxu0 0.0
        %1694 = vmatprep.subr.mxu0 0.0
        %1695 = vmatpush1.msra.mxu0 0.0
        %1696 = vmatprep.subr.mxu0 0.0
        %1697 = vmatpush1.msra.mxu0 0.0
        %1698 = vmatprep.subr.mxu0 0.0
        %1699 = vmatpush1.msra.mxu0 0.0
        %1700 = vmatprep.subr.mxu0 0.0
        %1701 = vmatpush1.msra.mxu0 0.0
        %1702 = vmatprep.subr.mxu0 0.0
        %1703 = vmatpush1.msra.mxu0 0.0
        %1704 = vmatprep.subr.mxu0 0.0
        %1705 = vmatpush1.msra.mxu0 0.0
        %1706 = vmatprep.subr.mxu0 0.0
        %1707 = vmatpush1.msra.mxu0 0.0
        %1708 = vmatprep.subr.mxu0 0.0
        %1709 = vmatpush1.msra.mxu0 0.0
        %1710 = vmatprep.subr.mxu0 0.0
        %1711 = vmatpush1.msra.mxu0 0.0
        %1712 = vmatprep.subr.mxu0 0.0
        %1713 = vmatpush1.msra.mxu0 0.0
        %1714 = vmatprep.subr.mxu0 0.0
        %1715 = vmatpush1.msra.mxu0 0.0
        %1716 = vmatprep.subr.mxu0 0.0
        %1717 = vmatpush1.msra.mxu0 0.0
        %1718 = vmatprep.subr.mxu0 0.0
        %1719 = vmatpush1.msra.mxu0 0.0
        %1720 = vmatprep.subr.mxu0 0.0
        %1721 = vmatpush1.msra.mxu0 0.0
        %1722 = vmatprep.subr.mxu0 0.0
        %1723 = vmatpush1.msra.mxu0 0.0
        %1724 = vmatprep.subr.mxu0 0.0
        %1725 = vmatpush1.msra.mxu0 0.0
        %1726 = vmatprep.subr.mxu0 0.0
        %1727 = vmatpush1.msra.mxu0 0.0
        %1728 = vmatprep.subr.mxu0 0.0
        %1729 = vmatpush1.msra.mxu0 0.0
        %1730 = vmatprep.subr.mxu0 0.0
        %1731 = vmatpush1.msra.mxu0 0.0
        %1732 = vmatprep.subr.mxu0 0.0
        %1733 = vmatpush1.msra.mxu0 0.0
        %1734 = vmatprep.subr.mxu0 0.0
        %1735 = vmatpush1.msra.mxu0 0.0
        %1736 = vmatprep.subr.mxu0 0.0
        %1737 = vmatpush1.msra.mxu0 0.0
        %1738 = vmatprep.subr.mxu0 0.0
        %1739 = vmatpush1.msra.mxu0 0.0
        %1740 = vmatprep.subr.mxu0 0.0
        %1741 = vmatpush1.msra.mxu0 0.0
        %1742 = vmatprep.subr.mxu0 0.0
        %1743 = vmatpush1.msra.mxu0 0.0
        %1744 = vmatprep.subr.mxu0 0.0
        %1745 = vmatpush1.msra.mxu0 0.0
        %1746 = vmatprep.subr.mxu0 0.0
        %1747 = vmatpush1.msra.mxu0 0.0
        %1748 = vmatprep.subr.mxu0 0.0
        %1749 = vmatpush1.msra.mxu0 0.0
        %1750 = vmatprep.subr.mxu0 0.0
        %1751 = vmatpush1.msra.mxu0 0.0
        %1752 = vmatprep.mubr.f32.mxu0 0.0
        %1753 = vmatmul.mubr.f32.gmra.mrb[0].mxu0 %v1686
        %v1754 = vpop.f32.mrb[0].mxu0
        %v1755 = vadd.f32 0.0, %v1754
        %v1756 = vpop.f32.mrb[0].mxu0
        %1757 = vdwg.mxu0
        %1758 = vrot.lane.b32.xlu0 %v1581, 112
        %v1759 = vpop.permute.xlu0 %1758
        %1760 = vrot.lane.b32.xlu0 %v1581, 48
        %v1761 = vpop.permute.xlu0 %1760
        %v1762 = vsel %vm1596, %v1759, 0
        %v1764 = vsel %vm1596, %v1761, 0
        %1766 = vmatprep.subr.mxu0 0.0
        %1767 = vmatpush1.xpose.msra.mxu0 %v1764
        %1768 = vmatprep.subr.mxu0 0.0
        %1769 = vmatpush1.xpose.msra.mxu0 0.0
        %1770 = vmatprep.subr.mxu0 0.0
        %1771 = vmatpush1.xpose.msra.mxu0 0.0
        %1772 = vmatprep.subr.mxu0 0.0
        %1773 = vmatpush1.xpose.msra.mxu0 0.0
        %1774 = vmatprep.subr.mxu0 0.0
        %1775 = vmatpush1.xpose.msra.mxu0 0.0
        %1776 = vmatprep.subr.mxu0 0.0
        %1777 = vmatpush1.xpose.msra.mxu0 0.0
        %1778 = vmatprep.subr.mxu0 0.0
        %1779 = vmatpush1.xpose.msra.mxu0 0.0
        %1780 = vmatprep.subr.mxu0 0.0
        %1781 = vmatpush1.xpose.msra.mxu0 0.0
        %1782 = vmatprep.subr.mxu0 0.0
        %1783 = vmatpush1.xpose.msra.mxu0 0.0
        %1784 = vmatprep.subr.mxu0 0.0
        %1785 = vmatpush1.xpose.msra.mxu0 0.0
        %1786 = vmatprep.subr.mxu0 0.0
        %1787 = vmatpush1.xpose.msra.mxu0 0.0
        %1788 = vmatprep.subr.mxu0 0.0
        %1789 = vmatpush1.xpose.msra.mxu0 0.0
        %1790 = vmatprep.subr.mxu0 0.0
        %1791 = vmatpush1.xpose.msra.mxu0 0.0
        %1792 = vmatprep.subr.mxu0 0.0
        %1793 = vmatpush1.xpose.msra.mxu0 0.0
        %1794 = vmatprep.subr.mxu0 0.0
        %1795 = vmatpush1.xpose.msra.mxu0 0.0
        %1796 = vmatprep.subr.mxu0 0.0
        %1797 = vmatpush1.xpose.msra.mxu0 0.0
        %1798 = vmatprep.subr.mxu0 0.0
        %1799 = vmatpush1.xpose.msra.mxu0 0.0
        %1800 = vmatprep.subr.mxu0 0.0
        %1801 = vmatpush1.xpose.msra.mxu0 0.0
        %1802 = vmatprep.subr.mxu0 0.0
        %1803 = vmatpush1.xpose.msra.mxu0 0.0
        %1804 = vmatprep.subr.mxu0 0.0
        %1805 = vmatpush1.xpose.msra.mxu0 0.0
        %1806 = vmatprep.subr.mxu0 0.0
        %1807 = vmatpush1.xpose.msra.mxu0 0.0
        %1808 = vmatprep.subr.mxu0 0.0
        %1809 = vmatpush1.xpose.msra.mxu0 0.0
        %1810 = vmatprep.subr.mxu0 0.0
        %1811 = vmatpush1.xpose.msra.mxu0 0.0
        %1812 = vmatprep.subr.mxu0 0.0
        %1813 = vmatpush1.xpose.msra.mxu0 0.0
        %1814 = vmatprep.subr.mxu0 0.0
        %1815 = vmatpush1.xpose.msra.mxu0 0.0
        %1816 = vmatprep.subr.mxu0 0.0
        %1817 = vmatpush1.xpose.msra.mxu0 0.0
        %1818 = vmatprep.subr.mxu0 0.0
        %1819 = vmatpush1.xpose.msra.mxu0 0.0
        %1820 = vmatprep.subr.mxu0 0.0
        %1821 = vmatpush1.xpose.msra.mxu0 0.0
        %1822 = vmatprep.subr.mxu0 0.0
        %1823 = vmatpush1.xpose.msra.mxu0 0.0
        %1824 = vmatprep.subr.mxu0 0.0
        %1825 = vmatpush1.xpose.msra.mxu0 0.0
        %1826 = vmatprep.subr.mxu0 0.0
        %1827 = vmatpush1.xpose.msra.mxu0 0.0
        %1828 = vmatprep.subr.mxu0 0.0
        %1829 = vmatpush1.xpose.msra.mxu0 0.0
        %1830 = vmatprep.mubr.f32.mxu0 0.0
        %1831 = vmatmul.mubr.f32.gmra.mrb[0].mxu0 %v1762
        %v1832 = vpop.f32.mrb[0].mxu0
        %v1833 = vadd.f32 0.0, %v1832
        %v1834 = vpop.f32.mrb[0].mxu0
        %1835 = vdwg.mxu0
        %v1836 = vmul.f32 %v1833, 0.25
        %v1837 = vsel %vm1452, %v1836, -1e+30
        %v1838 = vsel %vm1673, %v1837, -inf
        %1839 = vmax.xlane.f32.xlu0 %v1838
        %v1840 = vpop.xlane.xlu0 %1839
        %v1841 = vsub.f32 %v1837, %v1840
        %v1842 = vmul.f32 %v1841, 1.442695
        %v1843 = vpow.pop %v1842
        %v1844 = vsel %vm1673, %v1843, 0.0
        %1845 = vadd.xlane.f32.xlu0 %v1844
        %v1846 = vpop.xlane.xlu0 %1845
        %v1847 = vrcp.pop %v1846
        %v1848 = vmul.f32 %v1843, %v1847
        %1850 = vrot.lane.b32.xlu0 %v1583, 112
        %v1851 = vpop.permute.xlu0 %1850
        %v1854 = vsel %vm1673, %v1848, 0
        %1856 = vmatprep.subr.mxu0 0.0
        %1857 = vmatpush1.msra.mxu0 %v1851
        %1858 = vmatprep.subr.mxu0 0.0
        %1859 = vmatpush1.msra.mxu0 0.0
        %1860 = vmatprep.subr.mxu0 0.0
        %1861 = vmatpush1.msra.mxu0 0.0
        %1862 = vmatprep.subr.mxu0 0.0
        %1863 = vmatpush1.msra.mxu0 0.0
        %1864 = vmatprep.subr.mxu0 0.0
        %1865 = vmatpush1.msra.mxu0 0.0
        %1866 = vmatprep.subr.mxu0 0.0
        %1867 = vmatpush1.msra.mxu0 0.0
        %1868 = vmatprep.subr.mxu0 0.0
        %1869 = vmatpush1.msra.mxu0 0.0
        %1870 = vmatprep.subr.mxu0 0.0
        %1871 = vmatpush1.msra.mxu0 0.0
        %1872 = vmatprep.subr.mxu0 0.0
        %1873 = vmatpush1.msra.mxu0 0.0
        %1874 = vmatprep.subr.mxu0 0.0
        %1875 = vmatpush1.msra.mxu0 0.0
        %1876 = vmatprep.subr.mxu0 0.0
        %1877 = vmatpush1.msra.mxu0 0.0
        %1878 = vmatprep.subr.mxu0 0.0
        %1879 = vmatpush1.msra.mxu0 0.0
        %1880 = vmatprep.subr.mxu0 0.0
        %1881 = vmatpush1.msra.mxu0 0.0
        %1882 = vmatprep.subr.mxu0 0.0
        %1883 = vmatpush1.msra.mxu0 0.0
        %1884 = vmatprep.subr.mxu0 0.0
        %1885 = vmatpush1.msra.mxu0 0.0
        %1886 = vmatprep.subr.mxu0 0.0
        %1887 = vmatpush1.msra.mxu0 0.0
        %1888 = vmatprep.subr.mxu0 0.0
        %1889 = vmatpush1.msra.mxu0 0.0
        %1890 = vmatprep.subr.mxu0 0.0
        %1891 = vmatpush1.msra.mxu0 0.0
        %1892 = vmatprep.subr.mxu0 0.0
        %1893 = vmatpush1.msra.mxu0 0.0
        %1894 = vmatprep.subr.mxu0 0.0
        %1895 = vmatpush1.msra.mxu0 0.0
        %1896 = vmatprep.subr.mxu0 0.0
        %1897 = vmatpush1.msra.mxu0 0.0
        %1898 = vmatprep.subr.mxu0 0.0
        %1899 = vmatpush1.msra.mxu0 0.0
        %1900 = vmatprep.subr.mxu0 0.0
        %1901 = vmatpush1.msra.mxu0 0.0
        %1902 = vmatprep.subr.mxu0 0.0
        %1903 = vmatpush1.msra.mxu0 0.0
        %1904 = vmatprep.subr.mxu0 0.0
        %1905 = vmatpush1.msra.mxu0 0.0
        %1906 = vmatprep.subr.mxu0 0.0
        %1907 = vmatpush1.msra.mxu0 0.0
        %1908 = vmatprep.subr.mxu0 0.0
        %1909 = vmatpush1.msra.mxu0 0.0
        %1910 = vmatprep.subr.mxu0 0.0
        %1911 = vmatpush1.msra.mxu0 0.0
        %1912 = vmatprep.subr.mxu0 0.0
        %1913 = vmatpush1.msra.mxu0 0.0
        %1914 = vmatprep.subr.mxu0 0.0
        %1915 = vmatpush1.msra.mxu0 0.0
        %1916 = vmatprep.subr.mxu0 0.0
        %1917 = vmatpush1.msra.mxu0 0.0
        %1918 = vmatprep.subr.mxu0 0.0
        %1919 = vmatpush1.msra.mxu0 0.0
        %1920 = vmatprep.mubr.f32.mxu0 0.0
        %1921 = vmatmul.mubr.f32.gmra.mrb[0].mxu0 %v1854
        %v1922 = vpop.f32.mrb[0].mxu0
        %v1923 = vadd.f32 0.0, %v1922
        %v1924 = vpop.f32.mrb[0].mxu0
        %1925 = vdwg.mxu0
        %v1927 = vsel %vm1596, %v1923, 0
        %1929 = vmatprep.subr.mxu0 0.0
        %1930 = vmatpush1.msra.mxu0 %v1587
        %1931 = vmatprep.subr.mxu0 0.0
        %1932 = vmatpush1.msra.mxu0 %v1588
        %1933 = vmatprep.subr.mxu0 0.0
        %1934 = vmatpush1.msra.mxu0 0.0
        %1935 = vmatprep.subr.mxu0 0.0
        %1936 = vmatpush1.msra.mxu0 0.0
        %1937 = vmatprep.subr.mxu0 0.0
        %1938 = vmatpush1.msra.mxu0 0.0
        %1939 = vmatprep.subr.mxu0 0.0
        %1940 = vmatpush1.msra.mxu0 0.0
        %1941 = vmatprep.subr.mxu0 0.0
        %1942 = vmatpush1.msra.mxu0 0.0
        %1943 = vmatprep.subr.mxu0 0.0
        %1944 = vmatpush1.msra.mxu0 0.0
        %1945 = vmatprep.subr.mxu0 0.0
        %1946 = vmatpush1.msra.mxu0 0.0
        %1947 = vmatprep.subr.mxu0 0.0
        %1948 = vmatpush1.msra.mxu0 0.0
        %1949 = vmatprep.subr.mxu0 0.0
        %1950 = vmatpush1.msra.mxu0 0.0
        %1951 = vmatprep.subr.mxu0 0.0
        %1952 = vmatpush1.msra.mxu0 0.0
        %1953 = vmatprep.subr.mxu0 0.0
        %1954 = vmatpush1.msra.mxu0 0.0
        %1955 = vmatprep.subr.mxu0 0.0
        %1956 = vmatpush1.msra.mxu0 0.0
        %1957 = vmatprep.subr.mxu0 0.0
        %1958 = vmatpush1.msra.mxu0 0.0
        %1959 = vmatprep.subr.mxu0 0.0
        %1960 = vmatpush1.msra.mxu0 0.0
        %1961 = vmatprep.subr.mxu0 0.0
        %1962 = vmatpush1.msra.mxu0 0.0
        %1963 = vmatprep.subr.mxu0 0.0
        %1964 = vmatpush1.msra.mxu0 0.0
        %1965 = vmatprep.subr.mxu0 0.0
        %1966 = vmatpush1.msra.mxu0 0.0
        %1967 = vmatprep.subr.mxu0 0.0
        %1968 = vmatpush1.msra.mxu0 0.0
        %1969 = vmatprep.subr.mxu0 0.0
        %1970 = vmatpush1.msra.mxu0 0.0
        %1971 = vmatprep.subr.mxu0 0.0
        %1972 = vmatpush1.msra.mxu0 0.0
        %1973 = vmatprep.subr.mxu0 0.0
        %1974 = vmatpush1.msra.mxu0 0.0
        %1975 = vmatprep.subr.mxu0 0.0
        %1976 = vmatpush1.msra.mxu0 0.0
        %1977 = vmatprep.subr.mxu0 0.0
        %1978 = vmatpush1.msra.mxu0 0.0
        %1979 = vmatprep.subr.mxu0 0.0
        %1980 = vmatpush1.msra.mxu0 0.0
        %1981 = vmatprep.subr.mxu0 0.0
        %1982 = vmatpush1.msra.mxu0 0.0
        %1983 = vmatprep.subr.mxu0 0.0
        %1984 = vmatpush1.msra.mxu0 0.0
        %1985 = vmatprep.subr.mxu0 0.0
        %1986 = vmatpush1.msra.mxu0 0.0
        %1987 = vmatprep.subr.mxu0 0.0
        %1988 = vmatpush1.msra.mxu0 0.0
        %1989 = vmatprep.subr.mxu0 0.0
        %1990 = vmatpush1.msra.mxu0 0.0
        %1991 = vmatprep.subr.mxu0 0.0
        %1992 = vmatpush1.msra.mxu0 0.0
        %1993 = vmatprep.mubr.f32.mxu0 0.0
        %1994 = vmatmul.mubr.f32.gmra.mrb[0].mxu0 %v1927
        %v1995 = vpop.f32.mrb[0].mxu0
        %v1996 = vadd.f32 0.0, %v1995
        %v1997 = vpop.f32.mrb[0].mxu0
        %1998 = vdwg.mxu0
        %v2000 = vsel %vm1596, %v1755, 0
        %2002 = vmatprep.subr.mxu0 0.0
        %2003 = vmatpush1.msra.mxu0 %v1585
        %2004 = vmatprep.subr.mxu0 0.0
        %2005 = vmatpush1.msra.mxu0 %v1586
        %2006 = vmatprep.subr.mxu0 0.0
        %2007 = vmatpush1.msra.mxu0 0.0
        %2008 = vmatprep.subr.mxu0 0.0
        %2009 = vmatpush1.msra.mxu0 0.0
        %2010 = vmatprep.subr.mxu0 0.0
        %2011 = vmatpush1.msra.mxu0 0.0
        %2012 = vmatprep.subr.mxu0 0.0
        %2013 = vmatpush1.msra.mxu0 0.0
        %2014 = vmatprep.subr.mxu0 0.0
        %2015 = vmatpush1.msra.mxu0 0.0
        %2016 = vmatprep.subr.mxu0 0.0
        %2017 = vmatpush1.msra.mxu0 0.0
        %2018 = vmatprep.subr.mxu0 0.0
        %2019 = vmatpush1.msra.mxu0 0.0
        %2020 = vmatprep.subr.mxu0 0.0
        %2021 = vmatpush1.msra.mxu0 0.0
        %2022 = vmatprep.subr.mxu0 0.0
        %2023 = vmatpush1.msra.mxu0 0.0
        %2024 = vmatprep.subr.mxu0 0.0
        %2025 = vmatpush1.msra.mxu0 0.0
        %2026 = vmatprep.subr.mxu0 0.0
        %2027 = vmatpush1.msra.mxu0 0.0
        %2028 = vmatprep.subr.mxu0 0.0
        %2029 = vmatpush1.msra.mxu0 0.0
        %2030 = vmatprep.subr.mxu0 0.0
        %2031 = vmatpush1.msra.mxu0 0.0
        %2032 = vmatprep.subr.mxu0 0.0
        %2033 = vmatpush1.msra.mxu0 0.0
        %2034 = vmatprep.subr.mxu0 0.0
        %2035 = vmatpush1.msra.mxu0 0.0
        %2036 = vmatprep.subr.mxu0 0.0
        %2037 = vmatpush1.msra.mxu0 0.0
        %2038 = vmatprep.subr.mxu0 0.0
        %2039 = vmatpush1.msra.mxu0 0.0
        %2040 = vmatprep.subr.mxu0 0.0
        %2041 = vmatpush1.msra.mxu0 0.0
        %2042 = vmatprep.subr.mxu0 0.0
        %2043 = vmatpush1.msra.mxu0 0.0
        %2044 = vmatprep.subr.mxu0 0.0
        %2045 = vmatpush1.msra.mxu0 0.0
        %2046 = vmatprep.subr.mxu0 0.0
        %2047 = vmatpush1.msra.mxu0 0.0
        %2048 = vmatprep.subr.mxu0 0.0
        %2049 = vmatpush1.msra.mxu0 0.0
        %2050 = vmatprep.subr.mxu0 0.0
        %2051 = vmatpush1.msra.mxu0 0.0
        %2052 = vmatprep.subr.mxu0 0.0
        %2053 = vmatpush1.msra.mxu0 0.0
        %2054 = vmatprep.subr.mxu0 0.0
        %2055 = vmatpush1.msra.mxu0 0.0
        %2056 = vmatprep.subr.mxu0 0.0
        %2057 = vmatpush1.msra.mxu0 0.0
        %2058 = vmatprep.subr.mxu0 0.0
        %2059 = vmatpush1.msra.mxu0 0.0
        %2060 = vmatprep.subr.mxu0 0.0
        %2061 = vmatpush1.msra.mxu0 0.0
        %2062 = vmatprep.subr.mxu0 0.0
        %2063 = vmatpush1.msra.mxu0 0.0
        %2064 = vmatprep.subr.mxu0 0.0
        %2065 = vmatpush1.msra.mxu0 0.0
        %2066 = vmatprep.mubr.f32.mxu0 0.0
        %2067 = vmatmul.mubr.f32.gmra.mrb[0].mxu0 %v2000
        %v2068 = vpop.f32.mrb[0].mxu0
        %v2069 = vadd.f32 %v1996, %v2068
        %v2070 = vpop.f32.mrb[0].mxu0
        %2071 = vdwg.mxu0
        %2072 = vrot.lane.b32.xlu0 %v1581, 96
        %v2073 = vpop.permute.xlu0 %2072
        %2074 = vrot.lane.b32.xlu0 %v1581, 32
        %v2075 = vpop.permute.xlu0 %2074
        %v2076 = vsel %vm1596, %v2073, 0
        %v2078 = vsel %vm1596, %v2075, 0
        %2080 = vmatprep.subr.mxu0 0.0
        %2081 = vmatpush1.xpose.msra.mxu0 %v2078
        %2082 = vmatprep.subr.mxu0 0.0
        %2083 = vmatpush1.xpose.msra.mxu0 0.0
        %2084 = vmatprep.subr.mxu0 0.0
        %2085 = vmatpush1.xpose.msra.mxu0 0.0
        %2086 = vmatprep.subr.mxu0 0.0
        %2087 = vmatpush1.xpose.msra.mxu0 0.0
        %2088 = vmatprep.subr.mxu0 0.0
        %2089 = vmatpush1.xpose.msra.mxu0 0.0
        %2090 = vmatprep.subr.mxu0 0.0
        %2091 = vmatpush1.xpose.msra.mxu0 0.0
        %2092 = vmatprep.subr.mxu0 0.0
        %2093 = vmatpush1.xpose.msra.mxu0 0.0
        %2094 = vmatprep.subr.mxu0 0.0
        %2095 = vmatpush1.xpose.msra.mxu0 0.0
        %2096 = vmatprep.subr.mxu0 0.0
        %2097 = vmatpush1.xpose.msra.mxu0 0.0
        %2098 = vmatprep.subr.mxu0 0.0
        %2099 = vmatpush1.xpose.msra.mxu0 0.0
        %2100 = vmatprep.subr.mxu0 0.0
        %2101 = vmatpush1.xpose.msra.mxu0 0.0
        %2102 = vmatprep.subr.mxu0 0.0
        %2103 = vmatpush1.xpose.msra.mxu0 0.0
        %2104 = vmatprep.subr.mxu0 0.0
        %2105 = vmatpush1.xpose.msra.mxu0 0.0
        %2106 = vmatprep.subr.mxu0 0.0
        %2107 = vmatpush1.xpose.msra.mxu0 0.0
        %2108 = vmatprep.subr.mxu0 0.0
        %2109 = vmatpush1.xpose.msra.mxu0 0.0
        %2110 = vmatprep.subr.mxu0 0.0
        %2111 = vmatpush1.xpose.msra.mxu0 0.0
        %2112 = vmatprep.subr.mxu0 0.0
        %2113 = vmatpush1.xpose.msra.mxu0 0.0
        %2114 = vmatprep.subr.mxu0 0.0
        %2115 = vmatpush1.xpose.msra.mxu0 0.0
        %2116 = vmatprep.subr.mxu0 0.0
        %2117 = vmatpush1.xpose.msra.mxu0 0.0
        %2118 = vmatprep.subr.mxu0 0.0
        %2119 = vmatpush1.xpose.msra.mxu0 0.0
        %2120 = vmatprep.subr.mxu0 0.0
        %2121 = vmatpush1.xpose.msra.mxu0 0.0
        %2122 = vmatprep.subr.mxu0 0.0
        %2123 = vmatpush1.xpose.msra.mxu0 0.0
        %2124 = vmatprep.subr.mxu0 0.0
        %2125 = vmatpush1.xpose.msra.mxu0 0.0
        %2126 = vmatprep.subr.mxu0 0.0
        %2127 = vmatpush1.xpose.msra.mxu0 0.0
        %2128 = vmatprep.subr.mxu0 0.0
        %2129 = vmatpush1.xpose.msra.mxu0 0.0
        %2130 = vmatprep.subr.mxu0 0.0
        %2131 = vmatpush1.xpose.msra.mxu0 0.0
        %2132 = vmatprep.subr.mxu0 0.0
        %2133 = vmatpush1.xpose.msra.mxu0 0.0
        %2134 = vmatprep.subr.mxu0 0.0
        %2135 = vmatpush1.xpose.msra.mxu0 0.0
        %2136 = vmatprep.subr.mxu0 0.0
        %2137 = vmatpush1.xpose.msra.mxu0 0.0
        %2138 = vmatprep.subr.mxu0 0.0
        %2139 = vmatpush1.xpose.msra.mxu0 0.0
        %2140 = vmatprep.subr.mxu0 0.0
        %2141 = vmatpush1.xpose.msra.mxu0 0.0
        %2142 = vmatprep.subr.mxu0 0.0
        %2143 = vmatpush1.xpose.msra.mxu0 0.0
        %2144 = vmatprep.mubr.f32.mxu0 0.0
        %2145 = vmatmul.mubr.f32.gmra.mrb[0].mxu0 %v2076
        %v2146 = vpop.f32.mrb[0].mxu0
        %v2147 = vadd.f32 0.0, %v2146
        %v2148 = vpop.f32.mrb[0].mxu0
        %2149 = vdwg.mxu0
        %v2150 = vmul.f32 %v2147, 0.25
        %v2151 = vsel %vm1452, %v2150, -1e+30
        %v2152 = vsel %vm1673, %v2151, -inf
        %2153 = vmax.xlane.f32.xlu0 %v2152
        %v2154 = vpop.xlane.xlu0 %2153
        %v2155 = vsub.f32 %v2151, %v2154
        %v2156 = vmul.f32 %v2155, 1.442695
        %v2157 = vpow.pop %v2156
        %v2158 = vsel %vm1673, %v2157, 0.0
        %2159 = vadd.xlane.f32.xlu0 %v2158
        %v2160 = vpop.xlane.xlu0 %2159
        %v2161 = vrcp.pop %v2160
        %v2162 = vmul.f32 %v2157, %v2161
        %2163 = vrot.lane.b32.xlu0 %v1583, 96
        %v2164 = vpop.permute.xlu0 %2163
        %v2167 = vsel %vm1673, %v2162, 0
        %2169 = vmatprep.subr.mxu0 0.0
        %2170 = vmatpush1.msra.mxu0 %v2164
        %2171 = vmatprep.subr.mxu0 0.0
        %2172 = vmatpush1.msra.mxu0 0.0
        %2173 = vmatprep.subr.mxu0 0.0
        %2174 = vmatpush1.msra.mxu0 0.0
        %2175 = vmatprep.subr.mxu0 0.0
        %2176 = vmatpush1.msra.mxu0 0.0
        %2177 = vmatprep.subr.mxu0 0.0
        %2178 = vmatpush1.msra.mxu0 0.0
        %2179 = vmatprep.subr.mxu0 0.0
        %2180 = vmatpush1.msra.mxu0 0.0
        %2181 = vmatprep.subr.mxu0 0.0
        %2182 = vmatpush1.msra.mxu0 0.0
        %2183 = vmatprep.subr.mxu0 0.0
        %2184 = vmatpush1.msra.mxu0 0.0
        %2185 = vmatprep.subr.mxu0 0.0
        %2186 = vmatpush1.msra.mxu0 0.0
        %2187 = vmatprep.subr.mxu0 0.0
        %2188 = vmatpush1.msra.mxu0 0.0
        %2189 = vmatprep.subr.mxu0 0.0
        %2190 = vmatpush1.msra.mxu0 0.0
        %2191 = vmatprep.subr.mxu0 0.0
        %2192 = vmatpush1.msra.mxu0 0.0
        %2193 = vmatprep.subr.mxu0 0.0
        %2194 = vmatpush1.msra.mxu0 0.0
        %2195 = vmatprep.subr.mxu0 0.0
        %2196 = vmatpush1.msra.mxu0 0.0
        %2197 = vmatprep.subr.mxu0 0.0
        %2198 = vmatpush1.msra.mxu0 0.0
        %2199 = vmatprep.subr.mxu0 0.0
        %2200 = vmatpush1.msra.mxu0 0.0
        %2201 = vmatprep.subr.mxu0 0.0
        %2202 = vmatpush1.msra.mxu0 0.0
        %2203 = vmatprep.subr.mxu0 0.0
        %2204 = vmatpush1.msra.mxu0 0.0
        %2205 = vmatprep.subr.mxu0 0.0
        %2206 = vmatpush1.msra.mxu0 0.0
        %2207 = vmatprep.subr.mxu0 0.0
        %2208 = vmatpush1.msra.mxu0 0.0
        %2209 = vmatprep.subr.mxu0 0.0
        %2210 = vmatpush1.msra.mxu0 0.0
        %2211 = vmatprep.subr.mxu0 0.0
        %2212 = vmatpush1.msra.mxu0 0.0
        %2213 = vmatprep.subr.mxu0 0.0
        %2214 = vmatpush1.msra.mxu0 0.0
        %2215 = vmatprep.subr.mxu0 0.0
        %2216 = vmatpush1.msra.mxu0 0.0
        %2217 = vmatprep.subr.mxu0 0.0
        %2218 = vmatpush1.msra.mxu0 0.0
        %2219 = vmatprep.subr.mxu0 0.0
        %2220 = vmatpush1.msra.mxu0 0.0
        %2221 = vmatprep.subr.mxu0 0.0
        %2222 = vmatpush1.msra.mxu0 0.0
        %2223 = vmatprep.subr.mxu0 0.0
        %2224 = vmatpush1.msra.mxu0 0.0
        %2225 = vmatprep.subr.mxu0 0.0
        %2226 = vmatpush1.msra.mxu0 0.0
        %2227 = vmatprep.subr.mxu0 0.0
        %2228 = vmatpush1.msra.mxu0 0.0
        %2229 = vmatprep.subr.mxu0 0.0
        %2230 = vmatpush1.msra.mxu0 0.0
        %2231 = vmatprep.subr.mxu0 0.0
        %2232 = vmatpush1.msra.mxu0 0.0
        %2233 = vmatprep.mubr.f32.mxu0 0.0
        %2234 = vmatmul.mubr.f32.gmra.mrb[0].mxu0 %v2167
        %v2235 = vpop.f32.mrb[0].mxu0
        %v2236 = vadd.f32 0.0, %v2235
        %v2237 = vpop.f32.mrb[0].mxu0
        %2238 = vdwg.mxu0
        %v2240 = vsel %vm1596, %v2236, 0
        %2242 = vmatprep.subr.mxu0 0.0
        %2243 = vmatpush1.msra.mxu0 %v1589
        %2244 = vmatprep.subr.mxu0 0.0
        %2245 = vmatpush1.msra.mxu0 %v1590
        %2246 = vmatprep.subr.mxu0 0.0
        %2247 = vmatpush1.msra.mxu0 0.0
        %2248 = vmatprep.subr.mxu0 0.0
        %2249 = vmatpush1.msra.mxu0 0.0
        %2250 = vmatprep.subr.mxu0 0.0
        %2251 = vmatpush1.msra.mxu0 0.0
        %2252 = vmatprep.subr.mxu0 0.0
        %2253 = vmatpush1.msra.mxu0 0.0
        %2254 = vmatprep.subr.mxu0 0.0
        %2255 = vmatpush1.msra.mxu0 0.0
        %2256 = vmatprep.subr.mxu0 0.0
        %2257 = vmatpush1.msra.mxu0 0.0
        %2258 = vmatprep.subr.mxu0 0.0
        %2259 = vmatpush1.msra.mxu0 0.0
        %2260 = vmatprep.subr.mxu0 0.0
        %2261 = vmatpush1.msra.mxu0 0.0
        %2262 = vmatprep.subr.mxu0 0.0
        %2263 = vmatpush1.msra.mxu0 0.0
        %2264 = vmatprep.subr.mxu0 0.0
        %2265 = vmatpush1.msra.mxu0 0.0
        %2266 = vmatprep.subr.mxu0 0.0
        %2267 = vmatpush1.msra.mxu0 0.0
        %2268 = vmatprep.subr.mxu0 0.0
        %2269 = vmatpush1.msra.mxu0 0.0
        %2270 = vmatprep.subr.mxu0 0.0
        %2271 = vmatpush1.msra.mxu0 0.0
        %2272 = vmatprep.subr.mxu0 0.0
        %2273 = vmatpush1.msra.mxu0 0.0
        %2274 = vmatprep.subr.mxu0 0.0
        %2275 = vmatpush1.msra.mxu0 0.0
        %2276 = vmatprep.subr.mxu0 0.0
        %2277 = vmatpush1.msra.mxu0 0.0
        %2278 = vmatprep.subr.mxu0 0.0
        %2279 = vmatpush1.msra.mxu0 0.0
        %2280 = vmatprep.subr.mxu0 0.0
        %2281 = vmatpush1.msra.mxu0 0.0
        %2282 = vmatprep.subr.mxu0 0.0
        %2283 = vmatpush1.msra.mxu0 0.0
        %2284 = vmatprep.subr.mxu0 0.0
        %2285 = vmatpush1.msra.mxu0 0.0
        %2286 = vmatprep.subr.mxu0 0.0
        %2287 = vmatpush1.msra.mxu0 0.0
        %2288 = vmatprep.subr.mxu0 0.0
        %2289 = vmatpush1.msra.mxu0 0.0
        %2290 = vmatprep.subr.mxu0 0.0
        %2291 = vmatpush1.msra.mxu0 0.0
        %2292 = vmatprep.subr.mxu0 0.0
        %2293 = vmatpush1.msra.mxu0 0.0
        %2294 = vmatprep.subr.mxu0 0.0
        %2295 = vmatpush1.msra.mxu0 0.0
        %2296 = vmatprep.subr.mxu0 0.0
        %2297 = vmatpush1.msra.mxu0 0.0
        %2298 = vmatprep.subr.mxu0 0.0
        %2299 = vmatpush1.msra.mxu0 0.0
        %2300 = vmatprep.subr.mxu0 0.0
        %2301 = vmatpush1.msra.mxu0 0.0
        %2302 = vmatprep.subr.mxu0 0.0
        %2303 = vmatpush1.msra.mxu0 0.0
        %2304 = vmatprep.subr.mxu0 0.0
        %2305 = vmatpush1.msra.mxu0 0.0
        %2306 = vmatprep.mubr.f32.mxu0 0.0
        %2307 = vmatmul.mubr.f32.gmra.mrb[0].mxu0 %v2240
        %v2308 = vpop.f32.mrb[0].mxu0
        %v2309 = vadd.f32 0.0, %v2308
        %v2310 = vpop.f32.mrb[0].mxu0
        %2311 = vdwg.mxu0
        %v2312 = vadd.f32 %v2069, %v2309
        %2313 = vrot.lane.b32.xlu0 %v1581, 80
        %v2314 = vpop.permute.xlu0 %2313
        %2315 = vrot.lane.b32.xlu0 %v1581, 16
        %v2316 = vpop.permute.xlu0 %2315
        %v2317 = vsel %vm1596, %v2314, 0
        %v2319 = vsel %vm1596, %v2316, 0
        %2321 = vmatprep.subr.mxu0 0.0
        %2322 = vmatpush1.xpose.msra.mxu0 %v2319
        %2323 = vmatprep.subr.mxu0 0.0
        %2324 = vmatpush1.xpose.msra.mxu0 0.0
        %2325 = vmatprep.subr.mxu0 0.0
        %2326 = vmatpush1.xpose.msra.mxu0 0.0
        %2327 = vmatprep.subr.mxu0 0.0
        %2328 = vmatpush1.xpose.msra.mxu0 0.0
        %2329 = vmatprep.subr.mxu0 0.0
        %2330 = vmatpush1.xpose.msra.mxu0 0.0
        %2331 = vmatprep.subr.mxu0 0.0
        %2332 = vmatpush1.xpose.msra.mxu0 0.0
        %2333 = vmatprep.subr.mxu0 0.0
        %2334 = vmatpush1.xpose.msra.mxu0 0.0
        %2335 = vmatprep.subr.mxu0 0.0
        %2336 = vmatpush1.xpose.msra.mxu0 0.0
        %2337 = vmatprep.subr.mxu0 0.0
        %2338 = vmatpush1.xpose.msra.mxu0 0.0
        %2339 = vmatprep.subr.mxu0 0.0
        %2340 = vmatpush1.xpose.msra.mxu0 0.0
        %2341 = vmatprep.subr.mxu0 0.0
        %2342 = vmatpush1.xpose.msra.mxu0 0.0
        %2343 = vmatprep.subr.mxu0 0.0
        %2344 = vmatpush1.xpose.msra.mxu0 0.0
        %2345 = vmatprep.subr.mxu0 0.0
        %2346 = vmatpush1.xpose.msra.mxu0 0.0
        %2347 = vmatprep.subr.mxu0 0.0
        %2348 = vmatpush1.xpose.msra.mxu0 0.0
        %2349 = vmatprep.subr.mxu0 0.0
        %2350 = vmatpush1.xpose.msra.mxu0 0.0
        %2351 = vmatprep.subr.mxu0 0.0
        %2352 = vmatpush1.xpose.msra.mxu0 0.0
        %2353 = vmatprep.subr.mxu0 0.0
        %2354 = vmatpush1.xpose.msra.mxu0 0.0
        %2355 = vmatprep.subr.mxu0 0.0
        %2356 = vmatpush1.xpose.msra.mxu0 0.0
        %2357 = vmatprep.subr.mxu0 0.0
        %2358 = vmatpush1.xpose.msra.mxu0 0.0
        %2359 = vmatprep.subr.mxu0 0.0
        %2360 = vmatpush1.xpose.msra.mxu0 0.0
        %2361 = vmatprep.subr.mxu0 0.0
        %2362 = vmatpush1.xpose.msra.mxu0 0.0
        %2363 = vmatprep.subr.mxu0 0.0
        %2364 = vmatpush1.xpose.msra.mxu0 0.0
        %2365 = vmatprep.subr.mxu0 0.0
        %2366 = vmatpush1.xpose.msra.mxu0 0.0
        %2367 = vmatprep.subr.mxu0 0.0
        %2368 = vmatpush1.xpose.msra.mxu0 0.0
        %2369 = vmatprep.subr.mxu0 0.0
        %2370 = vmatpush1.xpose.msra.mxu0 0.0
        %2371 = vmatprep.subr.mxu0 0.0
        %2372 = vmatpush1.xpose.msra.mxu0 0.0
        %2373 = vmatprep.subr.mxu0 0.0
        %2374 = vmatpush1.xpose.msra.mxu0 0.0
        %2375 = vmatprep.subr.mxu0 0.0
        %2376 = vmatpush1.xpose.msra.mxu0 0.0
        %2377 = vmatprep.subr.mxu0 0.0
        %2378 = vmatpush1.xpose.msra.mxu0 0.0
        %2379 = vmatprep.subr.mxu0 0.0
        %2380 = vmatpush1.xpose.msra.mxu0 0.0
        %2381 = vmatprep.subr.mxu0 0.0
        %2382 = vmatpush1.xpose.msra.mxu0 0.0
        %2383 = vmatprep.subr.mxu0 0.0
        %2384 = vmatpush1.xpose.msra.mxu0 0.0
        %2385 = vmatprep.mubr.f32.mxu0 0.0
        %2386 = vmatmul.mubr.f32.gmra.mrb[0].mxu0 %v2317
        %v2387 = vpop.f32.mrb[0].mxu0
        %v2388 = vadd.f32 0.0, %v2387
        %v2389 = vpop.f32.mrb[0].mxu0
        %2390 = vdwg.mxu0
        %v2391 = vmul.f32 %v2388, 0.25
        %v2392 = vsel %vm1452, %v2391, -1e+30
        %v2393 = vsel %vm1673, %v2392, -inf
        %2394 = vmax.xlane.f32.xlu0 %v2393
        %v2395 = vpop.xlane.xlu0 %2394
        %v2396 = vsub.f32 %v2392, %v2395
        %v2397 = vmul.f32 %v2396, 1.442695
        %v2398 = vpow.pop %v2397
        %v2399 = vsel %vm1673, %v2398, 0.0
        %2400 = vadd.xlane.f32.xlu0 %v2399
        %v2401 = vpop.xlane.xlu0 %2400
        %v2402 = vrcp.pop %v2401
        %v2403 = vmul.f32 %v2398, %v2402
        %2404 = vrot.lane.b32.xlu0 %v1583, 80
        %v2405 = vpop.permute.xlu0 %2404
        %v2408 = vsel %vm1673, %v2403, 0
        %2410 = vmatprep.subr.mxu0 0.0
        %2411 = vmatpush1.msra.mxu0 %v2405
        %2412 = vmatprep.subr.mxu0 0.0
        %2413 = vmatpush1.msra.mxu0 0.0
        %2414 = vmatprep.subr.mxu0 0.0
        %2415 = vmatpush1.msra.mxu0 0.0
        %2416 = vmatprep.subr.mxu0 0.0
        %2417 = vmatpush1.msra.mxu0 0.0
        %2418 = vmatprep.subr.mxu0 0.0
        %2419 = vmatpush1.msra.mxu0 0.0
        %2420 = vmatprep.subr.mxu0 0.0
        %2421 = vmatpush1.msra.mxu0 0.0
        %2422 = vmatprep.subr.mxu0 0.0
        %2423 = vmatpush1.msra.mxu0 0.0
        %2424 = vmatprep.subr.mxu0 0.0
        %2425 = vmatpush1.msra.mxu0 0.0
        %2426 = vmatprep.subr.mxu0 0.0
        %2427 = vmatpush1.msra.mxu0 0.0
        %2428 = vmatprep.subr.mxu0 0.0
        %2429 = vmatpush1.msra.mxu0 0.0
        %2430 = vmatprep.subr.mxu0 0.0
        %2431 = vmatpush1.msra.mxu0 0.0
        %2432 = vmatprep.subr.mxu0 0.0
        %2433 = vmatpush1.msra.mxu0 0.0
        %2434 = vmatprep.subr.mxu0 0.0
        %2435 = vmatpush1.msra.mxu0 0.0
        %2436 = vmatprep.subr.mxu0 0.0
        %2437 = vmatpush1.msra.mxu0 0.0
        %2438 = vmatprep.subr.mxu0 0.0
        %2439 = vmatpush1.msra.mxu0 0.0
        %2440 = vmatprep.subr.mxu0 0.0
        %2441 = vmatpush1.msra.mxu0 0.0
        %2442 = vmatprep.subr.mxu0 0.0
        %2443 = vmatpush1.msra.mxu0 0.0
        %2444 = vmatprep.subr.mxu0 0.0
        %2445 = vmatpush1.msra.mxu0 0.0
        %2446 = vmatprep.subr.mxu0 0.0
        %2447 = vmatpush1.msra.mxu0 0.0
        %2448 = vmatprep.subr.mxu0 0.0
        %2449 = vmatpush1.msra.mxu0 0.0
        %2450 = vmatprep.subr.mxu0 0.0
        %2451 = vmatpush1.msra.mxu0 0.0
        %2452 = vmatprep.subr.mxu0 0.0
        %2453 = vmatpush1.msra.mxu0 0.0
        %2454 = vmatprep.subr.mxu0 0.0
        %2455 = vmatpush1.msra.mxu0 0.0
        %2456 = vmatprep.subr.mxu0 0.0
        %2457 = vmatpush1.msra.mxu0 0.0
        %2458 = vmatprep.subr.mxu0 0.0
        %2459 = vmatpush1.msra.mxu0 0.0
        %2460 = vmatprep.subr.mxu0 0.0
        %2461 = vmatpush1.msra.mxu0 0.0
        %2462 = vmatprep.subr.mxu0 0.0
        %2463 = vmatpush1.msra.mxu0 0.0
        %2464 = vmatprep.subr.mxu0 0.0
        %2465 = vmatpush1.msra.mxu0 0.0
        %2466 = vmatprep.subr.mxu0 0.0
        %2467 = vmatpush1.msra.mxu0 0.0
        %2468 = vmatprep.subr.mxu0 0.0
        %2469 = vmatpush1.msra.mxu0 0.0
        %2470 = vmatprep.subr.mxu0 0.0
        %2471 = vmatpush1.msra.mxu0 0.0
        %2472 = vmatprep.subr.mxu0 0.0
        %2473 = vmatpush1.msra.mxu0 0.0
        %2474 = vmatprep.mubr.f32.mxu0 0.0
        %2475 = vmatmul.mubr.f32.gmra.mrb[0].mxu0 %v2408
        %v2476 = vpop.f32.mrb[0].mxu0
        %v2477 = vadd.f32 0.0, %v2476
        %v2478 = vpop.f32.mrb[0].mxu0
        %2479 = vdwg.mxu0
        %v2481 = vsel %vm1596, %v2477, 0
        %2483 = vmatprep.subr.mxu0 0.0
        %2484 = vmatpush1.msra.mxu0 %v1591
        %2485 = vmatprep.subr.mxu0 0.0
        %2486 = vmatpush1.msra.mxu0 %v1592
        %2487 = vmatprep.subr.mxu0 0.0
        %2488 = vmatpush1.msra.mxu0 0.0
        %2489 = vmatprep.subr.mxu0 0.0
        %2490 = vmatpush1.msra.mxu0 0.0
        %2491 = vmatprep.subr.mxu0 0.0
        %2492 = vmatpush1.msra.mxu0 0.0
        %2493 = vmatprep.subr.mxu0 0.0
        %2494 = vmatpush1.msra.mxu0 0.0
        %2495 = vmatprep.subr.mxu0 0.0
        %2496 = vmatpush1.msra.mxu0 0.0
        %2497 = vmatprep.subr.mxu0 0.0
        %2498 = vmatpush1.msra.mxu0 0.0
        %2499 = vmatprep.subr.mxu0 0.0
        %2500 = vmatpush1.msra.mxu0 0.0
        %2501 = vmatprep.subr.mxu0 0.0
        %2502 = vmatpush1.msra.mxu0 0.0
        %2503 = vmatprep.subr.mxu0 0.0
        %2504 = vmatpush1.msra.mxu0 0.0
        %2505 = vmatprep.subr.mxu0 0.0
        %2506 = vmatpush1.msra.mxu0 0.0
        %2507 = vmatprep.subr.mxu0 0.0
        %2508 = vmatpush1.msra.mxu0 0.0
        %2509 = vmatprep.subr.mxu0 0.0
        %2510 = vmatpush1.msra.mxu0 0.0
        %2511 = vmatprep.subr.mxu0 0.0
        %2512 = vmatpush1.msra.mxu0 0.0
        %2513 = vmatprep.subr.mxu0 0.0
        %2514 = vmatpush1.msra.mxu0 0.0
        %2515 = vmatprep.subr.mxu0 0.0
        %2516 = vmatpush1.msra.mxu0 0.0
        %2517 = vmatprep.subr.mxu0 0.0
        %2518 = vmatpush1.msra.mxu0 0.0
        %2519 = vmatprep.subr.mxu0 0.0
        %2520 = vmatpush1.msra.mxu0 0.0
        %2521 = vmatprep.subr.mxu0 0.0
        %2522 = vmatpush1.msra.mxu0 0.0
        %2523 = vmatprep.subr.mxu0 0.0
        %2524 = vmatpush1.msra.mxu0 0.0
        %2525 = vmatprep.subr.mxu0 0.0
        %2526 = vmatpush1.msra.mxu0 0.0
        %2527 = vmatprep.subr.mxu0 0.0
        %2528 = vmatpush1.msra.mxu0 0.0
        %2529 = vmatprep.subr.mxu0 0.0
        %2530 = vmatpush1.msra.mxu0 0.0
        %2531 = vmatprep.subr.mxu0 0.0
        %2532 = vmatpush1.msra.mxu0 0.0
        %2533 = vmatprep.subr.mxu0 0.0
        %2534 = vmatpush1.msra.mxu0 0.0
        %2535 = vmatprep.subr.mxu0 0.0
        %2536 = vmatpush1.msra.mxu0 0.0
        %2537 = vmatprep.subr.mxu0 0.0
        %2538 = vmatpush1.msra.mxu0 0.0
        %2539 = vmatprep.subr.mxu0 0.0
        %2540 = vmatpush1.msra.mxu0 0.0
        %2541 = vmatprep.subr.mxu0 0.0
        %2542 = vmatpush1.msra.mxu0 0.0
        %2543 = vmatprep.subr.mxu0 0.0
        %2544 = vmatpush1.msra.mxu0 0.0
        %2545 = vmatprep.subr.mxu0 0.0
        %2546 = vmatpush1.msra.mxu0 0.0
        %2547 = vmatprep.mubr.f32.mxu0 0.0
        %2548 = vmatmul.mubr.f32.gmra.mrb[0].mxu0 %v2481
        %v2549 = vpop.f32.mrb[0].mxu0
        %v2550 = vadd.f32 0.0, %v2549
        %v2551 = vpop.f32.mrb[0].mxu0
        %2552 = vdwg.mxu0
        %v2553 = vadd.f32 %v2312, %v2550
        %v2554 = vadd.f32 %v1447, %v2553
        %v2555 = vld [vmem:[%s33] sm:$0x1]
        %v2557 = vlaneseq
        %v2558 = vshrl.u32 %v2557, 7
        %v2559 = vsub.s32 0, %v2558
        %v2560 = vrot.slane %v2555, %v2559
        %v2562 = vadd.f32 %v2554, %v2560
        %v2563 = vld [vmem:[%s35] sm:$0x1]
        %v2564 = vld [vmem:[%s37] sm:$0x1]
        %v2565 = vsel %vm1281, %v2562, 0.0
        %2566 = vadd.xlane.f32.xlu0 %v2565
        %v2567 = vpop.xlane.xlu0 %2566
        %v2568 = vmul.f32 %v2567, %v1458
        %v2569 = vsub.f32 %v2562, %v2568
        %v2570 = vmul.f32 %v2569, %v2569
        %v2571 = vsel %vm1281, %v2570, 0.0
        %2572 = vadd.xlane.f32.xlu0 %v2571
        %v2573 = vpop.xlane.xlu0 %2572
        %v2574 = vmul.f32 %v2573, %v1458
        %v2575 = vadd.f32 %v2574, 1e-05
        %v2576 = vrsqrt.pop %v2575
        %v2577 = vmul.f32 %v2569, %v2576
        %v2579 = vlaneseq
        %v2580 = vshrl.u32 %v2579, 7
        %v2581 = vsub.s32 0, %v2580
        %v2582 = vrot.slane %v2563, %v2581
        %v2584 = vmul.f32 %v2577, %v2582
        %v2586 = vlaneseq
        %v2587 = vshrl.u32 %v2586, 7
        %v2588 = vsub.s32 0, %v2587
        %v2589 = vrot.slane %v2564, %v2588
        %v2591 = vadd.f32 %v2584, %v2589
        %v2592 = vld [vmem:[%s39] sm:$0xff]
        %v2593 = vld [vmem:[%s39 + $0x8] sm:$0xff]
        %v2594 = vld [vmem:[%s39 + $0x10] sm:$0xff]
        %v2595 = vld [vmem:[%s39 + $0x18] sm:$0xff]
        %v2596 = vld [vmem:[%s39 + $0x20] sm:$0xff]
        %v2597 = vld [vmem:[%s39 + $0x28] sm:$0xff]
        %v2598 = vld [vmem:[%s39 + $0x30] sm:$0xff]
        %v2599 = vld [vmem:[%s39 + $0x38] sm:$0xff]
        %v2600 = vld [vmem:[%s39 + $0x40] sm:$0xff]
        %v2601 = vld [vmem:[%s39 + $0x48] sm:$0xff]
        %v2602 = vld [vmem:[%s39 + $0x50] sm:$0xff]
        %v2603 = vld [vmem:[%s39 + $0x58] sm:$0xff]
        %v2604 = vld [vmem:[%s39 + $0x60] sm:$0xff]
        %v2605 = vld [vmem:[%s39 + $0x68] sm:$0xff]
        %v2606 = vld [vmem:[%s39 + $0x70] sm:$0xff]
        %v2607 = vld [vmem:[%s39 + $0x78] sm:$0xff]
        %v2608 = vld [vmem:[%s41] sm:$0x3]
        %v2610 = vlaneseq
        %v2611 = vshrl.u32 %v2610, 7
        %v2612 = vsub.s32 0, %v2611
        %v2613 = vrot.slane %v2608, %v2612
        %v2614 = vlaneseq
        %v2615 = vshrl.u32 %v2614, 7
        %v2616 = vsub.s32 1, %v2615
        %v2617 = vrot.slane %v2608, %v2616
        %v2621 = vsel %vm1281, %v2591, 0
        %2623 = vmatprep.subr.mxu0 %v2593
        %2624 = vmatpush1.msra.mxu0 %v2592
        %2625 = vmatprep.subr.mxu0 %v2595
        %2626 = vmatpush1.msra.mxu0 %v2594
        %2627 = vmatprep.subr.mxu0 %v2597
        %2628 = vmatpush1.msra.mxu0 %v2596
        %2629 = vmatprep.subr.mxu0 %v2599
        %2630 = vmatpush1.msra.mxu0 %v2598
        %2631 = vmatprep.subr.mxu0 %v2601
        %2632 = vmatpush1.msra.mxu0 %v2600
        %2633 = vmatprep.subr.mxu0 %v2603
        %2634 = vmatpush1.msra.mxu0 %v2602
        %2635 = vmatprep.subr.mxu0 %v2605
        %2636 = vmatpush1.msra.mxu0 %v2604
        %2637 = vmatprep.subr.mxu0 %v2607
        %2638 = vmatpush1.msra.mxu0 %v2606
        %2639 = vmatprep.subr.mxu0 0.0
        %2640 = vmatpush1.msra.mxu0 0.0
        %2641 = vmatprep.subr.mxu0 0.0
        %2642 = vmatpush1.msra.mxu0 0.0
        %2643 = vmatprep.subr.mxu0 0.0
        %2644 = vmatpush1.msra.mxu0 0.0
        %2645 = vmatprep.subr.mxu0 0.0
        %2646 = vmatpush1.msra.mxu0 0.0
        %2647 = vmatprep.subr.mxu0 0.0
        %2648 = vmatpush1.msra.mxu0 0.0
        %2649 = vmatprep.subr.mxu0 0.0
        %2650 = vmatpush1.msra.mxu0 0.0
        %2651 = vmatprep.subr.mxu0 0.0
        %2652 = vmatpush1.msra.mxu0 0.0
        %2653 = vmatprep.subr.mxu0 0.0
        %2654 = vmatpush1.msra.mxu0 0.0
        %2655 = vmatprep.subr.mxu0 0.0
        %2656 = vmatpush1.msra.mxu0 0.0
        %2657 = vmatprep.subr.mxu0 0.0
        %2658 = vmatpush1.msra.mxu0 0.0
        %2659 = vmatprep.subr.mxu0 0.0
        %2660 = vmatpush1.msra.mxu0 0.0
        %2661 = vmatprep.subr.mxu0 0.0
        %2662 = vmatpush1.msra.mxu0 0.0
        %2663 = vmatprep.subr.mxu0 0.0
        %2664 = vmatpush1.msra.mxu0 0.0
        %2665 = vmatprep.subr.mxu0 0.0
        %2666 = vmatpush1.msra.mxu0 0.0
        %2667 = vmatprep.subr.mxu0 0.0
        %2668 = vmatpush1.msra.mxu0 0.0
        %2669 = vmatprep.subr.mxu0 0.0
        %2670 = vmatpush1.msra.mxu0 0.0
        %2671 = vmatprep.subr.mxu0 0.0
        %2672 = vmatpush1.msra.mxu0 0.0
        %2673 = vmatprep.subr.mxu0 0.0
        %2674 = vmatpush1.msra.mxu0 0.0
        %2675 = vmatprep.subr.mxu0 0.0
        %2676 = vmatpush1.msra.mxu0 0.0
        %2677 = vmatprep.subr.mxu0 0.0
        %2678 = vmatpush1.msra.mxu0 0.0
        %2679 = vmatprep.subr.mxu0 0.0
        %2680 = vmatpush1.msra.mxu0 0.0
        %2681 = vmatprep.subr.mxu0 0.0
        %2682 = vmatpush1.msra.mxu0 0.0
        %2683 = vmatprep.subr.mxu0 0.0
        %2684 = vmatpush1.msra.mxu0 0.0
        %2685 = vmatprep.subr.mxu0 0.0
        %2686 = vmatpush1.msra.mxu0 0.0
        %2687 = vmatprep.mubr.f32.mxu0 0.0
        %2688 = vmatmul.mubr.f32.gmra.mrb[0].mxu0 %v2621
        %v2689 = vpop.f32.mrb[0].mxu0
        %v2690 = vadd.f32 %v2613, %v2689
        %v2691 = vpop.f32.mrb[0].mxu0
        %v2692 = vadd.f32 %v2617, %v2691
        %2693 = vdwg.mxu0
        %v2694 = vmul.f32 %v2690, 1.702
        %v2695 = vmul.f32 %v2692, 1.702
        %v2696 = vxor.u32 %v2694, 2147483648
        %v2697 = vxor.u32 %v2695, 2147483648
        %v2698 = vmul.f32 %v2696, 1.442695
        %v2699 = vpow.pop %v2698
        %v2700 = vmul.f32 %v2697, 1.442695
        %v2701 = vpow.pop %v2700
        %v2702 = vadd.f32 %v2699, 1.0
        %v2703 = vadd.f32 %v2701, 1.0
        %v2704 = vrcp.pop %v2702
        %v2705 = vmul.f32 1.0, %v2704
        %v2706 = vrcp.pop %v2703
        %v2707 = vmul.f32 1.0, %v2706
        %v2708 = vmul.f32 %v2690, %v2705
        %v2709 = vmul.f32 %v2692, %v2707
        %v2710 = vld [vmem:[%s43] sm:$0xff]
        %v2711 = vld [vmem:[%s43 + $0x8] sm:$0xff]
        %v2712 = vld [vmem:[%s43 + $0x10] sm:$0xff]
        %v2713 = vld [vmem:[%s43 + $0x18] sm:$0xff]
        %v2714 = vld [vmem:[%s43 + $0x20] sm:$0xff]
        %v2715 = vld [vmem:[%s43 + $0x28] sm:$0xff]
        %v2716 = vld [vmem:[%s43 + $0x30] sm:$0xff]
        %v2717 = vld [vmem:[%s43 + $0x38] sm:$0xff]
        %v2718 = vld [vmem:[%s43 + $0x40] sm:$0xff]
        %v2719 = vld [vmem:[%s43 + $0x48] sm:$0xff]
        %v2720 = vld [vmem:[%s43 + $0x50] sm:$0xff]
        %v2721 = vld [vmem:[%s43 + $0x58] sm:$0xff]
        %v2722 = vld [vmem:[%s43 + $0x60] sm:$0xff]
        %v2723 = vld [vmem:[%s43 + $0x68] sm:$0xff]
        %v2724 = vld [vmem:[%s43 + $0x70] sm:$0xff]
        %v2725 = vld [vmem:[%s43 + $0x78] sm:$0xff]
        %v2726 = vld [vmem:[%s43 + $0x80] sm:$0xff]
        %v2727 = vld [vmem:[%s43 + $0x88] sm:$0xff]
        %v2728 = vld [vmem:[%s43 + $0x90] sm:$0xff]
        %v2729 = vld [vmem:[%s43 + $0x98] sm:$0xff]
        %v2730 = vld [vmem:[%s43 + $0xa0] sm:$0xff]
        %v2731 = vld [vmem:[%s43 + $0xa8] sm:$0xff]
        %v2732 = vld [vmem:[%s43 + $0xb0] sm:$0xff]
        %v2733 = vld [vmem:[%s43 + $0xb8] sm:$0xff]
        %v2734 = vld [vmem:[%s43 + $0xc0] sm:$0xff]
        %v2735 = vld [vmem:[%s43 + $0xc8] sm:$0xff]
        %v2736 = vld [vmem:[%s43 + $0xd0] sm:$0xff]
        %v2737 = vld [vmem:[%s43 + $0xd8] sm:$0xff]
        %v2738 = vld [vmem:[%s43 + $0xe0] sm:$0xff]
        %v2739 = vld [vmem:[%s43 + $0xe8] sm:$0xff]
        %v2740 = vld [vmem:[%s43 + $0xf0] sm:$0xff]
        %v2741 = vld [vmem:[%s43 + $0xf8] sm:$0xff]
        %2742 = vmatprep.subr.mxu0 0.0
        %2743 = vmatpush1.msra.mxu0 %v2710
        %2744 = vmatprep.subr.mxu0 0.0
        %2745 = vmatpush1.msra.mxu0 %v2711
        %2746 = vmatprep.subr.mxu0 0.0
        %2747 = vmatpush1.msra.mxu0 %v2712
        %2748 = vmatprep.subr.mxu0 0.0
        %2749 = vmatpush1.msra.mxu0 %v2713
        %2750 = vmatprep.subr.mxu0 0.0
        %2751 = vmatpush1.msra.mxu0 %v2714
        %2752 = vmatprep.subr.mxu0 0.0
        %2753 = vmatpush1.msra.mxu0 %v2715
        %2754 = vmatprep.subr.mxu0 0.0
        %2755 = vmatpush1.msra.mxu0 %v2716
        %2756 = vmatprep.subr.mxu0 0.0
        %2757 = vmatpush1.msra.mxu0 %v2717
        %2758 = vmatprep.subr.mxu0 0.0
        %2759 = vmatpush1.msra.mxu0 %v2718
        %2760 = vmatprep.subr.mxu0 0.0
        %2761 = vmatpush1.msra.mxu0 %v2719
        %2762 = vmatprep.subr.mxu0 0.0
        %2763 = vmatpush1.msra.mxu0 %v2720
        %2764 = vmatprep.subr.mxu0 0.0
        %2765 = vmatpush1.msra.mxu0 %v2721
        %2766 = vmatprep.subr.mxu0 0.0
        %2767 = vmatpush1.msra.mxu0 %v2722
        %2768 = vmatprep.subr.mxu0 0.0
        %2769 = vmatpush1.msra.mxu0 %v2723
        %2770 = vmatprep.subr.mxu0 0.0
        %2771 = vmatpush1.msra.mxu0 %v2724
        %2772 = vmatprep.subr.mxu0 0.0
        %2773 = vmatpush1.msra.mxu0 %v2725
        %2774 = vmatprep.subr.mxu0 0.0
        %2775 = vmatpush1.msra.mxu0 %v2726
        %2776 = vmatprep.subr.mxu0 0.0
        %2777 = vmatpush1.msra.mxu0 %v2727
        %2778 = vmatprep.subr.mxu0 0.0
        %2779 = vmatpush1.msra.mxu0 %v2728
        %2780 = vmatprep.subr.mxu0 0.0
        %2781 = vmatpush1.msra.mxu0 %v2729
        %2782 = vmatprep.subr.mxu0 0.0
        %2783 = vmatpush1.msra.mxu0 %v2730
        %2784 = vmatprep.subr.mxu0 0.0
        %2785 = vmatpush1.msra.mxu0 %v2731
        %2786 = vmatprep.subr.mxu0 0.0
        %2787 = vmatpush1.msra.mxu0 %v2732
        %2788 = vmatprep.subr.mxu0 0.0
        %2789 = vmatpush1.msra.mxu0 %v2733
        %2790 = vmatprep.subr.mxu0 0.0
        %2791 = vmatpush1.msra.mxu0 %v2734
        %2792 = vmatprep.subr.mxu0 0.0
        %2793 = vmatpush1.msra.mxu0 %v2735
        %2794 = vmatprep.subr.mxu0 0.0
        %2795 = vmatpush1.msra.mxu0 %v2736
        %2796 = vmatprep.subr.mxu0 0.0
        %2797 = vmatpush1.msra.mxu0 %v2737
        %2798 = vmatprep.subr.mxu0 0.0
        %2799 = vmatpush1.msra.mxu0 %v2738
        %2800 = vmatprep.subr.mxu0 0.0
        %2801 = vmatpush1.msra.mxu0 %v2739
        %2802 = vmatprep.subr.mxu0 0.0
        %2803 = vmatpush1.msra.mxu0 %v2740
        %2804 = vmatprep.subr.mxu0 0.0
        %2805 = vmatpush1.msra.mxu0 %v2741
        %2806 = vmatprep.mubr.f32.mxu0 %v2709
        %2807 = vmatmul.mubr.f32.gmra.mrb[0].mxu0 %v2708
        %v2808 = vpop.f32.mrb[0].mxu0
        %v2809 = vadd.f32 0.0, %v2808
        %v2810 = vpop.f32.mrb[0].mxu0
        %2811 = vdwg.mxu0
        %v2812 = vadd.f32 %v2562, %v2809
        %v2813 = vld [vmem:[%s45] sm:$0x1]
        %v2815 = vlaneseq
        %v2816 = vshrl.u32 %v2815, 7
        %v2817 = vsub.s32 0, %v2816
        %v2818 = vrot.slane %v2813, %v2817
        %v2820 = vadd.f32 %v2812, %v2818
        %s2821 = scalar_lea.vmem %s23, 1
        %v2822 = vld [vmem:[%s2821] sm:$0x1]
        %s2823 = scalar_lea.vmem %s25, 1
        %v2824 = vld [vmem:[%s2823] sm:$0x1]
        %v2825 = vsel %vm1281, %v2820, 0.0
        %2826 = vadd.xlane.f32.xlu0 %v2825
        %v2827 = vpop.xlane.xlu0 %2826
        %v2828 = vmul.f32 %v2827, %v1458
        %v2829 = vsub.f32 %v2820, %v2828
        %v2830 = vmul.f32 %v2829, %v2829
        %v2831 = vsel %vm1281, %v2830, 0.0
        %2832 = vadd.xlane.f32.xlu0 %v2831
        %v2833 = vpop.xlane.xlu0 %2832
        %v2834 = vmul.f32 %v2833, %v1458
        %v2835 = vadd.f32 %v2834, 1e-05
        %v2836 = vrsqrt.pop %v2835
        %v2837 = vmul.f32 %v2829, %v2836
        %v2839 = vlaneseq
        %v2840 = vshrl.u32 %v2839, 7
        %v2841 = vsub.s32 0, %v2840
        %v2842 = vrot.slane %v2822, %v2841
        %v2844 = vmul.f32 %v2837, %v2842
        %v2846 = vlaneseq
        %v2847 = vshrl.u32 %v2846, 7
        %v2848 = vsub.s32 0, %v2847
        %v2849 = vrot.slane %v2824, %v2848
        %v2851 = vadd.f32 %v2844, %v2849
        %s2852 = scalar_lea.vmem %s27, 128
        %v2853 = vld [vmem:[%s2852] sm:$0xff]
        %v2854 = vld [vmem:[%s2852 + $0x8] sm:$0xff]
        %v2855 = vld [vmem:[%s2852 + $0x10] sm:$0xff]
        %v2856 = vld [vmem:[%s2852 + $0x18] sm:$0xff]
        %v2857 = vld [vmem:[%s2852 + $0x20] sm:$0xff]
        %v2858 = vld [vmem:[%s2852 + $0x28] sm:$0xff]
        %v2859 = vld [vmem:[%s2852 + $0x30] sm:$0xff]
        %v2860 = vld [vmem:[%s2852 + $0x38] sm:$0xff]
        %v2861 = vld [vmem:[%s2852 + $0x40] sm:$0xff]
        %v2862 = vld [vmem:[%s2852 + $0x48] sm:$0xff]
        %v2863 = vld [vmem:[%s2852 + $0x50] sm:$0xff]
        %v2864 = vld [vmem:[%s2852 + $0x58] sm:$0xff]
        %v2865 = vld [vmem:[%s2852 + $0x60] sm:$0xff]
        %v2866 = vld [vmem:[%s2852 + $0x68] sm:$0xff]
        %v2867 = vld [vmem:[%s2852 + $0x70] sm:$0xff]
        %v2868 = vld [vmem:[%s2852 + $0x78] sm:$0xff]
        %s2869 = scalar_lea.vmem %s29, 2
        %v2870 = vld [vmem:[%s2869] sm:$0x3]
        %v2872 = vlaneseq
        %v2873 = vshrl.u32 %v2872, 7
        %v2874 = vsub.s32 0, %v2873
        %v2875 = vrot.slane %v2870, %v2874
        %v2876 = vlaneseq
        %v2877 = vshrl.u32 %v2876, 7
        %v2878 = vsub.s32 1, %v2877
        %v2879 = vrot.slane %v2870, %v2878
        %v2883 = vsel %vm1281, %v2851, 0
        %2885 = vmatprep.subr.mxu0 %v2854
        %2886 = vmatpush1.msra.mxu0 %v2853
        %2887 = vmatprep.subr.mxu0 %v2856
        %2888 = vmatpush1.msra.mxu0 %v2855
        %2889 = vmatprep.subr.mxu0 %v2858
        %2890 = vmatpush1.msra.mxu0 %v2857
        %2891 = vmatprep.subr.mxu0 %v2860
        %2892 = vmatpush1.msra.mxu0 %v2859
        %2893 = vmatprep.subr.mxu0 %v2862
        %2894 = vmatpush1.msra.mxu0 %v2861
        %2895 = vmatprep.subr.mxu0 %v2864
        %2896 = vmatpush1.msra.mxu0 %v2863
        %2897 = vmatprep.subr.mxu0 %v2866
        %2898 = vmatpush1.msra.mxu0 %v2865
        %2899 = vmatprep.subr.mxu0 %v2868
        %2900 = vmatpush1.msra.mxu0 %v2867
        %2901 = vmatprep.subr.mxu0 0.0
        %2902 = vmatpush1.msra.mxu0 0.0
        %2903 = vmatprep.subr.mxu0 0.0
        %2904 = vmatpush1.msra.mxu0 0.0
        %2905 = vmatprep.subr.mxu0 0.0
        %2906 = vmatpush1.msra.mxu0 0.0
        %2907 = vmatprep.subr.mxu0 0.0
        %2908 = vmatpush1.msra.mxu0 0.0
        %2909 = vmatprep.subr.mxu0 0.0
        %2910 = vmatpush1.msra.mxu0 0.0
        %2911 = vmatprep.subr.mxu0 0.0
        %2912 = vmatpush1.msra.mxu0 0.0
        %2913 = vmatprep.subr.mxu0 0.0
        %2914 = vmatpush1.msra.mxu0 0.0
        %2915 = vmatprep.subr.mxu0 0.0
        %2916 = vmatpush1.msra.mxu0 0.0
        %2917 = vmatprep.subr.mxu0 0.0
        %2918 = vmatpush1.msra.mxu0 0.0
        %2919 = vmatprep.subr.mxu0 0.0
        %2920 = vmatpush1.msra.mxu0 0.0
        %2921 = vmatprep.subr.mxu0 0.0
        %2922 = vmatpush1.msra.mxu0 0.0
        %2923 = vmatprep.subr.mxu0 0.0
        %2924 = vmatpush1.msra.mxu0 0.0
        %2925 = vmatprep.subr.mxu0 0.0
        %2926 = vmatpush1.msra.mxu0 0.0
        %2927 = vmatprep.subr.mxu0 0.0
        %2928 = vmatpush1.msra.mxu0 0.0
        %2929 = vmatprep.subr.mxu0 0.0
        %2930 = vmatpush1.msra.mxu0 0.0
        %2931 = vmatprep.subr.mxu0 0.0
        %2932 = vmatpush1.msra.mxu0 0.0
        %2933 = vmatprep.subr.mxu0 0.0
        %2934 = vmatpush1.msra.mxu0 0.0
        %2935 = vmatprep.subr.mxu0 0.0
        %2936 = vmatpush1.msra.mxu0 0.0
        %2937 = vmatprep.subr.mxu0 0.0
        %2938 = vmatpush1.msra.mxu0 0.0
        %2939 = vmatprep.subr.mxu0 0.0
        %2940 = vmatpush1.msra.mxu0 0.0
        %2941 = vmatprep.subr.mxu0 0.0
        %2942 = vmatpush1.msra.mxu0 0.0
        %2943 = vmatprep.subr.mxu0 0.0
        %2944 = vmatpush1.msra.mxu0 0.0
        %2945 = vmatprep.subr.mxu0 0.0
        %2946 = vmatpush1.msra.mxu0 0.0
        %2947 = vmatprep.subr.mxu0 0.0
        %2948 = vmatpush1.msra.mxu0 0.0
        %2949 = vmatprep.mubr.f32.mxu0 0.0
        %2950 = vmatmul.mubr.f32.gmra.mrb[0].mxu0 %v2883
        %v2951 = vpop.f32.mrb[0].mxu0
        %v2952 = vadd.f32 %v2875, %v2951
        %v2953 = vpop.f32.mrb[0].mxu0
        %v2954 = vadd.f32 %v2879, %v2953
        %2955 = vdwg.mxu0
        %s2956 = scalar_lea.vmem %s31, 64
        %v2957 = vld [vmem:[%s2956] sm:$0xff]
        %v2958 = vld [vmem:[%s2956 + $0x8] sm:$0xff]
        %v2959 = vld [vmem:[%s2956 + $0x10] sm:$0xff]
        %v2960 = vld [vmem:[%s2956 + $0x18] sm:$0xff]
        %v2961 = vld [vmem:[%s2956 + $0x20] sm:$0xff]
        %v2962 = vld [vmem:[%s2956 + $0x28] sm:$0xff]
        %v2963 = vld [vmem:[%s2956 + $0x30] sm:$0xff]
        %v2964 = vld [vmem:[%s2956 + $0x38] sm:$0xff]
        %2966 = vrot.lane.b32.xlu0 %v2952, 64
        %v2967 = vpop.permute.xlu0 %2966
        %v2968 = vsel %vm1596, %v2952, 0
        %v2970 = vsel %vm1596, %v2967, 0
        %2972 = vmatprep.subr.mxu0 0.0
        %2973 = vmatpush1.xpose.msra.mxu0 %v2970
        %2974 = vmatprep.subr.mxu0 0.0
        %2975 = vmatpush1.xpose.msra.mxu0 0.0
        %2976 = vmatprep.subr.mxu0 0.0
        %2977 = vmatpush1.xpose.msra.mxu0 0.0
        %2978 = vmatprep.subr.mxu0 0.0
        %2979 = vmatpush1.xpose.msra.mxu0 0.0
        %2980 = vmatprep.subr.mxu0 0.0
        %2981 = vmatpush1.xpose.msra.mxu0 0.0
        %2982 = vmatprep.subr.mxu0 0.0
        %2983 = vmatpush1.xpose.msra.mxu0 0.0
        %2984 = vmatprep.subr.mxu0 0.0
        %2985 = vmatpush1.xpose.msra.mxu0 0.0
        %2986 = vmatprep.subr.mxu0 0.0
        %2987 = vmatpush1.xpose.msra.mxu0 0.0
        %2988 = vmatprep.subr.mxu0 0.0
        %2989 = vmatpush1.xpose.msra.mxu0 0.0
        %2990 = vmatprep.subr.mxu0 0.0
        %2991 = vmatpush1.xpose.msra.mxu0 0.0
        %2992 = vmatprep.subr.mxu0 0.0
        %2993 = vmatpush1.xpose.msra.mxu0 0.0
        %2994 = vmatprep.subr.mxu0 0.0
        %2995 = vmatpush1.xpose.msra.mxu0 0.0
        %2996 = vmatprep.subr.mxu0 0.0
        %2997 = vmatpush1.xpose.msra.mxu0 0.0
        %2998 = vmatprep.subr.mxu0 0.0
        %2999 = vmatpush1.xpose.msra.mxu0 0.0
        %3000 = vmatprep.subr.mxu0 0.0
        %3001 = vmatpush1.xpose.msra.mxu0 0.0
        %3002 = vmatprep.subr.mxu0 0.0
        %3003 = vmatpush1.xpose.msra.mxu0 0.0
        %3004 = vmatprep.subr.mxu0 0.0
        %3005 = vmatpush1.xpose.msra.mxu0 0.0
        %3006 = vmatprep.subr.mxu0 0.0
        %3007 = vmatpush1.xpose.msra.mxu0 0.0
        %3008 = vmatprep.subr.mxu0 0.0
        %3009 = vmatpush1.xpose.msra.mxu0 0.0
        %3010 = vmatprep.subr.mxu0 0.0
        %3011 = vmatpush1.xpose.msra.mxu0 0.0
        %3012 = vmatprep.subr.mxu0 0.0
        %3013 = vmatpush1.xpose.msra.mxu0 0.0
        %3014 = vmatprep.subr.mxu0 0.0
        %3015 = vmatpush1.xpose.msra.mxu0 0.0
        %3016 = vmatprep.subr.mxu0 0.0
        %3017 = vmatpush1.xpose.msra.mxu0 0.0
        %3018 = vmatprep.subr.mxu0 0.0
        %3019 = vmatpush1.xpose.msra.mxu0 0.0
        %3020 = vmatprep.subr.mxu0 0.0
        %3021 = vmatpush1.xpose.msra.mxu0 0.0
        %3022 = vmatprep.subr.mxu0 0.0
        %3023 = vmatpush1.xpose.msra.mxu0 0.0
        %3024 = vmatprep.subr.mxu0 0.0
        %3025 = vmatpush1.xpose.msra.mxu0 0.0
        %3026 = vmatprep.subr.mxu0 0.0
        %3027 = vmatpush1.xpose.msra.mxu0 0.0
        %3028 = vmatprep.subr.mxu0 0.0
        %3029 = vmatpush1.xpose.msra.mxu0 0.0
        %3030 = vmatprep.subr.mxu0 0.0
        %3031 = vmatpush1.xpose.msra.mxu0 0.0
        %3032 = vmatprep.subr.mxu0 0.0
        %3033 = vmatpush1.xpose.msra.mxu0 0.0
        %3034 = vmatprep.subr.mxu0 0.0
        %3035 = vmatpush1.xpose.msra.mxu0 0.0
        %3036 = vmatprep.mubr.f32.mxu0 0.0
        %3037 = vmatmul.mubr.f32.gmra.mrb[0].mxu0 %v2968
        %v3038 = vpop.f32.mrb[0].mxu0
        %v3039 = vadd.f32 0.0, %v3038
        %v3040 = vpop.f32.mrb[0].mxu0
        %3041 = vdwg.mxu0
        %v3042 = vmul.f32 %v3039, 0.25
        %v3043 = vsel %vm1452, %v3042, -1e+30
        %v3044 = vsel %vm1673, %v3043, -inf
        %3045 = vmax.xlane.f32.xlu0 %v3044
        %v3046 = vpop.xlane.xlu0 %3045
        %v3047 = vsub.f32 %v3043, %v3046
        %v3048 = vmul.f32 %v3047, 1.442695
        %v3049 = vpow.pop %v3048
        %v3050 = vsel %vm1673, %v3049, 0.0
        %3051 = vadd.xlane.f32.xlu0 %v3050
        %v3052 = vpop.xlane.xlu0 %3051
        %v3053 = vrcp.pop %v3052
        %v3054 = vmul.f32 %v3049, %v3053
        %v3056 = vsel %vm1673, %v3054, 0
        %3058 = vmatprep.subr.mxu0 0.0
        %3059 = vmatpush1.msra.mxu0 %v2954
        %3060 = vmatprep.subr.mxu0 0.0
        %3061 = vmatpush1.msra.mxu0 0.0
        %3062 = vmatprep.subr.mxu0 0.0
        %3063 = vmatpush1.msra.mxu0 0.0
        %3064 = vmatprep.subr.mxu0 0.0
        %3065 = vmatpush1.msra.mxu0 0.0
        %3066 = vmatprep.subr.mxu0 0.0
        %3067 = vmatpush1.msra.mxu0 0.0
        %3068 = vmatprep.subr.mxu0 0.0
        %3069 = vmatpush1.msra.mxu0 0.0
        %3070 = vmatprep.subr.mxu0 0.0
        %3071 = vmatpush1.msra.mxu0 0.0
        %3072 = vmatprep.subr.mxu0 0.0
        %3073 = vmatpush1.msra.mxu0 0.0
        %3074 = vmatprep.subr.mxu0 0.0
        %3075 = vmatpush1.msra.mxu0 0.0
        %3076 = vmatprep.subr.mxu0 0.0
        %3077 = vmatpush1.msra.mxu0 0.0
        %3078 = vmatprep.subr.mxu0 0.0
        %3079 = vmatpush1.msra.mxu0 0.0
        %3080 = vmatprep.subr.mxu0 0.0
        %3081 = vmatpush1.msra.mxu0 0.0
        %3082 = vmatprep.subr.mxu0 0.0
        %3083 = vmatpush1.msra.mxu0 0.0
        %3084 = vmatprep.subr.mxu0 0.0
        %3085 = vmatpush1.msra.mxu0 0.0
        %3086 = vmatprep.subr.mxu0 0.0
        %3087 = vmatpush1.msra.mxu0 0.0
        %3088 = vmatprep.subr.mxu0 0.0
        %3089 = vmatpush1.msra.mxu0 0.0
        %3090 = vmatprep.subr.mxu0 0.0
        %3091 = vmatpush1.msra.mxu0 0.0
        %3092 = vmatprep.subr.mxu0 0.0
        %3093 = vmatpush1.msra.mxu0 0.0
        %3094 = vmatprep.subr.mxu0 0.0
        %3095 = vmatpush1.msra.mxu0 0.0
        %3096 = vmatprep.subr.mxu0 0.0
        %3097 = vmatpush1.msra.mxu0 0.0
        %3098 = vmatprep.subr.mxu0 0.0
        %3099 = vmatpush1.msra.mxu0 0.0
        %3100 = vmatprep.subr.mxu0 0.0
        %3101 = vmatpush1.msra.mxu0 0.0
        %3102 = vmatprep.subr.mxu0 0.0
        %3103 = vmatpush1.msra.mxu0 0.0
        %3104 = vmatprep.subr.mxu0 0.0
        %3105 = vmatpush1.msra.mxu0 0.0
        %3106 = vmatprep.subr.mxu0 0.0
        %3107 = vmatpush1.msra.mxu0 0.0
        %3108 = vmatprep.subr.mxu0 0.0
        %3109 = vmatpush1.msra.mxu0 0.0
        %3110 = vmatprep.subr.mxu0 0.0
        %3111 = vmatpush1.msra.mxu0 0.0
        %3112 = vmatprep.subr.mxu0 0.0
        %3113 = vmatpush1.msra.mxu0 0.0
        %3114 = vmatprep.subr.mxu0 0.0
        %3115 = vmatpush1.msra.mxu0 0.0
        %3116 = vmatprep.subr.mxu0 0.0
        %3117 = vmatpush1.msra.mxu0 0.0
        %3118 = vmatprep.subr.mxu0 0.0
        %3119 = vmatpush1.msra.mxu0 0.0
        %3120 = vmatprep.subr.mxu0 0.0
        %3121 = vmatpush1.msra.mxu0 0.0
        %3122 = vmatprep.mubr.f32.mxu0 0.0
        %3123 = vmatmul.mubr.f32.gmra.mrb[0].mxu0 %v3056
        %v3124 = vpop.f32.mrb[0].mxu0
        %v3125 = vadd.f32 0.0, %v3124
        %v3126 = vpop.f32.mrb[0].mxu0
        %3127 = vdwg.mxu0
        %3128 = vrot.lane.b32.xlu0 %v2952, 112
        %v3129 = vpop.permute.xlu0 %3128
        %3130 = vrot.lane.b32.xlu0 %v2952, 48
        %v3131 = vpop.permute.xlu0 %3130
        %v3132 = vsel %vm1596, %v3129, 0
        %v3134 = vsel %vm1596, %v3131, 0
        %3136 = vmatprep.subr.mxu0 0.0
        %3137 = vmatpush1.xpose.msra.mxu0 %v3134
        %3138 = vmatprep.subr.mxu0 0.0
        %3139 = vmatpush1.xpose.msra.mxu0 0.0
        %3140 = vmatprep.subr.mxu0 0.0
        %3141 = vmatpush1.xpose.msra.mxu0 0.0
        %3142 = vmatprep.subr.mxu0 0.0
        %3143 = vmatpush1.xpose.msra.mxu0 0.0
        %3144 = vmatprep.subr.mxu0 0.0
        %3145 = vmatpush1.xpose.msra.mxu0 0.0
        %3146 = vmatprep.subr.mxu0 0.0
        %3147 = vmatpush1.xpose.msra.mxu0 0.0
        %3148 = vmatprep.subr.mxu0 0.0
        %3149 = vmatpush1.xpose.msra.mxu0 0.0
        %3150 = vmatprep.subr.mxu0 0.0
        %3151 = vmatpush1.xpose.msra.mxu0 0.0
        %3152 = vmatprep.subr.mxu0 0.0
        %3153 = vmatpush1.xpose.msra.mxu0 0.0
        %3154 = vmatprep.subr.mxu0 0.0
        %3155 = vmatpush1.xpose.msra.mxu0 0.0
        %3156 = vmatprep.subr.mxu0 0.0
        %3157 = vmatpush1.xpose.msra.mxu0 0.0
        %3158 = vmatprep.subr.mxu0 0.0
        %3159 = vmatpush1.xpose.msra.mxu0 0.0
        %3160 = vmatprep.subr.mxu0 0.0
        %3161 = vmatpush1.xpose.msra.mxu0 0.0
        %3162 = vmatprep.subr.mxu0 0.0
        %3163 = vmatpush1.xpose.msra.mxu0 0.0
        %3164 = vmatprep.subr.mxu0 0.0
        %3165 = vmatpush1.xpose.msra.mxu0 0.0
        %3166 = vmatprep.subr.mxu0 0.0
        %3167 = vmatpush1.xpose.msra.mxu0 0.0
        %3168 = vmatprep.subr.mxu0 0.0
        %3169 = vmatpush1.xpose.msra.mxu0 0.0
        %3170 = vmatprep.subr.mxu0 0.0
        %3171 = vmatpush1.xpose.msra.mxu0 0.0
        %3172 = vmatprep.subr.mxu0 0.0
        %3173 = vmatpush1.xpose.msra.mxu0 0.0
        %3174 = vmatprep.subr.mxu0 0.0
        %3175 = vmatpush1.xpose.msra.mxu0 0.0
        %3176 = vmatprep.subr.mxu0 0.0
        %3177 = vmatpush1.xpose.msra.mxu0 0.0
        %3178 = vmatprep.subr.mxu0 0.0
        %3179 = vmatpush1.xpose.msra.mxu0 0.0
        %3180 = vmatprep.subr.mxu0 0.0
        %3181 = vmatpush1.xpose.msra.mxu0 0.0
        %3182 = vmatprep.subr.mxu0 0.0
        %3183 = vmatpush1.xpose.msra.mxu0 0.0
        %3184 = vmatprep.subr.mxu0 0.0
        %3185 = vmatpush1.xpose.msra.mxu0 0.0
        %3186 = vmatprep.subr.mxu0 0.0
        %3187 = vmatpush1.xpose.msra.mxu0 0.0
        %3188 = vmatprep.subr.mxu0 0.0
        %3189 = vmatpush1.xpose.msra.mxu0 0.0
        %3190 = vmatprep.subr.mxu0 0.0
        %3191 = vmatpush1.xpose.msra.mxu0 0.0
        %3192 = vmatprep.subr.mxu0 0.0
        %3193 = vmatpush1.xpose.msra.mxu0 0.0
        %3194 = vmatprep.subr.mxu0 0.0
        %3195 = vmatpush1.xpose.msra.mxu0 0.0
        %3196 = vmatprep.subr.mxu0 0.0
        %3197 = vmatpush1.xpose.msra.mxu0 0.0
        %3198 = vmatprep.subr.mxu0 0.0
        %3199 = vmatpush1.xpose.msra.mxu0 0.0
        %3200 = vmatprep.mubr.f32.mxu0 0.0
        %3201 = vmatmul.mubr.f32.gmra.mrb[0].mxu0 %v3132
        %v3202 = vpop.f32.mrb[0].mxu0
        %v3203 = vadd.f32 0.0, %v3202
        %v3204 = vpop.f32.mrb[0].mxu0
        %3205 = vdwg.mxu0
        %v3206 = vmul.f32 %v3203, 0.25
        %v3207 = vsel %vm1452, %v3206, -1e+30
        %v3208 = vsel %vm1673, %v3207, -inf
        %3209 = vmax.xlane.f32.xlu0 %v3208
        %v3210 = vpop.xlane.xlu0 %3209
        %v3211 = vsub.f32 %v3207, %v3210
        %v3212 = vmul.f32 %v3211, 1.442695
        %v3213 = vpow.pop %v3212
        %v3214 = vsel %vm1673, %v3213, 0.0
        %3215 = vadd.xlane.f32.xlu0 %v3214
        %v3216 = vpop.xlane.xlu0 %3215
        %v3217 = vrcp.pop %v3216
        %v3218 = vmul.f32 %v3213, %v3217
        %3220 = vrot.lane.b32.xlu0 %v2954, 112
        %v3221 = vpop.permute.xlu0 %3220
        %v3224 = vsel %vm1673, %v3218, 0
        %3226 = vmatprep.subr.mxu0 0.0
        %3227 = vmatpush1.msra.mxu0 %v3221
        %3228 = vmatprep.subr.mxu0 0.0
        %3229 = vmatpush1.msra.mxu0 0.0
        %3230 = vmatprep.subr.mxu0 0.0
        %3231 = vmatpush1.msra.mxu0 0.0
        %3232 = vmatprep.subr.mxu0 0.0
        %3233 = vmatpush1.msra.mxu0 0.0
        %3234 = vmatprep.subr.mxu0 0.0
        %3235 = vmatpush1.msra.mxu0 0.0
        %3236 = vmatprep.subr.mxu0 0.0
        %3237 = vmatpush1.msra.mxu0 0.0
        %3238 = vmatprep.subr.mxu0 0.0
        %3239 = vmatpush1.msra.mxu0 0.0
        %3240 = vmatprep.subr.mxu0 0.0
        %3241 = vmatpush1.msra.mxu0 0.0
        %3242 = vmatprep.subr.mxu0 0.0
        %3243 = vmatpush1.msra.mxu0 0.0
        %3244 = vmatprep.subr.mxu0 0.0
        %3245 = vmatpush1.msra.mxu0 0.0
        %3246 = vmatprep.subr.mxu0 0.0
        %3247 = vmatpush1.msra.mxu0 0.0
        %3248 = vmatprep.subr.mxu0 0.0
        %3249 = vmatpush1.msra.mxu0 0.0
        %3250 = vmatprep.subr.mxu0 0.0
        %3251 = vmatpush1.msra.mxu0 0.0
        %3252 = vmatprep.subr.mxu0 0.0
        %3253 = vmatpush1.msra.mxu0 0.0
        %3254 = vmatprep.subr.mxu0 0.0
        %3255 = vmatpush1.msra.mxu0 0.0
        %3256 = vmatprep.subr.mxu0 0.0
        %3257 = vmatpush1.msra.mxu0 0.0
        %3258 = vmatprep.subr.mxu0 0.0
        %3259 = vmatpush1.msra.mxu0 0.0
        %3260 = vmatprep.subr.mxu0 0.0
        %3261 = vmatpush1.msra.mxu0 0.0
        %3262 = vmatprep.subr.mxu0 0.0
        %3263 = vmatpush1.msra.mxu0 0.0
        %3264 = vmatprep.subr.mxu0 0.0
        %3265 = vmatpush1.msra.mxu0 0.0
        %3266 = vmatprep.subr.mxu0 0.0
        %3267 = vmatpush1.msra.mxu0 0.0
        %3268 = vmatprep.subr.mxu0 0.0
        %3269 = vmatpush1.msra.mxu0 0.0
        %3270 = vmatprep.subr.mxu0 0.0
        %3271 = vmatpush1.msra.mxu0 0.0
        %3272 = vmatprep.subr.mxu0 0.0
        %3273 = vmatpush1.msra.mxu0 0.0
        %3274 = vmatprep.subr.mxu0 0.0
        %3275 = vmatpush1.msra.mxu0 0.0
        %3276 = vmatprep.subr.mxu0 0.0
        %3277 = vmatpush1.msra.mxu0 0.0
        %3278 = vmatprep.subr.mxu0 0.0
        %3279 = vmatpush1.msra.mxu0 0.0
        %3280 = vmatprep.subr.mxu0 0.0
        %3281 = vmatpush1.msra.mxu0 0.0
        %3282 = vmatprep.subr.mxu0 0.0
        %3283 = vmatpush1.msra.mxu0 0.0
        %3284 = vmatprep.subr.mxu0 0.0
        %3285 = vmatpush1.msra.mxu0 0.0
        %3286 = vmatprep.subr.mxu0 0.0
        %3287 = vmatpush1.msra.mxu0 0.0
        %3288 = vmatprep.subr.mxu0 0.0
        %3289 = vmatpush1.msra.mxu0 0.0
        %3290 = vmatprep.mubr.f32.mxu0 0.0
        %3291 = vmatmul.mubr.f32.gmra.mrb[0].mxu0 %v3224
        %v3292 = vpop.f32.mrb[0].mxu0
        %v3293 = vadd.f32 0.0, %v3292
        %v3294 = vpop.f32.mrb[0].mxu0
        %3295 = vdwg.mxu0
        %v3297 = vsel %vm1596, %v3293, 0
        %3299 = vmatprep.subr.mxu0 0.0
        %3300 = vmatpush1.msra.mxu0 %v2959
        %3301 = vmatprep.subr.mxu0 0.0
        %3302 = vmatpush1.msra.mxu0 %v2960
        %3303 = vmatprep.subr.mxu0 0.0
        %3304 = vmatpush1.msra.mxu0 0.0
        %3305 = vmatprep.subr.mxu0 0.0
        %3306 = vmatpush1.msra.mxu0 0.0
        %3307 = vmatprep.subr.mxu0 0.0
        %3308 = vmatpush1.msra.mxu0 0.0
        %3309 = vmatprep.subr.mxu0 0.0
        %3310 = vmatpush1.msra.mxu0 0.0
        %3311 = vmatprep.subr.mxu0 0.0
        %3312 = vmatpush1.msra.mxu0 0.0
        %3313 = vmatprep.subr.mxu0 0.0
        %3314 = vmatpush1.msra.mxu0 0.0
        %3315 = vmatprep.subr.mxu0 0.0
        %3316 = vmatpush1.msra.mxu0 0.0
        %3317 = vmatprep.subr.mxu0 0.0
        %3318 = vmatpush1.msra.mxu0 0.0
        %3319 = vmatprep.subr.mxu0 0.0
        %3320 = vmatpush1.msra.mxu0 0.0
        %3321 = vmatprep.subr.mxu0 0.0
        %3322 = vmatpush1.msra.mxu0 0.0
        %3323 = vmatprep.subr.mxu0 0.0
        %3324 = vmatpush1.msra.mxu0 0.0
        %3325 = vmatprep.subr.mxu0 0.0
        %3326 = vmatpush1.msra.mxu0 0.0
        %3327 = vmatprep.subr.mxu0 0.0
        %3328 = vmatpush1.msra.mxu0 0.0
        %3329 = vmatprep.subr.mxu0 0.0
        %3330 = vmatpush1.msra.mxu0 0.0
        %3331 = vmatprep.subr.mxu0 0.0
        %3332 = vmatpush1.msra.mxu0 0.0
        %3333 = vmatprep.subr.mxu0 0.0
        %3334 = vmatpush1.msra.mxu0 0.0
        %3335 = vmatprep.subr.mxu0 0.0
        %3336 = vmatpush1.msra.mxu0 0.0
        %3337 = vmatprep.subr.mxu0 0.0
        %3338 = vmatpush1.msra.mxu0 0.0
        %3339 = vmatprep.subr.mxu0 0.0
        %3340 = vmatpush1.msra.mxu0 0.0
        %3341 = vmatprep.subr.mxu0 0.0
        %3342 = vmatpush1.msra.mxu0 0.0
        %3343 = vmatprep.subr.mxu0 0.0
        %3344 = vmatpush1.msra.mxu0 0.0
        %3345 = vmatprep.subr.mxu0 0.0
        %3346 = vmatpush1.msra.mxu0 0.0
        %3347 = vmatprep.subr.mxu0 0.0
        %3348 = vmatpush1.msra.mxu0 0.0
        %3349 = vmatprep.subr.mxu0 0.0
        %3350 = vmatpush1.msra.mxu0 0.0
        %3351 = vmatprep.subr.mxu0 0.0
        %3352 = vmatpush1.msra.mxu0 0.0
        %3353 = vmatprep.subr.mxu0 0.0
        %3354 = vmatpush1.msra.mxu0 0.0
        %3355 = vmatprep.subr.mxu0 0.0
        %3356 = vmatpush1.msra.mxu0 0.0
        %3357 = vmatprep.subr.mxu0 0.0
        %3358 = vmatpush1.msra.mxu0 0.0
        %3359 = vmatprep.subr.mxu0 0.0
        %3360 = vmatpush1.msra.mxu0 0.0
        %3361 = vmatprep.subr.mxu0 0.0
        %3362 = vmatpush1.msra.mxu0 0.0
        %3363 = vmatprep.mubr.f32.mxu0 0.0
        %3364 = vmatmul.mubr.f32.gmra.mrb[0].mxu0 %v3297
        %v3365 = vpop.f32.mrb[0].mxu0
        %v3366 = vadd.f32 0.0, %v3365
        %v3367 = vpop.f32.mrb[0].mxu0
        %3368 = vdwg.mxu0
        %v3370 = vsel %vm1596, %v3125, 0
        %3372 = vmatprep.subr.mxu0 0.0
        %3373 = vmatpush1.msra.mxu0 %v2957
        %3374 = vmatprep.subr.mxu0 0.0
        %3375 = vmatpush1.msra.mxu0 %v2958
        %3376 = vmatprep.subr.mxu0 0.0
        %3377 = vmatpush1.msra.mxu0 0.0
        %3378 = vmatprep.subr.mxu0 0.0
        %3379 = vmatpush1.msra.mxu0 0.0
        %3380 = vmatprep.subr.mxu0 0.0
        %3381 = vmatpush1.msra.mxu0 0.0
        %3382 = vmatprep.subr.mxu0 0.0
        %3383 = vmatpush1.msra.mxu0 0.0
        %3384 = vmatprep.subr.mxu0 0.0
        %3385 = vmatpush1.msra.mxu0 0.0
        %3386 = vmatprep.subr.mxu0 0.0
        %3387 = vmatpush1.msra.mxu0 0.0
        %3388 = vmatprep.subr.mxu0 0.0
        %3389 = vmatpush1.msra.mxu0 0.0
        %3390 = vmatprep.subr.mxu0 0.0
        %3391 = vmatpush1.msra.mxu0 0.0
        %3392 = vmatprep.subr.mxu0 0.0
        %3393 = vmatpush1.msra.mxu0 0.0
        %3394 = vmatprep.subr.mxu0 0.0
        %3395 = vmatpush1.msra.mxu0 0.0
        %3396 = vmatprep.subr.mxu0 0.0
        %3397 = vmatpush1.msra.mxu0 0.0
        %3398 = vmatprep.subr.mxu0 0.0
        %3399 = vmatpush1.msra.mxu0 0.0
        %3400 = vmatprep.subr.mxu0 0.0
        %3401 = vmatpush1.msra.mxu0 0.0
        %3402 = vmatprep.subr.mxu0 0.0
        %3403 = vmatpush1.msra.mxu0 0.0
        %3404 = vmatprep.subr.mxu0 0.0
        %3405 = vmatpush1.msra.mxu0 0.0
        %3406 = vmatprep.subr.mxu0 0.0
        %3407 = vmatpush1.msra.mxu0 0.0
        %3408 = vmatprep.subr.mxu0 0.0
        %3409 = vmatpush1.msra.mxu0 0.0
        %3410 = vmatprep.subr.mxu0 0.0
        %3411 = vmatpush1.msra.mxu0 0.0
        %3412 = vmatprep.subr.mxu0 0.0
        %3413 = vmatpush1.msra.mxu0 0.0
        %3414 = vmatprep.subr.mxu0 0.0
        %3415 = vmatpush1.msra.mxu0 0.0
        %3416 = vmatprep.subr.mxu0 0.0
        %3417 = vmatpush1.msra.mxu0 0.0
        %3418 = vmatprep.subr.mxu0 0.0
        %3419 = vmatpush1.msra.mxu0 0.0
        %3420 = vmatprep.subr.mxu0 0.0
        %3421 = vmatpush1.msra.mxu0 0.0
        %3422 = vmatprep.subr.mxu0 0.0
        %3423 = vmatpush1.msra.mxu0 0.0
        %3424 = vmatprep.subr.mxu0 0.0
        %3425 = vmatpush1.msra.mxu0 0.0
        %3426 = vmatprep.subr.mxu0 0.0
        %3427 = vmatpush1.msra.mxu0 0.0
        %3428 = vmatprep.subr.mxu0 0.0
        %3429 = vmatpush1.msra.mxu0 0.0
        %3430 = vmatprep.subr.mxu0 0.0
        %3431 = vmatpush1.msra.mxu0 0.0
        %3432 = vmatprep.subr.mxu0 0.0
        %3433 = vmatpush1.msra.mxu0 0.0
        %3434 = vmatprep.subr.mxu0 0.0
        %3435 = vmatpush1.msra.mxu0 0.0
        %3436 = vmatprep.mubr.f32.mxu0 0.0
        %3437 = vmatmul.mubr.f32.gmra.mrb[0].mxu0 %v3370
        %v3438 = vpop.f32.mrb[0].mxu0
        %v3439 = vadd.f32 %v3366, %v3438
        %v3440 = vpop.f32.mrb[0].mxu0
        %3441 = vdwg.mxu0
        %3442 = vrot.lane.b32.xlu0 %v2952, 96
        %v3443 = vpop.permute.xlu0 %3442
        %3444 = vrot.lane.b32.xlu0 %v2952, 32
        %v3445 = vpop.permute.xlu0 %3444
        %v3446 = vsel %vm1596, %v3443, 0
        %v3448 = vsel %vm1596, %v3445, 0
        %3450 = vmatprep.subr.mxu0 0.0
        %3451 = vmatpush1.xpose.msra.mxu0 %v3448
        %3452 = vmatprep.subr.mxu0 0.0
        %3453 = vmatpush1.xpose.msra.mxu0 0.0
        %3454 = vmatprep.subr.mxu0 0.0
        %3455 = vmatpush1.xpose.msra.mxu0 0.0
        %3456 = vmatprep.subr.mxu0 0.0
        %3457 = vmatpush1.xpose.msra.mxu0 0.0
        %3458 = vmatprep.subr.mxu0 0.0
        %3459 = vmatpush1.xpose.msra.mxu0 0.0
        %3460 = vmatprep.subr.mxu0 0.0
        %3461 = vmatpush1.xpose.msra.mxu0 0.0
        %3462 = vmatprep.subr.mxu0 0.0
        %3463 = vmatpush1.xpose.msra.mxu0 0.0
        %3464 = vmatprep.subr.mxu0 0.0
        %3465 = vmatpush1.xpose.msra.mxu0 0.0
        %3466 = vmatprep.subr.mxu0 0.0
        %3467 = vmatpush1.xpose.msra.mxu0 0.0
        %3468 = vmatprep.subr.mxu0 0.0
        %3469 = vmatpush1.xpose.msra.mxu0 0.0
        %3470 = vmatprep.subr.mxu0 0.0
        %3471 = vmatpush1.xpose.msra.mxu0 0.0
        %3472 = vmatprep.subr.mxu0 0.0
        %3473 = vmatpush1.xpose.msra.mxu0 0.0
        %3474 = vmatprep.subr.mxu0 0.0
        %3475 = vmatpush1.xpose.msra.mxu0 0.0
        %3476 = vmatprep.subr.mxu0 0.0
        %3477 = vmatpush1.xpose.msra.mxu0 0.0
        %3478 = vmatprep.subr.mxu0 0.0
        %3479 = vmatpush1.xpose.msra.mxu0 0.0
        %3480 = vmatprep.subr.mxu0 0.0
        %3481 = vmatpush1.xpose.msra.mxu0 0.0
        %3482 = vmatprep.subr.mxu0 0.0
        %3483 = vmatpush1.xpose.msra.mxu0 0.0
        %3484 = vmatprep.subr.mxu0 0.0
        %3485 = vmatpush1.xpose.msra.mxu0 0.0
        %3486 = vmatprep.subr.mxu0 0.0
        %3487 = vmatpush1.xpose.msra.mxu0 0.0
        %3488 = vmatprep.subr.mxu0 0.0
        %3489 = vmatpush1.xpose.msra.mxu0 0.0
        %3490 = vmatprep.subr.mxu0 0.0
        %3491 = vmatpush1.xpose.msra.mxu0 0.0
        %3492 = vmatprep.subr.mxu0 0.0
        %3493 = vmatpush1.xpose.msra.mxu0 0.0
        %3494 = vmatprep.subr.mxu0 0.0
        %3495 = vmatpush1.xpose.msra.mxu0 0.0
        %3496 = vmatprep.subr.mxu0 0.0
        %3497 = vmatpush1.xpose.msra.mxu0 0.0
        %3498 = vmatprep.subr.mxu0 0.0
        %3499 = vmatpush1.xpose.msra.mxu0 0.0
        %3500 = vmatprep.subr.mxu0 0.0
        %3501 = vmatpush1.xpose.msra.mxu0 0.0
        %3502 = vmatprep.subr.mxu0 0.0
        %3503 = vmatpush1.xpose.msra.mxu0 0.0
        %3504 = vmatprep.subr.mxu0 0.0
        %3505 = vmatpush1.xpose.msra.mxu0 0.0
        %3506 = vmatprep.subr.mxu0 0.0
        %3507 = vmatpush1.xpose.msra.mxu0 0.0
        %3508 = vmatprep.subr.mxu0 0.0
        %3509 = vmatpush1.xpose.msra.mxu0 0.0
        %3510 = vmatprep.subr.mxu0 0.0
        %3511 = vmatpush1.xpose.msra.mxu0 0.0
        %3512 = vmatprep.subr.mxu0 0.0
        %3513 = vmatpush1.xpose.msra.mxu0 0.0
        %3514 = vmatprep.mubr.f32.mxu0 0.0
        %3515 = vmatmul.mubr.f32.gmra.mrb[0].mxu0 %v3446
        %v3516 = vpop.f32.mrb[0].mxu0
        %v3517 = vadd.f32 0.0, %v3516
        %v3518 = vpop.f32.mrb[0].mxu0
        %3519 = vdwg.mxu0
        %v3520 = vmul.f32 %v3517, 0.25
        %v3521 = vsel %vm1452, %v3520, -1e+30
        %v3522 = vsel %vm1673, %v3521, -inf
        %3523 = vmax.xlane.f32.xlu0 %v3522
        %v3524 = vpop.xlane.xlu0 %3523
        %v3525 = vsub.f32 %v3521, %v3524
        %v3526 = vmul.f32 %v3525, 1.442695
        %v3527 = vpow.pop %v3526
        %v3528 = vsel %vm1673, %v3527, 0.0
        %3529 = vadd.xlane.f32.xlu0 %v3528
        %v3530 = vpop.xlane.xlu0 %3529
        %v3531 = vrcp.pop %v3530
        %v3532 = vmul.f32 %v3527, %v3531
        %3533 = vrot.lane.b32.xlu0 %v2954, 96
        %v3534 = vpop.permute.xlu0 %3533
        %v3537 = vsel %vm1673, %v3532, 0
        %3539 = vmatprep.subr.mxu0 0.0
        %3540 = vmatpush1.msra.mxu0 %v3534
        %3541 = vmatprep.subr.mxu0 0.0
        %3542 = vmatpush1.msra.mxu0 0.0
        %3543 = vmatprep.subr.mxu0 0.0
        %3544 = vmatpush1.msra.mxu0 0.0
        %3545 = vmatprep.subr.mxu0 0.0
        %3546 = vmatpush1.msra.mxu0 0.0
        %3547 = vmatprep.subr.mxu0 0.0
        %3548 = vmatpush1.msra.mxu0 0.0
        %3549 = vmatprep.subr.mxu0 0.0
        %3550 = vmatpush1.msra.mxu0 0.0
        %3551 = vmatprep.subr.mxu0 0.0
        %3552 = vmatpush1.msra.mxu0 0.0
        %3553 = vmatprep.subr.mxu0 0.0
        %3554 = vmatpush1.msra.mxu0 0.0
        %3555 = vmatprep.subr.mxu0 0.0
        %3556 = vmatpush1.msra.mxu0 0.0
        %3557 = vmatprep.subr.mxu0 0.0
        %3558 = vmatpush1.msra.mxu0 0.0
        %3559 = vmatprep.subr.mxu0 0.0
        %3560 = vmatpush1.msra.mxu0 0.0
        %3561 = vmatprep.subr.mxu0 0.0
        %3562 = vmatpush1.msra.mxu0 0.0
        %3563 = vmatprep.subr.mxu0 0.0
        %3564 = vmatpush1.msra.mxu0 0.0
        %3565 = vmatprep.subr.mxu0 0.0
        %3566 = vmatpush1.msra.mxu0 0.0
        %3567 = vmatprep.subr.mxu0 0.0
        %3568 = vmatpush1.msra.mxu0 0.0
        %3569 = vmatprep.subr.mxu0 0.0
        %3570 = vmatpush1.msra.mxu0 0.0
        %3571 = vmatprep.subr.mxu0 0.0
        %3572 = vmatpush1.msra.mxu0 0.0
        %3573 = vmatprep.subr.mxu0 0.0
        %3574 = vmatpush1.msra.mxu0 0.0
        %3575 = vmatprep.subr.mxu0 0.0
        %3576 = vmatpush1.msra.mxu0 0.0
        %3577 = vmatprep.subr.mxu0 0.0
        %3578 = vmatpush1.msra.mxu0 0.0
        %3579 = vmatprep.subr.mxu0 0.0
        %3580 = vmatpush1.msra.mxu0 0.0
        %3581 = vmatprep.subr.mxu0 0.0
        %3582 = vmatpush1.msra.mxu0 0.0
        %3583 = vmatprep.subr.mxu0 0.0
        %3584 = vmatpush1.msra.mxu0 0.0
        %3585 = vmatprep.subr.mxu0 0.0
        %3586 = vmatpush1.msra.mxu0 0.0
        %3587 = vmatprep.subr.mxu0 0.0
        %3588 = vmatpush1.msra.mxu0 0.0
        %3589 = vmatprep.subr.mxu0 0.0
        %3590 = vmatpush1.msra.mxu0 0.0
        %3591 = vmatprep.subr.mxu0 0.0
        %3592 = vmatpush1.msra.mxu0 0.0
        %3593 = vmatprep.subr.mxu0 0.0
        %3594 = vmatpush1.msra.mxu0 0.0
        %3595 = vmatprep.subr.mxu0 0.0
        %3596 = vmatpush1.msra.mxu0 0.0
        %3597 = vmatprep.subr.mxu0 0.0
        %3598 = vmatpush1.msra.mxu0 0.0
        %3599 = vmatprep.subr.mxu0 0.0
        %3600 = vmatpush1.msra.mxu0 0.0
        %3601 = vmatprep.subr.mxu0 0.0
        %3602 = vmatpush1.msra.mxu0 0.0
        %3603 = vmatprep.mubr.f32.mxu0 0.0
        %3604 = vmatmul.mubr.f32.gmra.mrb[0].mxu0 %v3537
        %v3605 = vpop.f32.mrb[0].mxu0
        %v3606 = vadd.f32 0.0, %v3605
        %v3607 = vpop.f32.mrb[0].mxu0
        %3608 = vdwg.mxu0
        %v3610 = vsel %vm1596, %v3606, 0
        %3612 = vmatprep.subr.mxu0 0.0
        %3613 = vmatpush1.msra.mxu0 %v2961
        %3614 = vmatprep.subr.mxu0 0.0
        %3615 = vmatpush1.msra.mxu0 %v2962
        %3616 = vmatprep.subr.mxu0 0.0
        %3617 = vmatpush1.msra.mxu0 0.0
        %3618 = vmatprep.subr.mxu0 0.0
        %3619 = vmatpush1.msra.mxu0 0.0
        %3620 = vmatprep.subr.mxu0 0.0
        %3621 = vmatpush1.msra.mxu0 0.0
        %3622 = vmatprep.subr.mxu0 0.0
        %3623 = vmatpush1.msra.mxu0 0.0
        %3624 = vmatprep.subr.mxu0 0.0
        %3625 = vmatpush1.msra.mxu0 0.0
        %3626 = vmatprep.subr.mxu0 0.0
        %3627 = vmatpush1.msra.mxu0 0.0
        %3628 = vmatprep.subr.mxu0 0.0
        %3629 = vmatpush1.msra.mxu0 0.0
        %3630 = vmatprep.subr.mxu0 0.0
        %3631 = vmatpush1.msra.mxu0 0.0
        %3632 = vmatprep.subr.mxu0 0.0
        %3633 = vmatpush1.msra.mxu0 0.0
        %3634 = vmatprep.subr.mxu0 0.0
        %3635 = vmatpush1.msra.mxu0 0.0
        %3636 = vmatprep.subr.mxu0 0.0
        %3637 = vmatpush1.msra.mxu0 0.0
        %3638 = vmatprep.subr.mxu0 0.0
        %3639 = vmatpush1.msra.mxu0 0.0
        %3640 = vmatprep.subr.mxu0 0.0
        %3641 = vmatpush1.msra.mxu0 0.0
        %3642 = vmatprep.subr.mxu0 0.0
        %3643 = vmatpush1.msra.mxu0 0.0
        %3644 = vmatprep.subr.mxu0 0.0
        %3645 = vmatpush1.msra.mxu0 0.0
        %3646 = vmatprep.subr.mxu0 0.0
        %3647 = vmatpush1.msra.mxu0 0.0
        %3648 = vmatprep.subr.mxu0 0.0
        %3649 = vmatpush1.msra.mxu0 0.0
        %3650 = vmatprep.subr.mxu0 0.0
        %3651 = vmatpush1.msra.mxu0 0.0
        %3652 = vmatprep.subr.mxu0 0.0
        %3653 = vmatpush1.msra.mxu0 0.0
        %3654 = vmatprep.subr.mxu0 0.0
        %3655 = vmatpush1.msra.mxu0 0.0
        %3656 = vmatprep.subr.mxu0 0.0
        %3657 = vmatpush1.msra.mxu0 0.0
        %3658 = vmatprep.subr.mxu0 0.0
        %3659 = vmatpush1.msra.mxu0 0.0
        %3660 = vmatprep.subr.mxu0 0.0
        %3661 = vmatpush1.msra.mxu0 0.0
        %3662 = vmatprep.subr.mxu0 0.0
        %3663 = vmatpush1.msra.mxu0 0.0
        %3664 = vmatprep.subr.mxu0 0.0
        %3665 = vmatpush1.msra.mxu0 0.0
        %3666 = vmatprep.subr.mxu0 0.0
        %3667 = vmatpush1.msra.mxu0 0.0
        %3668 = vmatprep.subr.mxu0 0.0
        %3669 = vmatpush1.msra.mxu0 0.0
        %3670 = vmatprep.subr.mxu0 0.0
        %3671 = vmatpush1.msra.mxu0 0.0
        %3672 = vmatprep.subr.mxu0 0.0
        %3673 = vmatpush1.msra.mxu0 0.0
        %3674 = vmatprep.subr.mxu0 0.0
        %3675 = vmatpush1.msra.mxu0 0.0
        %3676 = vmatprep.mubr.f32.mxu0 0.0
        %3677 = vmatmul.mubr.f32.gmra.mrb[0].mxu0 %v3610
        %v3678 = vpop.f32.mrb[0].mxu0
        %v3679 = vadd.f32 0.0, %v3678
        %v3680 = vpop.f32.mrb[0].mxu0
        %3681 = vdwg.mxu0
        %v3682 = vadd.f32 %v3439, %v3679
        %3683 = vrot.lane.b32.xlu0 %v2952, 80
        %v3684 = vpop.permute.xlu0 %3683
        %3685 = vrot.lane.b32.xlu0 %v2952, 16
        %v3686 = vpop.permute.xlu0 %3685
        %v3687 = vsel %vm1596, %v3684, 0
        %v3689 = vsel %vm1596, %v3686, 0
        %3691 = vmatprep.subr.mxu0 0.0
        %3692 = vmatpush1.xpose.msra.mxu0 %v3689
        %3693 = vmatprep.subr.mxu0 0.0
        %3694 = vmatpush1.xpose.msra.mxu0 0.0
        %3695 = vmatprep.subr.mxu0 0.0
        %3696 = vmatpush1.xpose.msra.mxu0 0.0
        %3697 = vmatprep.subr.mxu0 0.0
        %3698 = vmatpush1.xpose.msra.mxu0 0.0
        %3699 = vmatprep.subr.mxu0 0.0
        %3700 = vmatpush1.xpose.msra.mxu0 0.0
        %3701 = vmatprep.subr.mxu0 0.0
        %3702 = vmatpush1.xpose.msra.mxu0 0.0
        %3703 = vmatprep.subr.mxu0 0.0
        %3704 = vmatpush1.xpose.msra.mxu0 0.0
        %3705 = vmatprep.subr.mxu0 0.0
        %3706 = vmatpush1.xpose.msra.mxu0 0.0
        %3707 = vmatprep.subr.mxu0 0.0
        %3708 = vmatpush1.xpose.msra.mxu0 0.0
        %3709 = vmatprep.subr.mxu0 0.0
        %3710 = vmatpush1.xpose.msra.mxu0 0.0
        %3711 = vmatprep.subr.mxu0 0.0
        %3712 = vmatpush1.xpose.msra.mxu0 0.0
        %3713 = vmatprep.subr.mxu0 0.0
        %3714 = vmatpush1.xpose.msra.mxu0 0.0
        %3715 = vmatprep.subr.mxu0 0.0
        %3716 = vmatpush1.xpose.msra.mxu0 0.0
        %3717 = vmatprep.subr.mxu0 0.0
        %3718 = vmatpush1.xpose.msra.mxu0 0.0
        %3719 = vmatprep.subr.mxu0 0.0
        %3720 = vmatpush1.xpose.msra.mxu0 0.0
        %3721 = vmatprep.subr.mxu0 0.0
        %3722 = vmatpush1.xpose.msra.mxu0 0.0
        %3723 = vmatprep.subr.mxu0 0.0
        %3724 = vmatpush1.xpose.msra.mxu0 0.0
        %3725 = vmatprep.subr.mxu0 0.0
        %3726 = vmatpush1.xpose.msra.mxu0 0.0
        %3727 = vmatprep.subr.mxu0 0.0
        %3728 = vmatpush1.xpose.msra.mxu0 0.0
        %3729 = vmatprep.subr.mxu0 0.0
        %3730 = vmatpush1.xpose.msra.mxu0 0.0
        %3731 = vmatprep.subr.mxu0 0.0
        %3732 = vmatpush1.xpose.msra.mxu0 0.0
        %3733 = vmatprep.subr.mxu0 0.0
        %3734 = vmatpush1.xpose.msra.mxu0 0.0
        %3735 = vmatprep.subr.mxu0 0.0
        %3736 = vmatpush1.xpose.msra.mxu0 0.0
        %3737 = vmatprep.subr.mxu0 0.0
        %3738 = vmatpush1.xpose.msra.mxu0 0.0
        %3739 = vmatprep.subr.mxu0 0.0
        %3740 = vmatpush1.xpose.msra.mxu0 0.0
        %3741 = vmatprep.subr.mxu0 0.0
        %3742 = vmatpush1.xpose.msra.mxu0 0.0
        %3743 = vmatprep.subr.mxu0 0.0
        %3744 = vmatpush1.xpose.msra.mxu0 0.0
        %3745 = vmatprep.subr.mxu0 0.0
        %3746 = vmatpush1.xpose.msra.mxu0 0.0
        %3747 = vmatprep.subr.mxu0 0.0
        %3748 = vmatpush1.xpose.msra.mxu0 0.0
        %3749 = vmatprep.subr.mxu0 0.0
        %3750 = vmatpush1.xpose.msra.mxu0 0.0
        %3751 = vmatprep.subr.mxu0 0.0
        %3752 = vmatpush1.xpose.msra.mxu0 0.0
        %3753 = vmatprep.subr.mxu0 0.0
        %3754 = vmatpush1.xpose.msra.mxu0 0.0
        %3755 = vmatprep.mubr.f32.mxu0 0.0
        %3756 = vmatmul.mubr.f32.gmra.mrb[0].mxu0 %v3687
        %v3757 = vpop.f32.mrb[0].mxu0
        %v3758 = vadd.f32 0.0, %v3757
        %v3759 = vpop.f32.mrb[0].mxu0
        %3760 = vdwg.mxu0
        %v3761 = vmul.f32 %v3758, 0.25
        %v3762 = vsel %vm1452, %v3761, -1e+30
        %v3763 = vsel %vm1673, %v3762, -inf
        %3764 = vmax.xlane.f32.xlu0 %v3763
        %v3765 = vpop.xlane.xlu0 %3764
        %v3766 = vsub.f32 %v3762, %v3765
        %v3767 = vmul.f32 %v3766, 1.442695
        %v3768 = vpow.pop %v3767
        %v3769 = vsel %vm1673, %v3768, 0.0
        %3770 = vadd.xlane.f32.xlu0 %v3769
        %v3771 = vpop.xlane.xlu0 %3770
        %v3772 = vrcp.pop %v3771
        %v3773 = vmul.f32 %v3768, %v3772
        %3774 = vrot.lane.b32.xlu0 %v2954, 80
        %v3775 = vpop.permute.xlu0 %3774
        %v3778 = vsel %vm1673, %v3773, 0
        %3780 = vmatprep.subr.mxu0 0.0
        %3781 = vmatpush1.msra.mxu0 %v3775
        %3782 = vmatprep.subr.mxu0 0.0
        %3783 = vmatpush1.msra.mxu0 0.0
        %3784 = vmatprep.subr.mxu0 0.0
        %3785 = vmatpush1.msra.mxu0 0.0
        %3786 = vmatprep.subr.mxu0 0.0
        %3787 = vmatpush1.msra.mxu0 0.0
        %3788 = vmatprep.subr.mxu0 0.0
        %3789 = vmatpush1.msra.mxu0 0.0
        %3790 = vmatprep.subr.mxu0 0.0
        %3791 = vmatpush1.msra.mxu0 0.0
        %3792 = vmatprep.subr.mxu0 0.0
        %3793 = vmatpush1.msra.mxu0 0.0
        %3794 = vmatprep.subr.mxu0 0.0
        %3795 = vmatpush1.msra.mxu0 0.0
        %3796 = vmatprep.subr.mxu0 0.0
        %3797 = vmatpush1.msra.mxu0 0.0
        %3798 = vmatprep.subr.mxu0 0.0
        %3799 = vmatpush1.msra.mxu0 0.0
        %3800 = vmatprep.subr.mxu0 0.0
        %3801 = vmatpush1.msra.mxu0 0.0
        %3802 = vmatprep.subr.mxu0 0.0
        %3803 = vmatpush1.msra.mxu0 0.0
        %3804 = vmatprep.subr.mxu0 0.0
        %3805 = vmatpush1.msra.mxu0 0.0
        %3806 = vmatprep.subr.mxu0 0.0
        %3807 = vmatpush1.msra.mxu0 0.0
        %3808 = vmatprep.subr.mxu0 0.0
        %3809 = vmatpush1.msra.mxu0 0.0
        %3810 = vmatprep.subr.mxu0 0.0
        %3811 = vmatpush1.msra.mxu0 0.0
        %3812 = vmatprep.subr.mxu0 0.0
        %3813 = vmatpush1.msra.mxu0 0.0
        %3814 = vmatprep.subr.mxu0 0.0
        %3815 = vmatpush1.msra.mxu0 0.0
        %3816 = vmatprep.subr.mxu0 0.0
        %3817 = vmatpush1.msra.mxu0 0.0
        %3818 = vmatprep.subr.mxu0 0.0
        %3819 = vmatpush1.msra.mxu0 0.0
        %3820 = vmatprep.subr.mxu0 0.0
        %3821 = vmatpush1.msra.mxu0 0.0
        %3822 = vmatprep.subr.mxu0 0.0
        %3823 = vmatpush1.msra.mxu0 0.0
        %3824 = vmatprep.subr.mxu0 0.0
        %3825 = vmatpush1.msra.mxu0 0.0
        %3826 = vmatprep.subr.mxu0 0.0
        %3827 = vmatpush1.msra.mxu0 0.0
        %3828 = vmatprep.subr.mxu0 0.0
        %3829 = vmatpush1.msra.mxu0 0.0
        %3830 = vmatprep.subr.mxu0 0.0
        %3831 = vmatpush1.msra.mxu0 0.0
        %3832 = vmatprep.subr.mxu0 0.0
        %3833 = vmatpush1.msra.mxu0 0.0
        %3834 = vmatprep.subr.mxu0 0.0
        %3835 = vmatpush1.msra.mxu0 0.0
        %3836 = vmatprep.subr.mxu0 0.0
        %3837 = vmatpush1.msra.mxu0 0.0
        %3838 = vmatprep.subr.mxu0 0.0
        %3839 = vmatpush1.msra.mxu0 0.0
        %3840 = vmatprep.subr.mxu0 0.0
        %3841 = vmatpush1.msra.mxu0 0.0
        %3842 = vmatprep.subr.mxu0 0.0
        %3843 = vmatpush1.msra.mxu0 0.0
        %3844 = vmatprep.mubr.f32.mxu0 0.0
        %3845 = vmatmul.mubr.f32.gmra.mrb[0].mxu0 %v3778
        %v3846 = vpop.f32.mrb[0].mxu0
        %v3847 = vadd.f32 0.0, %v3846
        %v3848 = vpop.f32.mrb[0].mxu0
        %3849 = vdwg.mxu0
        %v3851 = vsel %vm1596, %v3847, 0
        %3853 = vmatprep.subr.mxu0 0.0
        %3854 = vmatpush1.msra.mxu0 %v2963
        %3855 = vmatprep.subr.mxu0 0.0
        %3856 = vmatpush1.msra.mxu0 %v2964
        %3857 = vmatprep.subr.mxu0 0.0
        %3858 = vmatpush1.msra.mxu0 0.0
        %3859 = vmatprep.subr.mxu0 0.0
        %3860 = vmatpush1.msra.mxu0 0.0
        %3861 = vmatprep.subr.mxu0 0.0
        %3862 = vmatpush1.msra.mxu0 0.0
        %3863 = vmatprep.subr.mxu0 0.0
        %3864 = vmatpush1.msra.mxu0 0.0
        %3865 = vmatprep.subr.mxu0 0.0
        %3866 = vmatpush1.msra.mxu0 0.0
        %3867 = vmatprep.subr.mxu0 0.0
        %3868 = vmatpush1.msra.mxu0 0.0
        %3869 = vmatprep.subr.mxu0 0.0
        %3870 = vmatpush1.msra.mxu0 0.0
        %3871 = vmatprep.subr.mxu0 0.0
        %3872 = vmatpush1.msra.mxu0 0.0
        %3873 = vmatprep.subr.mxu0 0.0
        %3874 = vmatpush1.msra.mxu0 0.0
        %3875 = vmatprep.subr.mxu0 0.0
        %3876 = vmatpush1.msra.mxu0 0.0
        %3877 = vmatprep.subr.mxu0 0.0
        %3878 = vmatpush1.msra.mxu0 0.0
        %3879 = vmatprep.subr.mxu0 0.0
        %3880 = vmatpush1.msra.mxu0 0.0
        %3881 = vmatprep.subr.mxu0 0.0
        %3882 = vmatpush1.msra.mxu0 0.0
        %3883 = vmatprep.subr.mxu0 0.0
        %3884 = vmatpush1.msra.mxu0 0.0
        %3885 = vmatprep.subr.mxu0 0.0
        %3886 = vmatpush1.msra.mxu0 0.0
        %3887 = vmatprep.subr.mxu0 0.0
        %3888 = vmatpush1.msra.mxu0 0.0
        %3889 = vmatprep.subr.mxu0 0.0
        %3890 = vmatpush1.msra.mxu0 0.0
        %3891 = vmatprep.subr.mxu0 0.0
        %3892 = vmatpush1.msra.mxu0 0.0
        %3893 = vmatprep.subr.mxu0 0.0
        %3894 = vmatpush1.msra.mxu0 0.0
        %3895 = vmatprep.subr.mxu0 0.0
        %3896 = vmatpush1.msra.mxu0 0.0
        %3897 = vmatprep.subr.mxu0 0.0
        %3898 = vmatpush1.msra.mxu0 0.0
        %3899 = vmatprep.subr.mxu0 0.0
        %3900 = vmatpush1.msra.mxu0 0.0
        %3901 = vmatprep.subr.mxu0 0.0
        %3902 = vmatpush1.msra.mxu0 0.0
        %3903 = vmatprep.subr.mxu0 0.0
        %3904 = vmatpush1.msra.mxu0 0.0
        %3905 = vmatprep.subr.mxu0 0.0
        %3906 = vmatpush1.msra.mxu0 0.0
        %3907 = vmatprep.subr.mxu0 0.0
        %3908 = vmatpush1.msra.mxu0 0.0
        %3909 = vmatprep.subr.mxu0 0.0
        %3910 = vmatpush1.msra.mxu0 0.0
        %3911 = vmatprep.subr.mxu0 0.0
        %3912 = vmatpush1.msra.mxu0 0.0
        %3913 = vmatprep.subr.mxu0 0.0
        %3914 = vmatpush1.msra.mxu0 0.0
        %3915 = vmatprep.subr.mxu0 0.0
        %3916 = vmatpush1.msra.mxu0 0.0
        %3917 = vmatprep.mubr.f32.mxu0 0.0
        %3918 = vmatmul.mubr.f32.gmra.mrb[0].mxu0 %v3851
        %v3919 = vpop.f32.mrb[0].mxu0
        %v3920 = vadd.f32 0.0, %v3919
        %v3921 = vpop.f32.mrb[0].mxu0
        %3922 = vdwg.mxu0
        %v3923 = vadd.f32 %v3682, %v3920
        %v3924 = vadd.f32 %v2820, %v3923
        %s3925 = scalar_lea.vmem %s33, 1
        %v3926 = vld [vmem:[%s3925] sm:$0x1]
        %v3928 = vlaneseq
        %v3929 = vshrl.u32 %v3928, 7
        %v3930 = vsub.s32 0, %v3929
        %v3931 = vrot.slane %v3926, %v3930
        %v3933 = vadd.f32 %v3924, %v3931
        %s3934 = scalar_lea.vmem %s35, 1
        %v3935 = vld [vmem:[%s3934] sm:$0x1]
        %s3936 = scalar_lea.vmem %s37, 1
        %v3937 = vld [vmem:[%s3936] sm:$0x1]
        %v3938 = vsel %vm1281, %v3933, 0.0
        %3939 = vadd.xlane.f32.xlu0 %v3938
        %v3940 = vpop.xlane.xlu0 %3939
        %v3941 = vmul.f32 %v3940, %v1458
        %v3942 = vsub.f32 %v3933, %v3941
        %v3943 = vmul.f32 %v3942, %v3942
        %v3944 = vsel %vm1281, %v3943, 0.0
        %3945 = vadd.xlane.f32.xlu0 %v3944
        %v3946 = vpop.xlane.xlu0 %3945
        %v3947 = vmul.f32 %v3946, %v1458
        %v3948 = vadd.f32 %v3947, 1e-05
        %v3949 = vrsqrt.pop %v3948
        %v3950 = vmul.f32 %v3942, %v3949
        %v3952 = vlaneseq
        %v3953 = vshrl.u32 %v3952, 7
        %v3954 = vsub.s32 0, %v3953
        %v3955 = vrot.slane %v3935, %v3954
        %v3957 = vmul.f32 %v3950, %v3955
        %v3959 = vlaneseq
        %v3960 = vshrl.u32 %v3959, 7
        %v3961 = vsub.s32 0, %v3960
        %v3962 = vrot.slane %v3937, %v3961
        %v3964 = vadd.f32 %v3957, %v3962
        %s3965 = scalar_lea.vmem %s39, 128
        %v3966 = vld [vmem:[%s3965] sm:$0xff]
        %v3967 = vld [vmem:[%s3965 + $0x8] sm:$0xff]
        %v3968 = vld [vmem:[%s3965 + $0x10] sm:$0xff]
        %v3969 = vld [vmem:[%s3965 + $0x18] sm:$0xff]
        %v3970 = vld [vmem:[%s3965 + $0x20] sm:$0xff]
        %v3971 = vld [vmem:[%s3965 + $0x28] sm:$0xff]
        %v3972 = vld [vmem:[%s3965 + $0x30] sm:$0xff]
        %v3973 = vld [vmem:[%s3965 + $0x38] sm:$0xff]
        %v3974 = vld [vmem:[%s3965 + $0x40] sm:$0xff]
        %v3975 = vld [vmem:[%s3965 + $0x48] sm:$0xff]
        %v3976 = vld [vmem:[%s3965 + $0x50] sm:$0xff]
        %v3977 = vld [vmem:[%s3965 + $0x58] sm:$0xff]
        %v3978 = vld [vmem:[%s3965 + $0x60] sm:$0xff]
        %v3979 = vld [vmem:[%s3965 + $0x68] sm:$0xff]
        %v3980 = vld [vmem:[%s3965 + $0x70] sm:$0xff]
        %v3981 = vld [vmem:[%s3965 + $0x78] sm:$0xff]
        %s3982 = scalar_lea.vmem %s41, 2
        %v3983 = vld [vmem:[%s3982] sm:$0x3]
        %v3985 = vlaneseq
        %v3986 = vshrl.u32 %v3985, 7
        %v3987 = vsub.s32 0, %v3986
        %v3988 = vrot.slane %v3983, %v3987
        %v3989 = vlaneseq
        %v3990 = vshrl.u32 %v3989, 7
        %v3991 = vsub.s32 1, %v3990
        %v3992 = vrot.slane %v3983, %v3991
        %v3996 = vsel %vm1281, %v3964, 0
        %3998 = vmatprep.subr.mxu0 %v3967
        %3999 = vmatpush1.msra.mxu0 %v3966
        %4000 = vmatprep.subr.mxu0 %v3969
        %4001 = vmatpush1.msra.mxu0 %v3968
        %4002 = vmatprep.subr.mxu0 %v3971
        %4003 = vmatpush1.msra.mxu0 %v3970
        %4004 = vmatprep.subr.mxu0 %v3973
        %4005 = vmatpush1.msra.mxu0 %v3972
        %4006 = vmatprep.subr.mxu0 %v3975
        %4007 = vmatpush1.msra.mxu0 %v3974
        %4008 = vmatprep.subr.mxu0 %v3977
        %4009 = vmatpush1.msra.mxu0 %v3976
        %4010 = vmatprep.subr.mxu0 %v3979
        %4011 = vmatpush1.msra.mxu0 %v3978
        %4012 = vmatprep.subr.mxu0 %v3981
        %4013 = vmatpush1.msra.mxu0 %v3980
        %4014 = vmatprep.subr.mxu0 0.0
        %4015 = vmatpush1.msra.mxu0 0.0
        %4016 = vmatprep.subr.mxu0 0.0
        %4017 = vmatpush1.msra.mxu0 0.0
        %4018 = vmatprep.subr.mxu0 0.0
        %4019 = vmatpush1.msra.mxu0 0.0
        %4020 = vmatprep.subr.mxu0 0.0
        %4021 = vmatpush1.msra.mxu0 0.0
        %4022 = vmatprep.subr.mxu0 0.0
        %4023 = vmatpush1.msra.mxu0 0.0
        %4024 = vmatprep.subr.mxu0 0.0
        %4025 = vmatpush1.msra.mxu0 0.0
        %4026 = vmatprep.subr.mxu0 0.0
        %4027 = vmatpush1.msra.mxu0 0.0
        %4028 = vmatprep.subr.mxu0 0.0
        %4029 = vmatpush1.msra.mxu0 0.0
        %4030 = vmatprep.subr.mxu0 0.0
        %4031 = vmatpush1.msra.mxu0 0.0
        %4032 = vmatprep.subr.mxu0 0.0
        %4033 = vmatpush1.msra.mxu0 0.0
        %4034 = vmatprep.subr.mxu0 0.0
        %4035 = vmatpush1.msra.mxu0 0.0
        %4036 = vmatprep.subr.mxu0 0.0
        %4037 = vmatpush1.msra.mxu0 0.0
        %4038 = vmatprep.subr.mxu0 0.0
        %4039 = vmatpush1.msra.mxu0 0.0
        %4040 = vmatprep.subr.mxu0 0.0
        %4041 = vmatpush1.msra.mxu0 0.0
        %4042 = vmatprep.subr.mxu0 0.0
        %4043 = vmatpush1.msra.mxu0 0.0
        %4044 = vmatprep.subr.mxu0 0.0
        %4045 = vmatpush1.msra.mxu0 0.0
        %4046 = vmatprep.subr.mxu0 0.0
        %4047 = vmatpush1.msra.mxu0 0.0
        %4048 = vmatprep.subr.mxu0 0.0
        %4049 = vmatpush1.msra.mxu0 0.0
        %4050 = vmatprep.subr.mxu0 0.0
        %4051 = vmatpush1.msra.mxu0 0.0
        %4052 = vmatprep.subr.mxu0 0.0
        %4053 = vmatpush1.msra.mxu0 0.0
        %4054 = vmatprep.subr.mxu0 0.0
        %4055 = vmatpush1.msra.mxu0 0.0
        %4056 = vmatprep.subr.mxu0 0.0
        %4057 = vmatpush1.msra.mxu0 0.0
        %4058 = vmatprep.subr.mxu0 0.0
        %4059 = vmatpush1.msra.mxu0 0.0
        %4060 = vmatprep.subr.mxu0 0.0
        %4061 = vmatpush1.msra.mxu0 0.0
        %4062 = vmatprep.mubr.f32.mxu0 0.0
        %4063 = vmatmul.mubr.f32.gmra.mrb[0].mxu0 %v3996
        %v4064 = vpop.f32.mrb[0].mxu0
        %v4065 = vadd.f32 %v3988, %v4064
        %v4066 = vpop.f32.mrb[0].mxu0
        %v4067 = vadd.f32 %v3992, %v4066
        %4068 = vdwg.mxu0
        %v4069 = vmul.f32 %v4065, 1.702
        %v4070 = vmul.f32 %v4067, 1.702
        %v4071 = vxor.u32 %v4069, 2147483648
        %v4072 = vxor.u32 %v4070, 2147483648
        %v4073 = vmul.f32 %v4071, 1.442695
        %v4074 = vpow.pop %v4073
        %v4075 = vmul.f32 %v4072, 1.442695
        %v4076 = vpow.pop %v4075
        %v4077 = vadd.f32 %v4074, 1.0
        %v4078 = vadd.f32 %v4076, 1.0
        %v4079 = vrcp.pop %v4077
        %v4080 = vmul.f32 1.0, %v4079
        %v4081 = vrcp.pop %v4078
        %v4082 = vmul.f32 1.0, %v4081
        %v4083 = vmul.f32 %v4065, %v4080
        %v4084 = vmul.f32 %v4067, %v4082
        %s4085 = scalar_lea.vmem %s43, 256
        %v4086 = vld [vmem:[%s4085] sm:$0xff]
        %v4087 = vld [vmem:[%s4085 + $0x8] sm:$0xff]
        %v4088 = vld [vmem:[%s4085 + $0x10] sm:$0xff]
        %v4089 = vld [vmem:[%s4085 + $0x18] sm:$0xff]
        %v4090 = vld [vmem:[%s4085 + $0x20] sm:$0xff]
        %v4091 = vld [vmem:[%s4085 + $0x28] sm:$0xff]
        %v4092 = vld [vmem:[%s4085 + $0x30] sm:$0xff]
        %v4093 = vld [vmem:[%s4085 + $0x38] sm:$0xff]
        %v4094 = vld [vmem:[%s4085 + $0x40] sm:$0xff]
        %v4095 = vld [vmem:[%s4085 + $0x48] sm:$0xff]
        %v4096 = vld [vmem:[%s4085 + $0x50] sm:$0xff]
        %v4097 = vld [vmem:[%s4085 + $0x58] sm:$0xff]
        %v4098 = vld [vmem:[%s4085 + $0x60] sm:$0xff]
        %v4099 = vld [vmem:[%s4085 + $0x68] sm:$0xff]
        %v4100 = vld [vmem:[%s4085 + $0x70] sm:$0xff]
        %v4101 = vld [vmem:[%s4085 + $0x78] sm:$0xff]
        %v4102 = vld [vmem:[%s4085 + $0x80] sm:$0xff]
        %v4103 = vld [vmem:[%s4085 + $0x88] sm:$0xff]
        %v4104 = vld [vmem:[%s4085 + $0x90] sm:$0xff]
        %v4105 = vld [vmem:[%s4085 + $0x98] sm:$0xff]
        %v4106 = vld [vmem:[%s4085 + $0xa0] sm:$0xff]
        %v4107 = vld [vmem:[%s4085 + $0xa8] sm:$0xff]
        %v4108 = vld [vmem:[%s4085 + $0xb0] sm:$0xff]
        %v4109 = vld [vmem:[%s4085 + $0xb8] sm:$0xff]
        %v4110 = vld [vmem:[%s4085 + $0xc0] sm:$0xff]
        %v4111 = vld [vmem:[%s4085 + $0xc8] sm:$0xff]
        %v4112 = vld [vmem:[%s4085 + $0xd0] sm:$0xff]
        %v4113 = vld [vmem:[%s4085 + $0xd8] sm:$0xff]
        %v4114 = vld [vmem:[%s4085 + $0xe0] sm:$0xff]
        %v4115 = vld [vmem:[%s4085 + $0xe8] sm:$0xff]
        %v4116 = vld [vmem:[%s4085 + $0xf0] sm:$0xff]
        %v4117 = vld [vmem:[%s4085 + $0xf8] sm:$0xff]
        %4118 = vmatprep.subr.mxu0 0.0
        %4119 = vmatpush1.msra.mxu0 %v4086
        %4120 = vmatprep.subr.mxu0 0.0
        %4121 = vmatpush1.msra.mxu0 %v4087
        %4122 = vmatprep.subr.mxu0 0.0
        %4123 = vmatpush1.msra.mxu0 %v4088
        %4124 = vmatprep.subr.mxu0 0.0
        %4125 = vmatpush1.msra.mxu0 %v4089
        %4126 = vmatprep.subr.mxu0 0.0
        %4127 = vmatpush1.msra.mxu0 %v4090
        %4128 = vmatprep.subr.mxu0 0.0
        %4129 = vmatpush1.msra.mxu0 %v4091
        %4130 = vmatprep.subr.mxu0 0.0
        %4131 = vmatpush1.msra.mxu0 %v4092
        %4132 = vmatprep.subr.mxu0 0.0
        %4133 = vmatpush1.msra.mxu0 %v4093
        %4134 = vmatprep.subr.mxu0 0.0
        %4135 = vmatpush1.msra.mxu0 %v4094
        %4136 = vmatprep.subr.mxu0 0.0
        %4137 = vmatpush1.msra.mxu0 %v4095
        %4138 = vmatprep.subr.mxu0 0.0
        %4139 = vmatpush1.msra.mxu0 %v4096
        %4140 = vmatprep.subr.mxu0 0.0
        %4141 = vmatpush1.msra.mxu0 %v4097
        %4142 = vmatprep.subr.mxu0 0.0
        %4143 = vmatpush1.msra.mxu0 %v4098
        %4144 = vmatprep.subr.mxu0 0.0
        %4145 = vmatpush1.msra.mxu0 %v4099
        %4146 = vmatprep.subr.mxu0 0.0
        %4147 = vmatpush1.msra.mxu0 %v4100
        %4148 = vmatprep.subr.mxu0 0.0
        %4149 = vmatpush1.msra.mxu0 %v4101
        %4150 = vmatprep.subr.mxu0 0.0
        %4151 = vmatpush1.msra.mxu0 %v4102
        %4152 = vmatprep.subr.mxu0 0.0
        %4153 = vmatpush1.msra.mxu0 %v4103
        %4154 = vmatprep.subr.mxu0 0.0
        %4155 = vmatpush1.msra.mxu0 %v4104
        %4156 = vmatprep.subr.mxu0 0.0
        %4157 = vmatpush1.msra.mxu0 %v4105
        %4158 = vmatprep.subr.mxu0 0.0
        %4159 = vmatpush1.msra.mxu0 %v4106
        %4160 = vmatprep.subr.mxu0 0.0
        %4161 = vmatpush1.msra.mxu0 %v4107
        %4162 = vmatprep.subr.mxu0 0.0
        %4163 = vmatpush1.msra.mxu0 %v4108
        %4164 = vmatprep.subr.mxu0 0.0
        %4165 = vmatpush1.msra.mxu0 %v4109
        %4166 = vmatprep.subr.mxu0 0.0
        %4167 = vmatpush1.msra.mxu0 %v4110
        %4168 = vmatprep.subr.mxu0 0.0
        %4169 = vmatpush1.msra.mxu0 %v4111
        %4170 = vmatprep.subr.mxu0 0.0
        %4171 = vmatpush1.msra.mxu0 %v4112
        %4172 = vmatprep.subr.mxu0 0.0
        %4173 = vmatpush1.msra.mxu0 %v4113
        %4174 = vmatprep.subr.mxu0 0.0
        %4175 = vmatpush1.msra.mxu0 %v4114
        %4176 = vmatprep.subr.mxu0 0.0
        %4177 = vmatpush1.msra.mxu0 %v4115
        %4178 = vmatprep.subr.mxu0 0.0
        %4179 = vmatpush1.msra.mxu0 %v4116
        %4180 = vmatprep.subr.mxu0 0.0
        %4181 = vmatpush1.msra.mxu0 %v4117
        %4182 = vmatprep.mubr.f32.mxu0 %v4084
        %4183 = vmatmul.mubr.f32.gmra.mrb[0].mxu0 %v4083
        %v4184 = vpop.f32.mrb[0].mxu0
        %v4185 = vadd.f32 0.0, %v4184
        %v4186 = vpop.f32.mrb[0].mxu0
        %4187 = vdwg.mxu0
        %v4188 = vadd.f32 %v3933, %v4185
        %s4189 = scalar_lea.vmem %s45, 1
        %v4190 = vld [vmem:[%s4189] sm:$0x1]
        %v4192 = vlaneseq
        %v4193 = vshrl.u32 %v4192, 7
        %v4194 = vsub.s32 0, %v4193
        %v4195 = vrot.slane %v4190, %v4194
        %v4197 = vadd.f32 %v4188, %v4195
        %v4198 = vld [vmem:[%s47] sm:$0x1]
        %v4199 = vld [vmem:[%s49] sm:$0x1]
        %v4200 = vsel %vm1281, %v4197, 0.0
        %4201 = vadd.xlane.f32.xlu0 %v4200
        %v4202 = vpop.xlane.xlu0 %4201
        %v4203 = vmul.f32 %v4202, %v1458
        %v4204 = vsub.f32 %v4197, %v4203
        %v4205 = vmul.f32 %v4204, %v4204
        %v4206 = vsel %vm1281, %v4205, 0.0
        %4207 = vadd.xlane.f32.xlu0 %v4206
        %v4208 = vpop.xlane.xlu0 %4207
        %v4209 = vmul.f32 %v4208, %v1458
        %v4210 = vadd.f32 %v4209, 1e-05
        %v4211 = vrsqrt.pop %v4210
        %v4212 = vmul.f32 %v4204, %v4211
        %v4214 = vlaneseq
        %v4215 = vshrl.u32 %v4214, 7
        %v4216 = vsub.s32 0, %v4215
        %v4217 = vrot.slane %v4198, %v4216
        %v4219 = vmul.f32 %v4212, %v4217
        %v4221 = vlaneseq
        %v4222 = vshrl.u32 %v4221, 7
        %v4223 = vsub.s32 0, %v4222
        %v4224 = vrot.slane %v4199, %v4223
        %v4226 = vadd.f32 %v4219, %v4224
        %v4227 = vld [vmem:[%s3] sm:$0x1]
        %v4229 = vsel %vm1673, %v4227, 0
        %4231 = vmatprep.subr.mxu0 0.0
        %4232 = vmatpush1.msra.mxu0 %v4226
        %4233 = vmatprep.subr.mxu0 0.0
        %4234 = vmatpush1.msra.mxu0 0.0
        %4235 = vmatprep.subr.mxu0 0.0
        %4236 = vmatpush1.msra.mxu0 0.0
        %4237 = vmatprep.subr.mxu0 0.0
        %4238 = vmatpush1.msra.mxu0 0.0
        %4239 = vmatprep.subr.mxu0 0.0
        %4240 = vmatpush1.msra.mxu0 0.0
        %4241 = vmatprep.subr.mxu0 0.0
        %4242 = vmatpush1.msra.mxu0 0.0
        %4243 = vmatprep.subr.mxu0 0.0
        %4244 = vmatpush1.msra.mxu0 0.0
        %4245 = vmatprep.subr.mxu0 0.0
        %4246 = vmatpush1.msra.mxu0 0.0
        %4247 = vmatprep.subr.mxu0 0.0
        %4248 = vmatpush1.msra.mxu0 0.0
        %4249 = vmatprep.subr.mxu0 0.0
        %4250 = vmatpush1.msra.mxu0 0.0
        %4251 = vmatprep.subr.mxu0 0.0
        %4252 = vmatpush1.msra.mxu0 0.0
        %4253 = vmatprep.subr.mxu0 0.0
        %4254 = vmatpush1.msra.mxu0 0.0
        %4255 = vmatprep.subr.mxu0 0.0
        %4256 = vmatpush1.msra.mxu0 0.0
        %4257 = vmatprep.subr.mxu0 0.0
        %4258 = vmatpush1.msra.mxu0 0.0
        %4259 = vmatprep.subr.mxu0 0.0
        %4260 = vmatpush1.msra.mxu0 0.0
        %4261 = vmatprep.subr.mxu0 0.0
        %4262 = vmatpush1.msra.mxu0 0.0
        %4263 = vmatprep.subr.mxu0 0.0
        %4264 = vmatpush1.msra.mxu0 0.0
        %4265 = vmatprep.subr.mxu0 0.0
        %4266 = vmatpush1.msra.mxu0 0.0
        %4267 = vmatprep.subr.mxu0 0.0
        %4268 = vmatpush1.msra.mxu0 0.0
        %4269 = vmatprep.subr.mxu0 0.0
        %4270 = vmatpush1.msra.mxu0 0.0
        %4271 = vmatprep.subr.mxu0 0.0
        %4272 = vmatpush1.msra.mxu0 0.0
        %4273 = vmatprep.subr.mxu0 0.0
        %4274 = vmatpush1.msra.mxu0 0.0
        %4275 = vmatprep.subr.mxu0 0.0
        %4276 = vmatpush1.msra.mxu0 0.0
        %4277 = vmatprep.subr.mxu0 0.0
        %4278 = vmatpush1.msra.mxu0 0.0
        %4279 = vmatprep.subr.mxu0 0.0
        %4280 = vmatpush1.msra.mxu0 0.0
        %4281 = vmatprep.subr.mxu0 0.0
        %4282 = vmatpush1.msra.mxu0 0.0
        %4283 = vmatprep.subr.mxu0 0.0
        %4284 = vmatpush1.msra.mxu0 0.0
        %4285 = vmatprep.subr.mxu0 0.0
        %4286 = vmatpush1.msra.mxu0 0.0
        %4287 = vmatprep.subr.mxu0 0.0
        %4288 = vmatpush1.msra.mxu0 0.0
        %4289 = vmatprep.subr.mxu0 0.0
        %4290 = vmatpush1.msra.mxu0 0.0
        %4291 = vmatprep.subr.mxu0 0.0
        %4292 = vmatpush1.msra.mxu0 0.0
        %4293 = vmatprep.subr.mxu0 0.0
        %4294 = vmatpush1.msra.mxu0 0.0
        %4295 = vmatprep.mubr.f32.mxu0 0.0
        %4296 = vmatmul.mubr.f32.gmra.mrb[0].mxu0 %v4229
        %v4297 = vpop.f32.mrb[0].mxu0
        %v4298 = vadd.f32 0.0, %v4297
        %v4299 = vpop.f32.mrb[0].mxu0
        %4300 = vdwg.mxu0
        %v4301 = vld [vmem:[%s51] sm:$0xff]
        %v4302 = vld [vmem:[%s51 + $0x8] sm:$0xff]
        %v4303 = vld [vmem:[%s51 + $0x10] sm:$0xff]
        %v4304 = vld [vmem:[%s51 + $0x18] sm:$0xff]
        %v4305 = vld [vmem:[%s51 + $0x20] sm:$0xff]
        %v4306 = vld [vmem:[%s51 + $0x28] sm:$0xff]
        %v4307 = vld [vmem:[%s51 + $0x30] sm:$0xff]
        %v4308 = vld [vmem:[%s51 + $0x38] sm:$0xff]
        %v4310 = vsel %vm1281, %v4298, 0
        %4312 = vmatprep.subr.mxu0 0.0
        %4313 = vmatpush1.msra.mxu0 %v4301
        %4314 = vmatprep.subr.mxu0 0.0
        %4315 = vmatpush1.msra.mxu0 %v4302
        %4316 = vmatprep.subr.mxu0 0.0
        %4317 = vmatpush1.msra.mxu0 %v4303
        %4318 = vmatprep.subr.mxu0 0.0
        %4319 = vmatpush1.msra.mxu0 %v4304
        %4320 = vmatprep.subr.mxu0 0.0
        %4321 = vmatpush1.msra.mxu0 %v4305
        %4322 = vmatprep.subr.mxu0 0.0
        %4323 = vmatpush1.msra.mxu0 %v4306
        %4324 = vmatprep.subr.mxu0 0.0
        %4325 = vmatpush1.msra.mxu0 %v4307
        %4326 = vmatprep.subr.mxu0 0.0
        %4327 = vmatpush1.msra.mxu0 %v4308
        %4328 = vmatprep.subr.mxu0 0.0
        %4329 = vmatpush1.msra.mxu0 0.0
        %4330 = vmatprep.subr.mxu0 0.0
        %4331 = vmatpush1.msra.mxu0 0.0
        %4332 = vmatprep.subr.mxu0 0.0
        %4333 = vmatpush1.msra.mxu0 0.0
        %4334 = vmatprep.subr.mxu0 0.0
        %4335 = vmatpush1.msra.mxu0 0.0
        %4336 = vmatprep.subr.mxu0 0.0
        %4337 = vmatpush1.msra.mxu0 0.0
        %4338 = vmatprep.subr.mxu0 0.0
        %4339 = vmatpush1.msra.mxu0 0.0
        %4340 = vmatprep.subr.mxu0 0.0
        %4341 = vmatpush1.msra.mxu0 0.0
        %4342 = vmatprep.subr.mxu0 0.0
        %4343 = vmatpush1.msra.mxu0 0.0
        %4344 = vmatprep.subr.mxu0 0.0
        %4345 = vmatpush1.msra.mxu0 0.0
        %4346 = vmatprep.subr.mxu0 0.0
        %4347 = vmatpush1.msra.mxu0 0.0
        %4348 = vmatprep.subr.mxu0 0.0
        %4349 = vmatpush1.msra.mxu0 0.0
        %4350 = vmatprep.subr.mxu0 0.0
        %4351 = vmatpush1.msra.mxu0 0.0
        %4352 = vmatprep.subr.mxu0 0.0
        %4353 = vmatpush1.msra.mxu0 0.0
        %4354 = vmatprep.subr.mxu0 0.0
        %4355 = vmatpush1.msra.mxu0 0.0
        %4356 = vmatprep.subr.mxu0 0.0
        %4357 = vmatpush1.msra.mxu0 0.0
        %4358 = vmatprep.subr.mxu0 0.0
        %4359 = vmatpush1.msra.mxu0 0.0
        %4360 = vmatprep.subr.mxu0 0.0
        %4361 = vmatpush1.msra.mxu0 0.0
        %4362 = vmatprep.subr.mxu0 0.0
        %4363 = vmatpush1.msra.mxu0 0.0
        %4364 = vmatprep.subr.mxu0 0.0
        %4365 = vmatpush1.msra.mxu0 0.0
        %4366 = vmatprep.subr.mxu0 0.0
        %4367 = vmatpush1.msra.mxu0 0.0
        %4368 = vmatprep.subr.mxu0 0.0
        %4369 = vmatpush1.msra.mxu0 0.0
        %4370 = vmatprep.subr.mxu0 0.0
        %4371 = vmatpush1.msra.mxu0 0.0
        %4372 = vmatprep.subr.mxu0 0.0
        %4373 = vmatpush1.msra.mxu0 0.0
        %4374 = vmatprep.subr.mxu0 0.0
        %4375 = vmatpush1.msra.mxu0 0.0
        %4376 = vmatprep.mubr.f32.mxu0 0.0
        %4377 = vmatmul.mubr.f32.gmra.mrb[0].mxu0 %v4310
        %v4378 = vpop.f32.mrb[0].mxu0
        %v4379 = vadd.f32 0.0, %v4378
        %v4380 = vpop.f32.mrb[0].mxu0
        %4381 = vdwg.mxu0
        %v4382 = vmul.f32 %v4379, %v4379
        %v4383 = vsel %vm1265, %v4382, 0.0
        %4384 = vadd.xlane.f32.xlu0 %v4383
        %v4385 = vpop.xlane.xlu0 %4384
        %v4386 = vadd.f32 %v4385, 1e-12
        %v4387 = vrsqrt.pop %v4386
        %v4388 = vmul.f32 %v4379, %v4387
        %v4389 = vld [vmem:[%s53] sm:$0xff]
        %v4390 = vld [vmem:[%s53 + $0x8] sm:$0xff]
        %v4391 = vld [vmem:[%s53 + $0x10] sm:$0xff]
        %v4392 = vld [vmem:[%s53 + $0x18] sm:$0xff]
        %v4393 = vld [vmem:[%s53 + $0x20] sm:$0xff]
        %v4394 = vld [vmem:[%s53 + $0x28] sm:$0xff]
        %v4395 = vld [vmem:[%s53 + $0x30] sm:$0xff]
        %v4396 = vld [vmem:[%s53 + $0x38] sm:$0xff]
        %v4397 = vld [vmem:[%s53 + $0x40] sm:$0xff]
        %v4398 = vld [vmem:[%s53 + $0x48] sm:$0xff]
        %v4399 = vld [vmem:[%s53 + $0x50] sm:$0xff]
        %v4400 = vld [vmem:[%s53 + $0x58] sm:$0xff]
        %v4401 = vld [vmem:[%s53 + $0x60] sm:$0xff]
        %v4402 = vld [vmem:[%s53 + $0x68] sm:$0xff]
        %v4403 = vld [vmem:[%s53 + $0x70] sm:$0xff]
        %v4404 = vld [vmem:[%s53 + $0x78] sm:$0xff]
        %4405 = vmatprep.subr.mxu0 0.0
        %4406 = vmatpush1.msra.mxu0 %v4397
        %4407 = vmatprep.subr.mxu0 0.0
        %4408 = vmatpush1.msra.mxu0 %v4398
        %4409 = vmatprep.subr.mxu0 0.0
        %4410 = vmatpush1.msra.mxu0 %v4399
        %4411 = vmatprep.subr.mxu0 0.0
        %4412 = vmatpush1.msra.mxu0 %v4400
        %4413 = vmatprep.subr.mxu0 0.0
        %4414 = vmatpush1.msra.mxu0 %v4401
        %4415 = vmatprep.subr.mxu0 0.0
        %4416 = vmatpush1.msra.mxu0 %v4402
        %4417 = vmatprep.subr.mxu0 0.0
        %4418 = vmatpush1.msra.mxu0 %v4403
        %4419 = vmatprep.subr.mxu0 0.0
        %4420 = vmatpush1.msra.mxu0 %v4404
        %4421 = vmatprep.subr.mxu0 0.0
        %4422 = vmatpush1.msra.mxu0 0.0
        %4423 = vmatprep.subr.mxu0 0.0
        %4424 = vmatpush1.msra.mxu0 0.0
        %4425 = vmatprep.subr.mxu0 0.0
        %4426 = vmatpush1.msra.mxu0 0.0
        %4427 = vmatprep.subr.mxu0 0.0
        %4428 = vmatpush1.msra.mxu0 0.0
        %4429 = vmatprep.subr.mxu0 0.0
        %4430 = vmatpush1.msra.mxu0 0.0
        %4431 = vmatprep.subr.mxu0 0.0
        %4432 = vmatpush1.msra.mxu0 0.0
        %4433 = vmatprep.subr.mxu0 0.0
        %4434 = vmatpush1.msra.mxu0 0.0
        %4435 = vmatprep.subr.mxu0 0.0
        %4436 = vmatpush1.msra.mxu0 0.0
        %4437 = vmatprep.subr.mxu0 0.0
        %4438 = vmatpush1.msra.mxu0 0.0
        %4439 = vmatprep.subr.mxu0 0.0
        %4440 = vmatpush1.msra.mxu0 0.0
        %4441 = vmatprep.subr.mxu0 0.0
        %4442 = vmatpush1.msra.mxu0 0.0
        %4443 = vmatprep.subr.mxu0 0.0
        %4444 = vmatpush1.msra.mxu0 0.0
        %4445 = vmatprep.subr.mxu0 0.0
        %4446 = vmatpush1.msra.mxu0 0.0
        %4447 = vmatprep.subr.mxu0 0.0
        %4448 = vmatpush1.msra.mxu0 0.0
        %4449 = vmatprep.subr.mxu0 0.0
        %4450 = vmatpush1.msra.mxu0 0.0
        %4451 = vmatprep.subr.mxu0 0.0
        %4452 = vmatpush1.msra.mxu0 0.0
        %4453 = vmatprep.subr.mxu0 0.0
        %4454 = vmatpush1.msra.mxu0 0.0
        %4455 = vmatprep.subr.mxu0 0.0
        %4456 = vmatpush1.msra.mxu0 0.0
        %4457 = vmatprep.subr.mxu0 0.0
        %4458 = vmatpush1.msra.mxu0 0.0
        %4459 = vmatprep.subr.mxu0 0.0
        %4460 = vmatpush1.msra.mxu0 0.0
        %4461 = vmatprep.subr.mxu0 0.0
        %4462 = vmatpush1.msra.mxu0 0.0
        %4463 = vmatprep.subr.mxu0 0.0
        %4464 = vmatpush1.msra.mxu0 0.0
        %4465 = vmatprep.subr.mxu0 0.0
        %4466 = vmatpush1.msra.mxu0 0.0
        %4467 = vmatprep.subr.mxu0 0.0
        %4468 = vmatpush1.msra.mxu0 0.0
        %4469 = vmatprep.mubr.f32.mxu0 0.0
        %4470 = vmatmul.mubr.f32.gmra.mrb[0].mxu0 %v1283
        %v4471 = vpop.f32.mrb[0].mxu0
        %v4472 = vadd.f32 0.0, %v4471
        %v4473 = vpop.f32.mrb[0].mxu0
        %4474 = vdwg.mxu0
        %v4476 = vsel %vm1281, %v4388, 0
        %4478 = vmatprep.subr.mxu0 0.0
        %4479 = vmatpush1.msra.mxu0 %v4389
        %4480 = vmatprep.subr.mxu0 0.0
        %4481 = vmatpush1.msra.mxu0 %v4390
        %4482 = vmatprep.subr.mxu0 0.0
        %4483 = vmatpush1.msra.mxu0 %v4391
        %4484 = vmatprep.subr.mxu0 0.0
        %4485 = vmatpush1.msra.mxu0 %v4392
        %4486 = vmatprep.subr.mxu0 0.0
        %4487 = vmatpush1.msra.mxu0 %v4393
        %4488 = vmatprep.subr.mxu0 0.0
        %4489 = vmatpush1.msra.mxu0 %v4394
        %4490 = vmatprep.subr.mxu0 0.0
        %4491 = vmatpush1.msra.mxu0 %v4395
        %4492 = vmatprep.subr.mxu0 0.0
        %4493 = vmatpush1.msra.mxu0 %v4396
        %4494 = vmatprep.subr.mxu0 0.0
        %4495 = vmatpush1.msra.mxu0 0.0
        %4496 = vmatprep.subr.mxu0 0.0
        %4497 = vmatpush1.msra.mxu0 0.0
        %4498 = vmatprep.subr.mxu0 0.0
        %4499 = vmatpush1.msra.mxu0 0.0
        %4500 = vmatprep.subr.mxu0 0.0
        %4501 = vmatpush1.msra.mxu0 0.0
        %4502 = vmatprep.subr.mxu0 0.0
        %4503 = vmatpush1.msra.mxu0 0.0
        %4504 = vmatprep.subr.mxu0 0.0
        %4505 = vmatpush1.msra.mxu0 0.0
        %4506 = vmatprep.subr.mxu0 0.0
        %4507 = vmatpush1.msra.mxu0 0.0
        %4508 = vmatprep.subr.mxu0 0.0
        %4509 = vmatpush1.msra.mxu0 0.0
        %4510 = vmatprep.subr.mxu0 0.0
        %4511 = vmatpush1.msra.mxu0 0.0
        %4512 = vmatprep.subr.mxu0 0.0
        %4513 = vmatpush1.msra.mxu0 0.0
        %4514 = vmatprep.subr.mxu0 0.0
        %4515 = vmatpush1.msra.mxu0 0.0
        %4516 = vmatprep.subr.mxu0 0.0
        %4517 = vmatpush1.msra.mxu0 0.0
        %4518 = vmatprep.subr.mxu0 0.0
        %4519 = vmatpush1.msra.mxu0 0.0
        %4520 = vmatprep.subr.mxu0 0.0
        %4521 = vmatpush1.msra.mxu0 0.0
        %4522 = vmatprep.subr.mxu0 0.0
        %4523 = vmatpush1.msra.mxu0 0.0
        %4524 = vmatprep.subr.mxu0 0.0
        %4525 = vmatpush1.msra.mxu0 0.0
        %4526 = vmatprep.subr.mxu0 0.0
        %4527 = vmatpush1.msra.mxu0 0.0
        %4528 = vmatprep.subr.mxu0 0.0
        %4529 = vmatpush1.msra.mxu0 0.0
        %4530 = vmatprep.subr.mxu0 0.0
        %4531 = vmatpush1.msra.mxu0 0.0
        %4532 = vmatprep.subr.mxu0 0.0
        %4533 = vmatpush1.msra.mxu0 0.0
        %4534 = vmatprep.subr.mxu0 0.0
        %4535 = vmatpush1.msra.mxu0 0.0
        %4536 = vmatprep.subr.mxu0 0.0
        %4537 = vmatpush1.msra.mxu0 0.0
        %4538 = vmatprep.subr.mxu0 0.0
        %4539 = vmatpush1.msra.mxu0 0.0
        %4540 = vmatprep.subr.mxu0 0.0
        %4541 = vmatpush1.msra.mxu0 0.0
        %4542 = vmatprep.mubr.f32.mxu0 0.0
        %4543 = vmatmul.mubr.f32.gmra.mrb[0].mxu0 %v4476
        %v4544 = vpop.f32.mrb[0].mxu0
        %v4545 = vadd.f32 %v4472, %v4544
        %v4546 = vpop.f32.mrb[0].mxu0
        %4547 = vdwg.mxu0
        %v4548 = vld [vmem:[%s55] sm:$0x1]
        %v4549 = vadd.f32 %v4545, %v4548
        %vm4550 = vcmp.gt.f32.partialorder %v4549, 0.0
        %v4551 = vmul.f32 %v4549, 0.01
        %v4552 = vsel %vm4550, %v4549, %v4551
        %v4553 = vld [vmem:[%s57] sm:$0xff]
        %v4554 = vld [vmem:[%s57 + $0x8] sm:$0xff]
        %v4555 = vld [vmem:[%s57 + $0x10] sm:$0xff]
        %v4556 = vld [vmem:[%s57 + $0x18] sm:$0xff]
        %v4557 = vld [vmem:[%s57 + $0x20] sm:$0xff]
        %v4558 = vld [vmem:[%s57 + $0x28] sm:$0xff]
        %v4559 = vld [vmem:[%s57 + $0x30] sm:$0xff]
        %v4560 = vld [vmem:[%s57 + $0x38] sm:$0xff]
        %v4561 = vld [vmem:[%s59] sm:$0x1]
        %v4563 = vsel %vm1281, %v4552, 0
        %4565 = vmatprep.subr.mxu0 0.0
        %4566 = vmatpush1.msra.mxu0 %v4553
        %4567 = vmatprep.subr.mxu0 0.0
        %4568 = vmatpush1.msra.mxu0 %v4554
        %4569 = vmatprep.subr.mxu0 0.0
        %4570 = vmatpush1.msra.mxu0 %v4555
        %4571 = vmatprep.subr.mxu0 0.0
        %4572 = vmatpush1.msra.mxu0 %v4556
        %4573 = vmatprep.subr.mxu0 0.0
        %4574 = vmatpush1.msra.mxu0 %v4557
        %4575 = vmatprep.subr.mxu0 0.0
        %4576 = vmatpush1.msra.mxu0 %v4558
        %4577 = vmatprep.subr.mxu0 0.0
        %4578 = vmatpush1.msra.mxu0 %v4559
        %4579 = vmatprep.subr.mxu0 0.0
        %4580 = vmatpush1.msra.mxu0 %v4560
        %4581 = vmatprep.subr.mxu0 0.0
        %4582 = vmatpush1.msra.mxu0 0.0
        %4583 = vmatprep.subr.mxu0 0.0
        %4584 = vmatpush1.msra.mxu0 0.0
        %4585 = vmatprep.subr.mxu0 0.0
        %4586 = vmatpush1.msra.mxu0 0.0
        %4587 = vmatprep.subr.mxu0 0.0
        %4588 = vmatpush1.msra.mxu0 0.0
        %4589 = vmatprep.subr.mxu0 0.0
        %4590 = vmatpush1.msra.mxu0 0.0
        %4591 = vmatprep.subr.mxu0 0.0
        %4592 = vmatpush1.msra.mxu0 0.0
        %4593 = vmatprep.subr.mxu0 0.0
        %4594 = vmatpush1.msra.mxu0 0.0
        %4595 = vmatprep.subr.mxu0 0.0
        %4596 = vmatpush1.msra.mxu0 0.0
        %4597 = vmatprep.subr.mxu0 0.0
        %4598 = vmatpush1.msra.mxu0 0.0
        %4599 = vmatprep.subr.mxu0 0.0
        %4600 = vmatpush1.msra.mxu0 0.0
        %4601 = vmatprep.subr.mxu0 0.0
        %4602 = vmatpush1.msra.mxu0 0.0
        %4603 = vmatprep.subr.mxu0 0.0
        %4604 = vmatpush1.msra.mxu0 0.0
        %4605 = vmatprep.subr.mxu0 0.0
        %4606 = vmatpush1.msra.mxu0 0.0
        %4607 = vmatprep.subr.mxu0 0.0
        %4608 = vmatpush1.msra.mxu0 0.0
        %4609 = vmatprep.subr.mxu0 0.0
        %4610 = vmatpush1.msra.mxu0 0.0
        %4611 = vmatprep.subr.mxu0 0.0
        %4612 = vmatpush1.msra.mxu0 0.0
        %4613 = vmatprep.subr.mxu0 0.0
        %4614 = vmatpush1.msra.mxu0 0.0
        %4615 = vmatprep.subr.mxu0 0.0
        %4616 = vmatpush1.msra.mxu0 0.0
        %4617 = vmatprep.subr.mxu0 0.0
        %4618 = vmatpush1.msra.mxu0 0.0
        %4619 = vmatprep.subr.mxu0 0.0
        %4620 = vmatpush1.msra.mxu0 0.0
        %4621 = vmatprep.subr.mxu0 0.0
        %4622 = vmatpush1.msra.mxu0 0.0
        %4623 = vmatprep.subr.mxu0 0.0
        %4624 = vmatpush1.msra.mxu0 0.0
        %4625 = vmatprep.subr.mxu0 0.0
        %4626 = vmatpush1.msra.mxu0 0.0
        %4627 = vmatprep.subr.mxu0 0.0
        %4628 = vmatpush1.msra.mxu0 0.0
        %4629 = vmatprep.mubr.f32.mxu0 0.0
        %4630 = vmatmul.mubr.f32.gmra.mrb[0].mxu0 %v4563
        %v4631 = vpop.f32.mrb[0].mxu0
        %v4632 = vadd.f32 %v4561, %v4631
        %v4633 = vpop.f32.mrb[0].mxu0
        %4634 = vdwg.mxu0
        %vm4635 = vcmask 32768
        %4636 = vst.msk [vmem:[%s920] sm:$0x1] %vm4635, %v4632
        %s4637 = sand.u32 %s718, 1
        %s4638 = scalar_lea.sflag [#allocation3], %s4637
        %s4639 = sand.u32 %s718, 1
        %s4640 = scalar_lea.vmem [#allocation2], %s4639
        // Predicated region
        $region141: #{custom_clip_v2_forward.1} parent=139 // pred_check
          %p4641 = pneg %p728
        $region142: #{custom_clip_v2_forward.1} parent=139 // pred_check_branch
          %4643 = sbr.rel (%p4641) target = $region144
        $region143: #{custom_clip_v2_forward.1} parent=139 // pred_region
          %s4645 = ssub.s32 16, 16
          %4646 = vsyncadd %s4638, %s4645
          %s4647 = smul.addr %s75, 16
          %s4648 = scalar_lea.hbm %s61, %s4647
          %s4650 = sshll.u32 %s4640, 4
          %s4651 = int_to_ptr.vmem [resolvable:$true] %s4650
          %4653 = dma.vmem_to_hbm [thread:$0]  %s4651, 16, %s4648, %s4638
        $region144: #{custom_clip_v2_forward.1} parent=139 // pred_fallthru
          _
      $region140: #{custom_clip_v2_forward.1} parent=5 // pred_fallthru
        _
      %p4654 = scmp.le.s32.totalorder 2, %s70
      // Predicated region
      $region145: #{custom_clip_v2_forward.1} parent=5 // pred_check
        %p4655 = pneg %p4654
      $region146: #{custom_clip_v2_forward.1} parent=5 // pred_check_branch
        %4657 = sbr.rel (%p4655) target = $region148
      $region147: #{custom_clip_v2_forward.1} parent=5 // pred_region
        %s4658 = ssub.s32 %s70, 2
        // Predicated region
        $region149: #{custom_clip_v2_forward.1} parent=147 // pred_check
          %p4659 = pneg %p734
        $region150: #{custom_clip_v2_forward.1} parent=147 // pred_check_branch
          %4661 = sbr.rel (%p4659) target = $region152
        $region151: #{custom_clip_v2_forward.1} parent=147 // pred_region
          %s4662 = sand.u32 %s719, 1
          %s4663 = scalar_lea.sflag [#allocation3], %s4662
          %s4664 = sand.u32 %s719, 1
          %s4665 = scalar_lea.vmem [#allocation2], %s4664
          %4666 = dma.done %s4663, 16
        $region152: #{custom_clip_v2_forward.1} parent=147 // pred_fallthru
          _
      $region148: #{custom_clip_v2_forward.1} parent=5 // pred_fallthru
        _
    $region6: #{custom_clip_v2_forward.1} parent=1 // loop_footer
      %s74 = sadd.s32 1, %s70
    $region7: #{custom_clip_v2_forward.1} parent=1 // loop_footer_branch
      %69 = sbr.rel target = $region3
    $region8: #{custom_clip_v2_forward.1} parent=1 // loop_exit
      _
    %4667 = vsyncpa [#allocation3], 1
    %s4668 = scalar_lea.sflag [#allocation3], 1
    %4669 = vsyncpa %s4668, 1

</llo_original>
